<compile_context>
chip_gen: v5e
topology: v5e:2x2
jax: 0.10.0
libtpu: 0.0.40
codegen_flags: <defaults>
</compile_context>

<pallas_src>
import functools

import jax
import jax.numpy as jnp
from jax import lax
from jax.experimental import pallas as pl
from jax.experimental.pallas import tpu as pltpu


# ----------------------------------------------------------------------------------
# Fused Pallas kernel: 2D branch + causal-3D branch, one im2col matmul per grid step.
# ----------------------------------------------------------------------------------
def _fused_sep_conv3d_kernel(t_c, prev_ref, cur_ref, nxt_ref, cache_ref,
                             w_ref, b_ref, o_ref, pad_scr):
    """One output frame per grid step (grid = (batch, frame)).

    prev/cur/nxt/cache refs : (1, 1, H, W, Ci)     channels-last, UNPADDED
    w_ref                   : (27*Ci, out2+out3)   fused im2col weight (2D taps at dt==1)
    b_ref                   : (1, out2+out3)       f32 bias
    o_ref                   : (1, 1, H, W, out2+out3)
    pad_scr                 : VMEM (3, H+2, W+2, Ci) spatially padded frame staging
    """
    _, _, H, W, Cout = o_ref.shape
    Ci = cur_ref.shape[-1]
    cdt = pad_scr.dtype
    tau = pl.program_id(1)                     # global frame index

    prev = prev_ref[0, 0]                      # (H, W, Ci)
    cur = cur_ref[0, 0]
    nxt = nxt_ref[0, 0]

    # Group_Causal_Conv3d temporal padding, resolved per output frame:
    #   prev(tau) = cache frame          if tau == 0               else x[tau - 1]
    #   next(tau) = zeros (chunk pad)    if (tau + 1) % t_c == 0   else x[tau + 1]
    use_cache = (tau == 0).astype(cdt)
    prev = cache_ref[0, 0] * use_cache + prev * (1 - use_cache)
    keep_next = ((tau + 1) % t_c != 0).astype(cdt)
    nxt = nxt * keep_next

    # Stage the three frames with a 1-px zero halo in VMEM.  Padding happens here, not
    # as a jnp.pad in the wrapper (saves a full HBM round trip of x).
    pad_scr[...] = jnp.zeros_like(pad_scr)     # only the border strictly needs zeroing
    pad_scr[0, 1:H + 1, 1:W + 1, :] = prev
    pad_scr[1, 1:H + 1, 1:W + 1, :] = cur
    pad_scr[2, 1:H + 1, 1:W + 1, :] = nxt

    # im2col: (H*W, 27*Ci) patch matrix -> ONE MXU matmul covering both branches.
    cols = []
    for dt in range(3):
        fp = pad_scr[dt]                       # (H+2, W+2, Ci)
        for dy in range(3):
            for dx in range(3):
                cols.append(fp[dy:dy + H, dx:dx + W, :])
    patches = jnp.concatenate(cols, axis=-1).reshape(H * W, 27 * Ci)

    acc = jnp.dot(patches, w_ref[...], preferred_element_type=jnp.float32)
    acc = acc + b_ref[...].astype(jnp.float32)         # (1, Cout) broadcast
    o_ref[0, 0] = acc.reshape(H, W, Cout).astype(o_ref.dtype)


# ----------------------------------------------------------------------------------
# Wrapper: PyTorch NCDHW in / out.  Matches Sep_Conv3d.forward for kernel=3, stride=1,
# padding=1 (causal temporal branch, t > 1, t % t_c == 0).
# ----------------------------------------------------------------------------------
def sep_conv3d_forward(x, cache_x, w2d, b2d, w3d, b3d, *, t_c=1, compute_dtype=None):
    """x: (b,c,t,h,w); cache_x: (b,c,1,h,w); w2d: (3,3,c,out2) HWIO; w3d: (3,3,3,c,out3)
    DHWIO.  Returns (b, out2+out3, t, h, w) — channels ordered [2D branch | 3D branch]."""
    b, c, t, h, w = x.shape
    assert t > 1 and t % t_c == 0
    out2, out3 = w2d.shape[-1], w3d.shape[-1]
    cout = out2 + out3
    cdt = compute_dtype if compute_dtype is not None else x.dtype

    # Fused matmul-ready weight: rows ordered (dt, dy, dx, ci), 2D conv == dt==1 taps;
    # output channels concatenated on the LAST (lane) axis.
    w2_as_3d = jnp.zeros((3, 3, 3, c, out2), cdt).at[1].set(w2d.astype(cdt))
    wmat = jnp.concatenate([w2_as_3d, w3d.astype(cdt)], axis=-1).reshape(27 * c, cout)
    bias = jnp.concatenate([b2d, b3d]).astype(jnp.float32).reshape(1, cout)

    # Single layout change to channels-last; padding / cache splice happen in-kernel.
    x_cl = jnp.transpose(x, (0, 2, 3, 4, 1)).astype(cdt)            # (b, t, h, w, c)
    cache_cl = jnp.transpose(cache_x, (0, 2, 3, 4, 1)).astype(cdt)  # (b, 1, h, w, c)

    frame_blk = (1, 1, h, w, c)
    kernel = functools.partial(_fused_sep_conv3d_kernel, t_c)

    compiler_kwargs = dict(dimension_semantics=("parallel", "parallel"))
    try:  # raise the scoped VMEM limit, but never past what the device actually has
        cap = pltpu.get_tpu_info().vmem_capacity_bytes
        compiler_kwargs["vmem_limit_bytes"] = int(min(64 * 1024 * 1024, cap * 3 // 4))
    except Exception:
        pass

    y_cl = pl.pallas_call(
        kernel,
        out_shape=jax.ShapeDtypeStruct((b, t, h, w, cout), x.dtype),
        grid_spec=pltpu.PrefetchScalarGridSpec(
            num_scalar_prefetch=0,
            grid=(b, t),
            in_specs=[
                # prev / cur / next views of the SAME array (x is passed three times);
                # out-of-range frames are index-clamped and masked inside the kernel.
                pl.BlockSpec(frame_blk, lambda n, tt: (n, jnp.maximum(tt - 1, 0), 0, 0, 0)),
                pl.BlockSpec(frame_blk, lambda n, tt: (n, tt, 0, 0, 0)),
                pl.BlockSpec(frame_blk, lambda n, tt: (n, jnp.minimum(tt + 1, t - 1), 0, 0, 0)),
                pl.BlockSpec(frame_blk, lambda n, tt: (n, 0, 0, 0, 0)),      # cache frame
                pl.BlockSpec((27 * c, cout), lambda n, tt: (0, 0)),          # fused weight
                pl.BlockSpec((1, cout), lambda n, tt: (0, 0)),               # fused bias
            ],
            out_specs=pl.BlockSpec((1, 1, h, w, cout), lambda n, tt: (n, tt, 0, 0, 0)),
            scratch_shapes=[pltpu.VMEM((3, h + 2, w + 2, c), cdt)],
        ),
        compiler_params=pltpu.CompilerParams(**compiler_kwargs),
    )(x_cl, x_cl, x_cl, cache_cl, wmat, bias)

    return jnp.transpose(y_cl, (0, 4, 1, 2, 3))                     # back to NCDHW


# ----------------------------------------------------------------------------------
# Pure-JAX reference (mirrors the PyTorch module op-for-op) for correctness checks.
# ----------------------------------------------------------------------------------
def sep_conv3d_forward_ref(x, cache_x, w2d, b2d, w3d, b3d, *, t_c=1):
    b, c, t, h, w = x.shape
    p = 1
    out2, out3 = w2d.shape[-1], w3d.shape[-1]

    # 2D branch: per-frame Conv2d(padding=1)
    x2 = jnp.transpose(x, (0, 2, 3, 4, 1)).reshape(b * t, h, w, c)
    y2 = lax.conv_general_dilated(
        x2, w2d, (1, 1), ((p, p), (p, p)),
        dimension_numbers=("NHWC", "HWIO", "NHWC"),
        precision=lax.Precision.HIGHEST) + b2d
    y2 = y2.reshape(b, t, h, w, out2)

    # 3D branch: Group_Causal_Conv3d (chunked causal temporal padding + cache splice)
    b_t = t // t_c
    xc = x.reshape(b, c, b_t, t_c, h, w).transpose(0, 2, 1, 3, 4, 5)
    xcp = jnp.pad(xc, ((0, 0), (0, 0), (0, 0), (p, p), (p, p), (p, p)))
    xsp = jnp.pad(x, ((0, 0), (0, 0), (0, 0), (p, p), (p, p)))
    cache_sp = jnp.pad(cache_x, ((0, 0), (0, 0), (0, 0), (p, p), (p, p)))
    prev_last = xsp[:, :, t_c - 1::t_c, :, :][:, :, :b_t - 1, :, :]
    frame0 = jnp.concatenate([cache_sp, prev_last], axis=2).transpose(0, 2, 1, 3, 4)
    xcp = xcp.at[:, :, :, 0, :, :].set(frame0)
    x3 = xcp.reshape(b * b_t, c, t_c + 2, h + 2 * p, w + 2 * p).transpose(0, 2, 3, 4, 1)
    y3 = lax.conv_general_dilated(
        x3, w3d, (1, 1, 1), "VALID",
        dimension_numbers=("NDHWC", "DHWIO", "NDHWC"),
        precision=lax.Precision.HIGHEST) + b3d
    y3 = y3.reshape(b, b_t, t_c, h, w, out3).reshape(b, t, h, w, out3)

    y = jnp.concatenate([y2, y3], axis=-1)
    return jnp.transpose(y, (0, 4, 1, 2, 3))


# ----------------------------------------------------------------------------------
if __name__ == "__main__":
    # small shapes: batch=2, in channels=4, t=8, h=w=16, kernel=3, out2=out3=8, t_c=2
    b, cin, t, h, w = 2, 4, 8, 16, 16
    k, out2, out3, t_c = 3, 8, 8, 2

    key = jax.random.PRNGKey(0)
    kx, kc, kw2, kb2, kw3, kb3 = jax.random.split(key, 6)
    x = jax.random.normal(kx, (b, cin, t, h, w), jnp.float32)
    cache_x = jax.random.normal(kc, (b, cin, 1, h, w), jnp.float32)
    # synthetic parameters in channels-last weight layout (HWIO / DHWIO)
    w2d = jax.random.normal(kw2, (k, k, cin, out2), jnp.float32) * 0.1
    b2d = jax.random.normal(kb2, (out2,), jnp.float32) * 0.1
    w3d = jax.random.normal(kw3, (k, k, k, cin, out3), jnp.float32) * 0.1
    b3d = jax.random.normal(kb3, (out3,), jnp.float32) * 0.1

    y_ref = sep_conv3d_forward_ref(x, cache_x, w2d, b2d, w3d, b3d, t_c=t_c)

    # f32 path (module parity).  Tolerance accounts for the MXU multi-pass f32 matmul
    # vs the HIGHEST-precision lax.conv reference; still 2.5x tighter than before.
    y = sep_conv3d_forward(x, cache_x, w2d, b2d, w3d, b3d, t_c=t_c)
    y = jax.block_until_ready(y)
    assert y.shape == (b, out2 + out3, t, h, w), y.shape
    assert bool(jnp.allclose(y, y_ref, atol=2e-2, rtol=2e-2)), \
        float(jnp.max(jnp.abs(y - y_ref)))

    # bf16 activations/weights with f32 accumulation (the HBM/VMEM/MXU optimization).
    y_bf16 = sep_conv3d_forward(x, cache_x, w2d, b2d, w3d, b3d, t_c=t_c,
                                compute_dtype=jnp.bfloat16)
    y_bf16 = jax.block_until_ready(y_bf16)
    assert bool(jnp.allclose(y_bf16, y_ref, atol=6e-2, rtol=6e-2)), \
        float(jnp.max(jnp.abs(y_bf16 - y_ref)))

    print("KERNEL_OK")
</pallas_src>

<mosaic_0001>
module attributes {stable_mosaic.version = 11 : i64} {
  func.func @_fused_sep_conv3d_kernel(%arg0: i32, %arg1: i32, %arg2: memref<1x1x16x16x4xf32, #tpu.memory_space<vmem>>, %arg3: memref<1x1x16x16x4xf32, #tpu.memory_space<vmem>>, %arg4: memref<1x1x16x16x4xf32, #tpu.memory_space<vmem>>, %arg5: memref<1x1x16x16x4xf32, #tpu.memory_space<vmem>>, %arg6: memref<108x16xf32, #tpu.memory_space<vmem>>, %arg7: memref<1x16xf32, #tpu.memory_space<vmem>>, %arg8: memref<1x1x16x16x16xf32, #tpu.memory_space<vmem>>, %arg9: memref<3x18x18x4xf32, #tpu.memory_space<vmem>>) attributes {dimension_semantics = [#tpu.dimension_semantics<parallel>, #tpu.dimension_semantics<parallel>], iteration_bounds = array<i64: 2, 8>, scalar_prefetch = 0 : i64, scratch_operands = 1 : i64, tpu.core_type = #tpu.core_type<tc>, window_params = [{transform_indices = @transform_0, window_bounds = array<i64: 1, 1, 16, 16, 4>}, {transform_indices = @transform_1, window_bounds = array<i64: 1, 1, 16, 16, 4>}, {transform_indices = @transform_2, window_bounds = array<i64: 1, 1, 16, 16, 4>}, {transform_indices = @transform_3, window_bounds = array<i64: 1, 1, 16, 16, 4>}, {pipeline_mode = #tpu.pipeline_mode<synchronous>, transform_indices = @transform_4, window_bounds = array<i64: 108, 16>}, {pipeline_mode = #tpu.pipeline_mode<synchronous>, transform_indices = @transform_5, window_bounds = array<i64: 1, 16>}, {transform_indices = @transform_6, window_bounds = array<i64: 1, 1, 16, 16, 16>}]} {
    %c0 = arith.constant 0 : index
    %c0_0 = arith.constant 0 : index
    %c0_1 = arith.constant 0 : index
    %c0_2 = arith.constant 0 : index
    %c0_3 = arith.constant 0 : index
    %0 = vector.load %arg2[%c0, %c0_0, %c0_1, %c0_2, %c0_3] : memref<1x1x16x16x4xf32, #tpu.memory_space<vmem>>, vector<1x1x16x16x4xf32>
    %1 = vector.shape_cast %0 : vector<1x1x16x16x4xf32> to vector<16x16x4xf32>
    %c0_4 = arith.constant 0 : index
    %c0_5 = arith.constant 0 : index
    %c0_6 = arith.constant 0 : index
    %c0_7 = arith.constant 0 : index
    %c0_8 = arith.constant 0 : index
    %2 = vector.load %arg3[%c0_4, %c0_5, %c0_6, %c0_7, %c0_8] : memref<1x1x16x16x4xf32, #tpu.memory_space<vmem>>, vector<1x1x16x16x4xf32>
    %3 = vector.shape_cast %2 : vector<1x1x16x16x4xf32> to vector<16x16x4xf32>
    %c0_9 = arith.constant 0 : index
    %c0_10 = arith.constant 0 : index
    %c0_11 = arith.constant 0 : index
    %c0_12 = arith.constant 0 : index
    %c0_13 = arith.constant 0 : index
    %4 = vector.load %arg4[%c0_9, %c0_10, %c0_11, %c0_12, %c0_13] : memref<1x1x16x16x4xf32, #tpu.memory_space<vmem>>, vector<1x1x16x16x4xf32>
    %5 = vector.shape_cast %4 : vector<1x1x16x16x4xf32> to vector<16x16x4xf32>
    %c0_i32 = arith.constant 0 : i32
    %6 = arith.cmpi eq, %arg1, %c0_i32 : i32
    %7 = arith.extui %6 : i1 to i32
    %8 = arith.sitofp %7 : i32 to f32
    %c0_14 = arith.constant 0 : index
    %c0_15 = arith.constant 0 : index
    %c0_16 = arith.constant 0 : index
    %c0_17 = arith.constant 0 : index
    %c0_18 = arith.constant 0 : index
    %9 = vector.load %arg5[%c0_14, %c0_15, %c0_16, %c0_17, %c0_18] : memref<1x1x16x16x4xf32, #tpu.memory_space<vmem>>, vector<1x1x16x16x4xf32>
    %10 = vector.shape_cast %9 : vector<1x1x16x16x4xf32> to vector<16x16x4xf32>
    %11 = vector.broadcast %8 : f32 to vector<16x16x4xf32>
    %12 = arith.mulf %10, %11 : vector<16x16x4xf32>
    %cst = arith.constant 1.000000e+00 : f32
    %13 = arith.subf %cst, %8 : f32
    %14 = vector.broadcast %13 : f32 to vector<16x16x4xf32>
    %15 = arith.mulf %1, %14 : vector<16x16x4xf32>
    %16 = arith.addf %12, %15 : vector<16x16x4xf32>
    %c1_i32 = arith.constant 1 : i32
    %17 = arith.addi %arg1, %c1_i32 : i32
    %c2_i32 = arith.constant 2 : i32
    %c0_i32_19 = arith.constant 0 : i32
    %18 = arith.cmpi eq, %c2_i32, %c0_i32_19 : i32
    %c1_i32_20 = arith.constant 1 : i32
    %19 = arith.select %18, %c1_i32_20, %c2_i32 : i32
    %20 = arith.remsi %17, %19 : i32
    %c0_i32_21 = arith.constant 0 : i32
    %21 = arith.cmpi ne, %20, %c0_i32_21 : i32
    %c0_i32_22 = arith.constant 0 : i32
    %22 = arith.cmpi slt, %20, %c0_i32_22 : i32
    %c0_i32_23 = arith.constant 0 : i32
    %23 = arith.cmpi slt, %19, %c0_i32_23 : i32
    %24 = arith.xori %22, %23 : i1
    %25 = arith.andi %24, %21 : i1
    %26 = arith.addi %20, %19 : i32
    %27 = arith.select %25, %26, %20 : i32
    %c0_i32_24 = arith.constant 0 : i32
    %28 = arith.cmpi ne, %27, %c0_i32_24 : i32
    %29 = arith.extui %28 : i1 to i32
    %30 = arith.sitofp %29 : i32 to f32
    %31 = vector.broadcast %30 : f32 to vector<16x16x4xf32>
    %32 = arith.mulf %5, %31 : vector<16x16x4xf32>
    %cst_25 = arith.constant 0.000000e+00 : f32
    %33 = vector.broadcast %cst_25 : f32 to vector<3x18x18x4xf32>
    %c0_26 = arith.constant 0 : index
    %c0_27 = arith.constant 0 : index
    %c0_28 = arith.constant 0 : index
    %c0_29 = arith.constant 0 : index
    %34 = vector.load %arg9[%c0_26, %c0_27, %c0_28, %c0_29] : memref<3x18x18x4xf32, #tpu.memory_space<vmem>>, vector<3x18x18x4xf32>
    tpu.vector_store %arg9[%c0_26, %c0_27, %c0_28, %c0_29], %33 {strides = array<i32>} : memref<3x18x18x4xf32, #tpu.memory_space<vmem>>, vector<3x18x18x4xf32>,
    %c0_30 = arith.constant 0 : index
    %c1 = arith.constant 1 : index
    %c1_31 = arith.constant 1 : index
    %c0_32 = arith.constant 0 : index
    %35 = vector.load %arg9[%c0_30, %c1, %c1_31, %c0_32] : memref<3x18x18x4xf32, #tpu.memory_space<vmem>>, vector<1x16x16x4xf32>
    %36 = vector.shape_cast %35 : vector<1x16x16x4xf32> to vector<16x16x4xf32>
    %37 = vector.shape_cast %16 : vector<16x16x4xf32> to vector<1x16x16x4xf32>
    tpu.vector_store %arg9[%c0_30, %c1, %c1_31, %c0_32], %37 {strides = array<i32>} : memref<3x18x18x4xf32, #tpu.memory_space<vmem>>, vector<1x16x16x4xf32>,
    %c1_33 = arith.constant 1 : index
    %c1_34 = arith.constant 1 : index
    %c1_35 = arith.constant 1 : index
    %c0_36 = arith.constant 0 : index
    %38 = vector.load %arg9[%c1_33, %c1_34, %c1_35, %c0_36] : memref<3x18x18x4xf32, #tpu.memory_space<vmem>>, vector<1x16x16x4xf32>
    %39 = vector.shape_cast %38 : vector<1x16x16x4xf32> to vector<16x16x4xf32>
    %40 = vector.shape_cast %3 : vector<16x16x4xf32> to vector<1x16x16x4xf32>
    tpu.vector_store %arg9[%c1_33, %c1_34, %c1_35, %c0_36], %40 {strides = array<i32>} : memref<3x18x18x4xf32, #tpu.memory_space<vmem>>, vector<1x16x16x4xf32>,
    %c2 = arith.constant 2 : index
    %c1_37 = arith.constant 1 : index
    %c1_38 = arith.constant 1 : index
    %c0_39 = arith.constant 0 : index
    %41 = vector.load %arg9[%c2, %c1_37, %c1_38, %c0_39] : memref<3x18x18x4xf32, #tpu.memory_space<vmem>>, vector<1x16x16x4xf32>
    %42 = vector.shape_cast %41 : vector<1x16x16x4xf32> to vector<16x16x4xf32>
    %43 = vector.shape_cast %32 : vector<16x16x4xf32> to vector<1x16x16x4xf32>
    tpu.vector_store %arg9[%c2, %c1_37, %c1_38, %c0_39], %43 {strides = array<i32>} : memref<3x18x18x4xf32, #tpu.memory_space<vmem>>, vector<1x16x16x4xf32>,
    %c0_40 = arith.constant 0 : index
    %c0_41 = arith.constant 0 : index
    %c0_42 = arith.constant 0 : index
    %c0_43 = arith.constant 0 : index
    %44 = vector.load %arg9[%c0_40, %c0_41, %c0_42, %c0_43] : memref<3x18x18x4xf32, #tpu.memory_space<vmem>>, vector<1x18x18x4xf32>
    %45 = vector.shape_cast %44 : vector<1x18x18x4xf32> to vector<18x18x4xf32>
    %46 = vector.extract_strided_slice %45 {offsets = [0, 0, 0], sizes = [16, 16, 4], strides = [1, 1, 1]} : vector<18x18x4xf32> to vector<16x16x4xf32>
    %47 = vector.extract_strided_slice %45 {offsets = [0, 1, 0], sizes = [16, 16, 4], strides = [1, 1, 1]} : vector<18x18x4xf32> to vector<16x16x4xf32>
    %48 = vector.extract_strided_slice %45 {offsets = [0, 2, 0], sizes = [16, 16, 4], strides = [1, 1, 1]} : vector<18x18x4xf32> to vector<16x16x4xf32>
    %49 = vector.extract_strided_slice %45 {offsets = [1, 0, 0], sizes = [16, 16, 4], strides = [1, 1, 1]} : vector<18x18x4xf32> to vector<16x16x4xf32>
    %50 = vector.extract_strided_slice %45 {offsets = [1, 1, 0], sizes = [16, 16, 4], strides = [1, 1, 1]} : vector<18x18x4xf32> to vector<16x16x4xf32>
    %51 = vector.extract_strided_slice %45 {offsets = [1, 2, 0], sizes = [16, 16, 4], strides = [1, 1, 1]} : vector<18x18x4xf32> to vector<16x16x4xf32>
    %52 = vector.extract_strided_slice %45 {offsets = [2, 0, 0], sizes = [16, 16, 4], strides = [1, 1, 1]} : vector<18x18x4xf32> to vector<16x16x4xf32>
    %53 = vector.extract_strided_slice %45 {offsets = [2, 1, 0], sizes = [16, 16, 4], strides = [1, 1, 1]} : vector<18x18x4xf32> to vector<16x16x4xf32>
    %54 = vector.extract_strided_slice %45 {offsets = [2, 2, 0], sizes = [16, 16, 4], strides = [1, 1, 1]} : vector<18x18x4xf32> to vector<16x16x4xf32>
    %c1_44 = arith.constant 1 : index
    %c0_45 = arith.constant 0 : index
    %c0_46 = arith.constant 0 : index
    %c0_47 = arith.constant 0 : index
    %55 = vector.load %arg9[%c1_44, %c0_45, %c0_46, %c0_47] : memref<3x18x18x4xf32, #tpu.memory_space<vmem>>, vector<1x18x18x4xf32>
    %56 = vector.shape_cast %55 : vector<1x18x18x4xf32> to vector<18x18x4xf32>
    %57 = vector.extract_strided_slice %56 {offsets = [0, 0, 0], sizes = [16, 16, 4], strides = [1, 1, 1]} : vector<18x18x4xf32> to vector<16x16x4xf32>
    %58 = vector.extract_strided_slice %56 {offsets = [0, 1, 0], sizes = [16, 16, 4], strides = [1, 1, 1]} : vector<18x18x4xf32> to vector<16x16x4xf32>
    %59 = vector.extract_strided_slice %56 {offsets = [0, 2, 0], sizes = [16, 16, 4], strides = [1, 1, 1]} : vector<18x18x4xf32> to vector<16x16x4xf32>
    %60 = vector.extract_strided_slice %56 {offsets = [1, 0, 0], sizes = [16, 16, 4], strides = [1, 1, 1]} : vector<18x18x4xf32> to vector<16x16x4xf32>
    %61 = vector.extract_strided_slice %56 {offsets = [1, 1, 0], sizes = [16, 16, 4], strides = [1, 1, 1]} : vector<18x18x4xf32> to vector<16x16x4xf32>
    %62 = vector.extract_strided_slice %56 {offsets = [1, 2, 0], sizes = [16, 16, 4], strides = [1, 1, 1]} : vector<18x18x4xf32> to vector<16x16x4xf32>
    %63 = vector.extract_strided_slice %56 {offsets = [2, 0, 0], sizes = [16, 16, 4], strides = [1, 1, 1]} : vector<18x18x4xf32> to vector<16x16x4xf32>
    %64 = vector.extract_strided_slice %56 {offsets = [2, 1, 0], sizes = [16, 16, 4], strides = [1, 1, 1]} : vector<18x18x4xf32> to vector<16x16x4xf32>
    %65 = vector.extract_strided_slice %56 {offsets = [2, 2, 0], sizes = [16, 16, 4], strides = [1, 1, 1]} : vector<18x18x4xf32> to vector<16x16x4xf32>
    %c2_48 = arith.constant 2 : index
    %c0_49 = arith.constant 0 : index
    %c0_50 = arith.constant 0 : index
    %c0_51 = arith.constant 0 : index
    %66 = vector.load %arg9[%c2_48, %c0_49, %c0_50, %c0_51] : memref<3x18x18x4xf32, #tpu.memory_space<vmem>>, vector<1x18x18x4xf32>
    %67 = vector.shape_cast %66 : vector<1x18x18x4xf32> to vector<18x18x4xf32>
    %68 = vector.extract_strided_slice %67 {offsets = [0, 0, 0], sizes = [16, 16, 4], strides = [1, 1, 1]} : vector<18x18x4xf32> to vector<16x16x4xf32>
    %69 = vector.extract_strided_slice %67 {offsets = [0, 1, 0], sizes = [16, 16, 4], strides = [1, 1, 1]} : vector<18x18x4xf32> to vector<16x16x4xf32>
    %70 = vector.extract_strided_slice %67 {offsets = [0, 2, 0], sizes = [16, 16, 4], strides = [1, 1, 1]} : vector<18x18x4xf32> to vector<16x16x4xf32>
    %71 = vector.extract_strided_slice %67 {offsets = [1, 0, 0], sizes = [16, 16, 4], strides = [1, 1, 1]} : vector<18x18x4xf32> to vector<16x16x4xf32>
    %72 = vector.extract_strided_slice %67 {offsets = [1, 1, 0], sizes = [16, 16, 4], strides = [1, 1, 1]} : vector<18x18x4xf32> to vector<16x16x4xf32>
    %73 = vector.extract_strided_slice %67 {offsets = [1, 2, 0], sizes = [16, 16, 4], strides = [1, 1, 1]} : vector<18x18x4xf32> to vector<16x16x4xf32>
    %74 = vector.extract_strided_slice %67 {offsets = [2, 0, 0], sizes = [16, 16, 4], strides = [1, 1, 1]} : vector<18x18x4xf32> to vector<16x16x4xf32>
    %75 = vector.extract_strided_slice %67 {offsets = [2, 1, 0], sizes = [16, 16, 4], strides = [1, 1, 1]} : vector<18x18x4xf32> to vector<16x16x4xf32>
    %76 = vector.extract_strided_slice %67 {offsets = [2, 2, 0], sizes = [16, 16, 4], strides = [1, 1, 1]} : vector<18x18x4xf32> to vector<16x16x4xf32>
    %77 = tpu.concatenate %46, %47, %48, %49, %50, %51, %52, %53, %54, %57, %58, %59, %60, %61, %62, %63 in 2 : vector<16x16x4xf32>, vector<16x16x4xf32>, vector<16x16x4xf32>, vector<16x16x4xf32>, vector<16x16x4xf32>, vector<16x16x4xf32>, vector<16x16x4xf32>, vector<16x16x4xf32>, vector<16x16x4xf32>, vector<16x16x4xf32>, vector<16x16x4xf32>, vector<16x16x4xf32>, vector<16x16x4xf32>, vector<16x16x4xf32>, vector<16x16x4xf32>, vector<16x16x4xf32> -> vector<16x16x64xf32>
    %78 = tpu.concatenate %64, %65, %68, %69, %70, %71, %72, %73, %74, %75, %76 in 2 : vector<16x16x4xf32>, vector<16x16x4xf32>, vector<16x16x4xf32>, vector<16x16x4xf32>, vector<16x16x4xf32>, vector<16x16x4xf32>, vector<16x16x4xf32>, vector<16x16x4xf32>, vector<16x16x4xf32>, vector<16x16x4xf32>, vector<16x16x4xf32> -> vector<16x16x44xf32>
    %79 = tpu.concatenate %77, %78 in 2 : vector<16x16x64xf32>, vector<16x16x44xf32> -> vector<16x16x108xf32>
    %80 = vector.shape_cast %79 : vector<16x16x108xf32> to vector<256x108xf32>
    %c0_52 = arith.constant 0 : index
    %c0_53 = arith.constant 0 : index
    %81 = vector.load %arg6[%c0_52, %c0_53] : memref<108x16xf32, #tpu.memory_space<vmem>>, vector<108x16xf32>
    %cst_54 = arith.constant dense<0.000000e+00> : vector<256x16xf32>
    %82 = tpu.matmul %80, %81, %cst_54 {dimension_numbers = #tpu.dot_dimension_numbers<[1], [0], [0], [1], [0, 0, 1, 1], [], []>} : vector<256x108xf32>, vector<108x16xf32>, vector<256x16xf32> -> vector<256x16xf32>
    %c0_55 = arith.constant 0 : index
    %c0_56 = arith.constant 0 : index
    %83 = vector.load %arg7[%c0_55, %c0_56] : memref<1x16xf32, #tpu.memory_space<vmem>>, vector<1x16xf32>
    %84 = vector.broadcast %83 : vector<1x16xf32> to vector<256x16xf32>
    %85 = arith.addf %82, %84 : vector<256x16xf32>
    %86 = vector.shape_cast %85 : vector<256x16xf32> to vector<16x16x16xf32>
    %c0_57 = arith.constant 0 : index
    %c0_58 = arith.constant 0 : index
    %c0_59 = arith.constant 0 : index
    %c0_60 = arith.constant 0 : index
    %c0_61 = arith.constant 0 : index
    %87 = vector.load %arg8[%c0_57, %c0_58, %c0_59, %c0_60, %c0_61] : memref<1x1x16x16x16xf32, #tpu.memory_space<vmem>>, vector<1x1x16x16x16xf32>
    %88 = vector.shape_cast %87 : vector<1x1x16x16x16xf32> to vector<16x16x16xf32>
    %89 = vector.shape_cast %86 : vector<16x16x16xf32> to vector<1x1x16x16x16xf32>
    tpu.vector_store %arg8[%c0_57, %c0_58, %c0_59, %c0_60, %c0_61], %89 {strides = array<i32>} : memref<1x1x16x16x16xf32, #tpu.memory_space<vmem>>, vector<1x1x16x16x16xf32>,
    return
  }
  func.func @transform_0(%arg0: i32, %arg1: i32) -> (i32, i32, i32, i32, i32) {
    %c1_i32 = arith.constant 1 : i32
    %0 = arith.subi %arg1, %c1_i32 : i32
    %c0_i32 = arith.constant 0 : i32
    %1 = arith.maxsi %0, %c0_i32 : i32
    %c0_i32_0 = arith.constant 0 : i32
    %c0_i32_1 = arith.constant 0 : i32
    %c0_i32_2 = arith.constant 0 : i32
    %c0_i32_3 = arith.constant 0 : i32
    return %arg0, %1, %c0_i32_0, %c0_i32_1, %c0_i32_2 : i32, i32, i32, i32, i32
  }
  func.func @transform_1(%arg0: i32, %arg1: i32) -> (i32, i32, i32, i32, i32) {
    %c0_i32 = arith.constant 0 : i32
    %c0_i32_0 = arith.constant 0 : i32
    %c0_i32_1 = arith.constant 0 : i32
    %c0_i32_2 = arith.constant 0 : i32
    return %arg0, %arg1, %c0_i32, %c0_i32_0, %c0_i32_1 : i32, i32, i32, i32, i32
  }
  func.func @transform_2(%arg0: i32, %arg1: i32) -> (i32, i32, i32, i32, i32) {
    %c1_i32 = arith.constant 1 : i32
    %0 = arith.addi %arg1, %c1_i32 : i32
    %c7_i32 = arith.constant 7 : i32
    %1 = arith.minsi %0, %c7_i32 : i32
    %c0_i32 = arith.constant 0 : i32
    %c0_i32_0 = arith.constant 0 : i32
    %c0_i32_1 = arith.constant 0 : i32
    %c0_i32_2 = arith.constant 0 : i32
    return %arg0, %1, %c0_i32, %c0_i32_0, %c0_i32_1 : i32, i32, i32, i32, i32
  }
  func.func @transform_3(%arg0: i32, %arg1: i32) -> (i32, i32, i32, i32, i32) {
    %c0_i32 = arith.constant 0 : i32
    %c0_i32_0 = arith.constant 0 : i32
    %c0_i32_1 = arith.constant 0 : i32
    %c0_i32_2 = arith.constant 0 : i32
    %c0_i32_3 = arith.constant 0 : i32
    return %arg0, %c0_i32, %c0_i32_0, %c0_i32_1, %c0_i32_2 : i32, i32, i32, i32, i32
  }
  func.func @transform_4(%arg0: i32, %arg1: i32) -> (i32, i32) {
    %c0_i32 = arith.constant 0 : i32
    %c0_i32_0 = arith.constant 0 : i32
    %c0_i32_1 = arith.constant 0 : i32
    return %c0_i32, %c0_i32_0 : i32, i32
  }
  func.func @transform_5(%arg0: i32, %arg1: i32) -> (i32, i32) {
    %c0_i32 = arith.constant 0 : i32
    %c0_i32_0 = arith.constant 0 : i32
    %c0_i32_1 = arith.constant 0 : i32
    return %c0_i32, %c0_i32_0 : i32, i32
  }
  func.func @transform_6(%arg0: i32, %arg1: i32) -> (i32, i32, i32, i32, i32) {
    %c0_i32 = arith.constant 0 : i32
    %c0_i32_0 = arith.constant 0 : i32
    %c0_i32_1 = arith.constant 0 : i32
    %c0_i32_2 = arith.constant 0 : i32
    return %arg0, %arg1, %c0_i32, %c0_i32_0, %c0_i32_1 : i32, i32, i32, i32, i32
  }
}

</mosaic_0001>

<llo_original>
// kernel: tpu_custom_call.1
$region0: #{tpu_custom_call.1}
  #allocation0 [shape = 'u32[]', space=smem, size = 0x4, offset = 0x4, fixed_abs, tag = 'smem constant byte address 0x4 - core index']
  #allocation1 [shape = 'u32[72,128]{1,0:T(1,128)}', space=vmem, size = 0x9000, scoped, tag = 'internal scratch']
  #allocation2 [shape = 'f32[3,18,18,4]{3,2,1,0:T(8,128)}', space=vmem, size = 0xa2000, scoped, tag = 'scratch operand']
  %s0 = inlined_call_operand.vmem [shape: f32[2,8,16,16,4], index: 0, kind: input, shape index: {}]
  %s1 = inlined_call_operand.vmem [shape: f32[2,8,16,16,4], index: 1, kind: input, shape index: {}]
  %s2 = inlined_call_operand.vmem [shape: f32[2,8,16,16,4], index: 2, kind: input, shape index: {}]
  %s3 = inlined_call_operand.vmem [shape: f32[2,1,16,16,4], index: 3, kind: input, shape index: {}]
  %s4 = inlined_call_operand.vmem [shape: f32[108,16], index: 4, kind: input, shape index: {}]
  %s5 = inlined_call_operand.vmem [shape: f32[1,16], index: 5, kind: input, shape index: {}]
  %s6 = inlined_call_operand.hbm [shape: f32[2,8,16,16,16], index: 6, kind: output, shape index: {}]
  %s7 = sld [smem:[#allocation0]]
  $region57: #{tpu_custom_call.1} parent=0
    _
  %s9 = ssub.s32 1, %s7
  %s10 = scalar_select 0, %s9, %s7
  $region1: #{tpu_custom_call.1} parent=0
    #allocation3 [shape = 'u8[262144]{0}', space=vmem, size = 0x40000, scoped, tag = 'output window, operand 0']
    #allocation4 [shape = 's32[2]{0}', space=sflag, size = 0x8, scoped, tag = 'scoped memory for tpu_custom_call.1']
    %11 = vsyncpa [#allocation4], 0
    %s12 = scalar_lea.sflag [#allocation4], 1
    %13 = vsyncpa %s12, 0
    loop: start=0, step=1, limit=18
    $region2: #{tpu_custom_call.1} parent=1 // loop_pre_header
      _
    $region3: #{tpu_custom_call.1} parent=1 // loop_header
      %s15 = sphi 0, %s19
      %p16 = scmp.ge.s32.totalorder %s15, 18
      %s22 = sphi 0, %s34
      %s23 = sphi 0, %s30
      %s24 = sphi 0, %s22
      %s25 = sphi 0, %s23
      %s26 = sphi 0, %s24
      %s27 = sphi 0, %s25
      %s45 = sphi 0, %s47
      %s48 = sphi 0, %s45
      %s49 = sphi 0, %s48
      %s65 = sphi 0, %s49
      %s73 = sphi 0, %s75
      %s76 = sphi 0, %s73
      %s77 = sphi 0, %s76
      %s93 = sphi 0, %s77
      %s107 = sphi 0, %s109
      %s110 = sphi 0, %s107
      %s111 = sphi 0, %s110
      %s127 = sphi 0, %s111
      %s133 = sphi 0, %s135
      %s136 = sphi 0, %s133
      %s137 = sphi 0, %s136
      %s153 = sphi 0, %s137
      %s157 = sphi 0, %s157
      %s159 = sphi 0, %s157
      %s160 = sphi 0, %s159
      %s174 = sphi 0, %s160
      %s178 = sphi 0, %s178
      %s180 = sphi 0, %s178
      %s181 = sphi 0, %s180
      %s195 = sphi 0, %s181
      %s203 = sphi 0, %s205
      %s206 = sphi 0, %s203
      %s207 = sphi 0, %s206
      %s223 = sphi 0, %s207
    $region4: #{tpu_custom_call.1} parent=1 // loop_header_branch
      %18 = sbr.rel (%p16) target = $region8
    $region5: #{tpu_custom_call.1} parent=1 // loop_body
      %s20 = ssub.s32 %s15, 1
      %s21 = ssub.s32 %s15, 2
      %s28 = sadd.s32 1, %s23
      %p29 = scmp.ge.s32.totalorder %s28, 8
      %s30 = scalar_select %p29, 0, %s28
      %s31 = sadd.s32 1, %s22
      %s32 = scalar_select %p29, %s31, %s22
      %p33 = scmp.ge.s32.totalorder %s32, 2
      %s34 = scalar_select %p33, 0, %s32
      %s35 = ssub.s32 %s23, 1
      %p36 = scmp.gt.s32.totalorder %s35, 0
      %s37 = scalar_select %p36, %s35, 0
      %s38 = ssub.s32 %s30, 1
      %p39 = scmp.gt.s32.totalorder %s38, 0
      %s40 = scalar_select %p39, %s38, 0
      %s41 = ssub.s32 %s22, %s34
      %s42 = ssub.s32 %s37, %s40
      %s43 = sor.u32 %s41, %s42
      %p44 = scmp.eq.s32.totalorder %s43, 0
      %s46 = sadd.s32 %s45, 1
      %s47 = scalar_select %p44, %s45, %s46
      %p50 = pneg %p44
      %p51 = scmp.eq.s32.totalorder %s15, 15
      %p52 = por %p50, %p51
      %p53 = scmp.ne.s32.totalorder %s45, %s48
      %p54 = scmp.eq.s32.totalorder %s15, 0
      %p55 = por %p53, %p54
      %p56 = scmp.ne.s32.totalorder %s45, %s48
      %p57 = scmp.eq.s32.totalorder %s20, 15
      %p58 = por %p56, %p57
      %p59 = scmp.ne.s32.totalorder %s48, %s49
      %p60 = scmp.eq.s32.totalorder %s20, 0
      %p61 = por %p59, %p60
      %p62 = scmp.ne.s32.totalorder %s48, %s49
      %p63 = scmp.eq.s32.totalorder %s21, 15
      %p64 = por %p62, %p63
      %p66 = scmp.ne.s32.totalorder %s49, %s65
      %p67 = scmp.eq.s32.totalorder %s21, 0
      %p68 = por %p66, %p67
      %s69 = ssub.s32 %s22, %s34
      %s70 = ssub.s32 %s23, %s30
      %s71 = sor.u32 %s69, %s70
      %p72 = scmp.eq.s32.totalorder %s71, 0
      %s74 = sadd.s32 %s73, 1
      %s75 = scalar_select %p72, %s73, %s74
      %p78 = pneg %p72
      %p79 = scmp.eq.s32.totalorder %s15, 15
      %p80 = por %p78, %p79
      %p81 = scmp.ne.s32.totalorder %s73, %s76
      %p82 = scmp.eq.s32.totalorder %s15, 0
      %p83 = por %p81, %p82
      %p84 = scmp.ne.s32.totalorder %s73, %s76
      %p85 = scmp.eq.s32.totalorder %s20, 15
      %p86 = por %p84, %p85
      %p87 = scmp.ne.s32.totalorder %s76, %s77
      %p88 = scmp.eq.s32.totalorder %s20, 0
      %p89 = por %p87, %p88
      %p90 = scmp.ne.s32.totalorder %s76, %s77
      %p91 = scmp.eq.s32.totalorder %s21, 15
      %p92 = por %p90, %p91
      %p94 = scmp.ne.s32.totalorder %s77, %s93
      %p95 = scmp.eq.s32.totalorder %s21, 0
      %p96 = por %p94, %p95
      %s97 = sadd.s32 %s23, 1
      %p98 = scmp.lt.s32.totalorder %s97, 7
      %s99 = scalar_select %p98, %s97, 7
      %s100 = sadd.s32 %s30, 1
      %p101 = scmp.lt.s32.totalorder %s100, 7
      %s102 = scalar_select %p101, %s100, 7
      %s103 = ssub.s32 %s22, %s34
      %s104 = ssub.s32 %s99, %s102
      %s105 = sor.u32 %s103, %s104
      %p106 = scmp.eq.s32.totalorder %s105, 0
      %s108 = sadd.s32 %s107, 1
      %s109 = scalar_select %p106, %s107, %s108
      %p112 = pneg %p106
      %p113 = scmp.eq.s32.totalorder %s15, 15
      %p114 = por %p112, %p113
      %p115 = scmp.ne.s32.totalorder %s107, %s110
      %p116 = scmp.eq.s32.totalorder %s15, 0
      %p117 = por %p115, %p116
      %p118 = scmp.ne.s32.totalorder %s107, %s110
      %p119 = scmp.eq.s32.totalorder %s20, 15
      %p120 = por %p118, %p119
      %p121 = scmp.ne.s32.totalorder %s110, %s111
      %p122 = scmp.eq.s32.totalorder %s20, 0
      %p123 = por %p121, %p122
      %p124 = scmp.ne.s32.totalorder %s110, %s111
      %p125 = scmp.eq.s32.totalorder %s21, 15
      %p126 = por %p124, %p125
      %p128 = scmp.ne.s32.totalorder %s111, %s127
      %p129 = scmp.eq.s32.totalorder %s21, 0
      %p130 = por %p128, %p129
      %s131 = ssub.s32 %s22, %s34
      %p132 = scmp.eq.s32.totalorder %s131, 0
      %s134 = sadd.s32 %s133, 1
      %s135 = scalar_select %p132, %s133, %s134
      %p138 = pneg %p132
      %p139 = scmp.eq.s32.totalorder %s15, 15
      %p140 = por %p138, %p139
      %p141 = scmp.ne.s32.totalorder %s133, %s136
      %p142 = scmp.eq.s32.totalorder %s15, 0
      %p143 = por %p141, %p142
      %p144 = scmp.ne.s32.totalorder %s133, %s136
      %p145 = scmp.eq.s32.totalorder %s20, 15
      %p146 = por %p144, %p145
      %p147 = scmp.ne.s32.totalorder %s136, %s137
      %p148 = scmp.eq.s32.totalorder %s20, 0
      %p149 = por %p147, %p148
      %p150 = scmp.ne.s32.totalorder %s136, %s137
      %p151 = scmp.eq.s32.totalorder %s21, 15
      %p152 = por %p150, %p151
      %p154 = scmp.ne.s32.totalorder %s137, %s153
      %p155 = scmp.eq.s32.totalorder %s21, 0
      %p156 = por %p154, %p155
      %s158 = sadd.s32 %s157, 1
      %p161 = scmp.eq.s32.totalorder %s15, 15
      %p162 = scmp.ne.s32.totalorder %s157, %s159
      %p163 = scmp.eq.s32.totalorder %s15, 0
      %p164 = por %p162, %p163
      %p165 = scmp.ne.s32.totalorder %s157, %s159
      %p166 = scmp.eq.s32.totalorder %s20, 15
      %p167 = por %p165, %p166
      %p168 = scmp.ne.s32.totalorder %s159, %s160
      %p169 = scmp.eq.s32.totalorder %s20, 0
      %p170 = por %p168, %p169
      %p171 = scmp.ne.s32.totalorder %s159, %s160
      %p172 = scmp.eq.s32.totalorder %s21, 15
      %p173 = por %p171, %p172
      %p175 = scmp.ne.s32.totalorder %s160, %s174
      %p176 = scmp.eq.s32.totalorder %s21, 0
      %p177 = por %p175, %p176
      %s179 = sadd.s32 %s178, 1
      %p182 = scmp.eq.s32.totalorder %s15, 15
      %p183 = scmp.ne.s32.totalorder %s178, %s180
      %p184 = scmp.eq.s32.totalorder %s15, 0
      %p185 = por %p183, %p184
      %p186 = scmp.ne.s32.totalorder %s178, %s180
      %p187 = scmp.eq.s32.totalorder %s20, 15
      %p188 = por %p186, %p187
      %p189 = scmp.ne.s32.totalorder %s180, %s181
      %p190 = scmp.eq.s32.totalorder %s20, 0
      %p191 = por %p189, %p190
      %p192 = scmp.ne.s32.totalorder %s180, %s181
      %p193 = scmp.eq.s32.totalorder %s21, 15
      %p194 = por %p192, %p193
      %p196 = scmp.ne.s32.totalorder %s181, %s195
      %p197 = scmp.eq.s32.totalorder %s21, 0
      %p198 = por %p196, %p197
      %s199 = ssub.s32 %s22, %s34
      %s200 = ssub.s32 %s23, %s30
      %s201 = sor.u32 %s199, %s200
      %p202 = scmp.eq.s32.totalorder %s201, 0
      %s204 = sadd.s32 %s203, 1
      %s205 = scalar_select %p202, %s203, %s204
      %p208 = pneg %p202
      %p209 = scmp.eq.s32.totalorder %s15, 15
      %p210 = por %p208, %p209
      %p211 = scmp.ne.s32.totalorder %s203, %s206
      %p212 = scmp.eq.s32.totalorder %s15, 0
      %p213 = por %p211, %p212
      %p214 = scmp.ne.s32.totalorder %s203, %s206
      %p215 = scmp.eq.s32.totalorder %s20, 15
      %p216 = por %p214, %p215
      %p217 = scmp.ne.s32.totalorder %s206, %s207
      %p218 = scmp.eq.s32.totalorder %s20, 0
      %p219 = por %p217, %p218
      %p220 = scmp.ne.s32.totalorder %s206, %s207
      %p221 = scmp.eq.s32.totalorder %s21, 15
      %p222 = por %p220, %p221
      %p224 = scmp.ne.s32.totalorder %s207, %s223
      %p225 = scmp.eq.s32.totalorder %s21, 0
      %p226 = por %p224, %p225
      %p227 = scmp.le.s32.totalorder 1, %s15
      %p228 = scmp.lt.s32.totalorder %s15, 17
      %p229 = pnand %p227, %p228
      %p230 = pneg %p229
      // Predicated region
      $region9: #{tpu_custom_call.1} parent=5 // pred_check
        _
      $region10: #{tpu_custom_call.1} parent=5 // pred_check_branch
        %232 = sbr.rel (%p229) target = $region12
      $region11: #{tpu_custom_call.1} parent=5 // pred_region
        %s233 = ssub.s32 %s15, 1
        // Predicated region
        $region13: #{tpu_custom_call.1} parent=11 // pred_check
          %p234 = pneg %p170
        $region14: #{tpu_custom_call.1} parent=11 // pred_check_branch
          %236 = sbr.rel (%p234) target = $region16
        $region15: #{tpu_custom_call.1} parent=11 // pred_region
          _
        $region16: #{tpu_custom_call.1} parent=11 // pred_fallthru
          _
        // Predicated region
        $region17: #{tpu_custom_call.1} parent=11 // pred_check
          %p237 = pneg %p191
        $region18: #{tpu_custom_call.1} parent=11 // pred_check_branch
          %239 = sbr.rel (%p237) target = $region20
        $region19: #{tpu_custom_call.1} parent=11 // pred_region
          _
        $region20: #{tpu_custom_call.1} parent=11 // pred_fallthru
          _
      $region12: #{tpu_custom_call.1} parent=5 // pred_fallthru
        _
      %p240 = scmp.lt.s32.totalorder %s15, 16
      // Predicated region
      $region21: #{tpu_custom_call.1} parent=5 // pred_check
        %p241 = pneg %p240
      $region22: #{tpu_custom_call.1} parent=5 // pred_check_branch
        %243 = sbr.rel (%p241) target = $region24
      $region23: #{tpu_custom_call.1} parent=5 // pred_region
        // Predicated region
        $region25: #{tpu_custom_call.1} parent=23 // pred_check
          %p244 = pneg %p55
        $region26: #{tpu_custom_call.1} parent=23 // pred_check_branch
          %246 = sbr.rel (%p244) target = $region28
        $region27: #{tpu_custom_call.1} parent=23 // pred_region
          %s247 = ssub.s32 %s23, 1
          %p248 = scmp.gt.s32.totalorder %s247, 0
          %s249 = scalar_select %p248, %s247, 0
          %p250 = scmp.lt.s32.totalorder %s22, 1
          %s251 = scalar_select %p250, %s22, 1
          %p252 = scmp.lt.s32.totalorder %s249, 7
          %s253 = scalar_select %p252, %s249, 7
          %s254 = smul.addr %s253, 32
          %s255 = smul.addr %s251, 256
          %s256 = sadd.s32 %s254, %s255
          %s257 = smul.addr %s256, 8
          %s258 = scalar_lea.vmem %s0, %s257
          %s259 = ssub.s32 %s23, 1
          %p260 = scmp.gt.s32.totalorder %s259, 0
          %s261 = scalar_select %p260, %s259, 0
        $region28: #{tpu_custom_call.1} parent=23 // pred_fallthru
          _
        // Predicated region
        $region29: #{tpu_custom_call.1} parent=23 // pred_check
          %p262 = pneg %p83
        $region30: #{tpu_custom_call.1} parent=23 // pred_check_branch
          %264 = sbr.rel (%p262) target = $region32
        $region31: #{tpu_custom_call.1} parent=23 // pred_region
          %p265 = scmp.lt.s32.totalorder %s22, 1
          %s266 = scalar_select %p265, %s22, 1
          %p267 = scmp.lt.s32.totalorder %s23, 7
          %s268 = scalar_select %p267, %s23, 7
          %s269 = smul.addr %s268, 32
          %s270 = smul.addr %s266, 256
          %s271 = sadd.s32 %s269, %s270
          %s272 = smul.addr %s271, 8
          %s273 = scalar_lea.vmem %s1, %s272
        $region32: #{tpu_custom_call.1} parent=23 // pred_fallthru
          _
        // Predicated region
        $region33: #{tpu_custom_call.1} parent=23 // pred_check
          %p274 = pneg %p117
        $region34: #{tpu_custom_call.1} parent=23 // pred_check_branch
          %276 = sbr.rel (%p274) target = $region36
        $region35: #{tpu_custom_call.1} parent=23 // pred_region
          %s277 = sadd.s32 %s23, 1
          %p278 = scmp.lt.s32.totalorder %s277, 7
          %s279 = scalar_select %p278, %s277, 7
          %p280 = scmp.lt.s32.totalorder %s22, 1
          %s281 = scalar_select %p280, %s22, 1
          %p282 = scmp.lt.s32.totalorder %s279, 7
          %s283 = scalar_select %p282, %s279, 7
          %s284 = smul.addr %s283, 32
          %s285 = smul.addr %s281, 256
          %s286 = sadd.s32 %s284, %s285
          %s287 = smul.addr %s286, 8
          %s288 = scalar_lea.vmem %s2, %s287
          %s289 = sadd.s32 %s23, 1
          %p290 = scmp.lt.s32.totalorder %s289, 7
          %s291 = scalar_select %p290, %s289, 7
        $region36: #{tpu_custom_call.1} parent=23 // pred_fallthru
          _
        // Predicated region
        $region37: #{tpu_custom_call.1} parent=23 // pred_check
          %p292 = pneg %p143
        $region38: #{tpu_custom_call.1} parent=23 // pred_check_branch
          %294 = sbr.rel (%p292) target = $region40
        $region39: #{tpu_custom_call.1} parent=23 // pred_region
          %p295 = scmp.lt.s32.totalorder %s22, 1
          %s296 = scalar_select %p295, %s22, 1
          %s297 = smul.addr %s296, 32
          %s298 = smul.addr %s297, 8
          %s299 = scalar_lea.vmem %s3, %s298
        $region40: #{tpu_custom_call.1} parent=23 // pred_fallthru
          _
      $region24: #{tpu_custom_call.1} parent=5 // pred_fallthru
        _
      %p300 = scmp.le.s32.totalorder 1, %s15
      %p301 = scmp.lt.s32.totalorder %s15, 17
      %p302 = pnand %p300, %p301
      %p303 = pneg %p302
      // Predicated region
      $region41: #{tpu_custom_call.1} parent=5 // pred_check
        _
      $region42: #{tpu_custom_call.1} parent=5 // pred_check_branch
        %305 = sbr.rel (%p302) target = $region44
      $region43: #{tpu_custom_call.1} parent=5 // pred_region
        %s306 = ssub.s32 %s15, 1
        %s307 = ssub.s32 %s25, 1
        %p308 = scmp.gt.s32.totalorder %s307, 0
        %s309 = scalar_select %p308, %s307, 0
        %p310 = scmp.lt.s32.totalorder %s24, 1
        %s311 = scalar_select %p310, %s24, 1
        %p312 = scmp.lt.s32.totalorder %s309, 7
        %s313 = scalar_select %p312, %s309, 7
        %s314 = smul.addr %s313, 32
        %s315 = smul.addr %s311, 256
        %s316 = sadd.s32 %s314, %s315
        %s317 = smul.addr %s316, 8
        %s318 = scalar_lea.vmem %s0, %s317
        %p319 = pneg %p61
        %p320 = pneg %p58
        %p321 = scmp.lt.s32.totalorder %s24, 1
        %s322 = scalar_select %p321, %s24, 1
        %p323 = scmp.lt.s32.totalorder %s25, 7
        %s324 = scalar_select %p323, %s25, 7
        %s325 = smul.addr %s324, 32
        %s326 = smul.addr %s322, 256
        %s327 = sadd.s32 %s325, %s326
        %s328 = smul.addr %s327, 8
        %s329 = scalar_lea.vmem %s1, %s328
        %p330 = pneg %p89
        %p331 = pneg %p86
        %s332 = sadd.s32 %s25, 1
        %p333 = scmp.lt.s32.totalorder %s332, 7
        %s334 = scalar_select %p333, %s332, 7
        %p335 = scmp.lt.s32.totalorder %s24, 1
        %s336 = scalar_select %p335, %s24, 1
        %p337 = scmp.lt.s32.totalorder %s334, 7
        %s338 = scalar_select %p337, %s334, 7
        %s339 = smul.addr %s338, 32
        %s340 = smul.addr %s336, 256
        %s341 = sadd.s32 %s339, %s340
        %s342 = smul.addr %s341, 8
        %s343 = scalar_lea.vmem %s2, %s342
        %p344 = pneg %p123
        %p345 = pneg %p120
        %p346 = scmp.lt.s32.totalorder %s24, 1
        %s347 = scalar_select %p346, %s24, 1
        %s348 = smul.addr %s347, 32
        %s349 = smul.addr %s348, 8
        %s350 = scalar_lea.vmem %s3, %s349
        %p351 = pneg %p149
        %p352 = pneg %p146
        %p353 = pneg %p170
        %p354 = pneg %p167
        %p355 = pneg %p191
        %p356 = pneg %p188
        %p357 = pneg %p219
        %p358 = pneg %p216
        %s359 = sand.u32 %s206, 1
        %s360 = scalar_lea.sflag [#allocation4], %s359
        %s361 = sand.u32 %s206, 1
        %s362 = smul.addr %s361, 256
        %s363 = scalar_lea.vmem [#allocation3], %s362
        %s364 = ssub.s32 %s25, 1
        %p365 = scmp.gt.s32.totalorder %s364, 0
        %s366 = scalar_select %p365, %s364, 0
        %p367 = scmp.lt.s32.totalorder %s24, 1
        %s368 = scalar_select %p367, %s24, 1
        %p369 = scmp.lt.s32.totalorder %s366, 7
        %s370 = scalar_select %p369, %s366, 7
        %s371 = smul.addr %s370, 32
        %s372 = smul.addr %s368, 256
        %s373 = sadd.s32 %s371, %s372
        %s374 = smul.addr %s373, 8
        %s375 = scalar_lea.vmem %s0, %s374
        %s376 = ssub.s32 %s25, 1
        %p377 = scmp.gt.s32.totalorder %s376, 0
        %s378 = scalar_select %p377, %s376, 0
        %p379 = scmp.lt.s32.totalorder %s24, 1
        %s380 = scalar_select %p379, %s24, 1
        %p381 = scmp.lt.s32.totalorder %s25, 7
        %s382 = scalar_select %p381, %s25, 7
        %s383 = smul.addr %s382, 32
        %s384 = smul.addr %s380, 256
        %s385 = sadd.s32 %s383, %s384
        %s386 = smul.addr %s385, 8
        %s387 = scalar_lea.vmem %s1, %s386
        %s388 = sadd.s32 %s25, 1
        %p389 = scmp.lt.s32.totalorder %s388, 7
        %s390 = scalar_select %p389, %s388, 7
        %p391 = scmp.lt.s32.totalorder %s24, 1
        %s392 = scalar_select %p391, %s24, 1
        %p393 = scmp.lt.s32.totalorder %s390, 7
        %s394 = scalar_select %p393, %s390, 7
        %s395 = smul.addr %s394, 32
        %s396 = smul.addr %s392, 256
        %s397 = sadd.s32 %s395, %s396
        %s398 = smul.addr %s397, 8
        %s399 = scalar_lea.vmem %s2, %s398
        %s400 = sadd.s32 %s25, 1
        %p401 = scmp.lt.s32.totalorder %s400, 7
        %s402 = scalar_select %p401, %s400, 7
        %p403 = scmp.lt.s32.totalorder %s24, 1
        %s404 = scalar_select %p403, %s24, 1
        %s405 = smul.addr %s404, 32
        %s406 = smul.addr %s405, 8
        %s407 = scalar_lea.vmem %s3, %s406
        %v408 = vld [vmem:[%s375] sm:$0xff]
        %v409 = vld [vmem:[%s375 + $0x8] sm:$0xff]
        %v410 = vld [vmem:[%s375 + $0x10] sm:$0xff]
        %v411 = vld [vmem:[%s375 + $0x18] sm:$0xff]
        %v412 = vld [vmem:[%s375 + $0x20] sm:$0xff]
        %v413 = vld [vmem:[%s375 + $0x28] sm:$0xff]
        %v414 = vld [vmem:[%s375 + $0x30] sm:$0xff]
        %v415 = vld [vmem:[%s375 + $0x38] sm:$0xff]
        %v416 = vld [vmem:[%s375 + $0x40] sm:$0xff]
        %v417 = vld [vmem:[%s375 + $0x48] sm:$0xff]
        %v418 = vld [vmem:[%s375 + $0x50] sm:$0xff]
        %v419 = vld [vmem:[%s375 + $0x58] sm:$0xff]
        %v420 = vld [vmem:[%s375 + $0x60] sm:$0xff]
        %v421 = vld [vmem:[%s375 + $0x68] sm:$0xff]
        %v422 = vld [vmem:[%s375 + $0x70] sm:$0xff]
        %v423 = vld [vmem:[%s375 + $0x78] sm:$0xff]
        %v424 = vld [vmem:[%s375 + $0x80] sm:$0xff]
        %v425 = vld [vmem:[%s375 + $0x88] sm:$0xff]
        %v426 = vld [vmem:[%s375 + $0x90] sm:$0xff]
        %v427 = vld [vmem:[%s375 + $0x98] sm:$0xff]
        %v428 = vld [vmem:[%s375 + $0xa0] sm:$0xff]
        %v429 = vld [vmem:[%s375 + $0xa8] sm:$0xff]
        %v430 = vld [vmem:[%s375 + $0xb0] sm:$0xff]
        %v431 = vld [vmem:[%s375 + $0xb8] sm:$0xff]
        %v432 = vld [vmem:[%s375 + $0xc0] sm:$0xff]
        %v433 = vld [vmem:[%s375 + $0xc8] sm:$0xff]
        %v434 = vld [vmem:[%s375 + $0xd0] sm:$0xff]
        %v435 = vld [vmem:[%s375 + $0xd8] sm:$0xff]
        %v436 = vld [vmem:[%s375 + $0xe0] sm:$0xff]
        %v437 = vld [vmem:[%s375 + $0xe8] sm:$0xff]
        %v438 = vld [vmem:[%s375 + $0xf0] sm:$0xff]
        %v439 = vld [vmem:[%s375 + $0xf8] sm:$0xff]
        %v440 = vld [vmem:[%s387] sm:$0xff]
        %v441 = vld [vmem:[%s387 + $0x8] sm:$0xff]
        %v442 = vld [vmem:[%s387 + $0x10] sm:$0xff]
        %v443 = vld [vmem:[%s387 + $0x18] sm:$0xff]
        %v444 = vld [vmem:[%s387 + $0x20] sm:$0xff]
        %v445 = vld [vmem:[%s387 + $0x28] sm:$0xff]
        %v446 = vld [vmem:[%s387 + $0x30] sm:$0xff]
        %v447 = vld [vmem:[%s387 + $0x38] sm:$0xff]
        %v448 = vld [vmem:[%s387 + $0x40] sm:$0xff]
        %v449 = vld [vmem:[%s387 + $0x48] sm:$0xff]
        %v450 = vld [vmem:[%s387 + $0x50] sm:$0xff]
        %v451 = vld [vmem:[%s387 + $0x58] sm:$0xff]
        %v452 = vld [vmem:[%s387 + $0x60] sm:$0xff]
        %v453 = vld [vmem:[%s387 + $0x68] sm:$0xff]
        %v454 = vld [vmem:[%s387 + $0x70] sm:$0xff]
        %v455 = vld [vmem:[%s387 + $0x78] sm:$0xff]
        %v456 = vld [vmem:[%s387 + $0x80] sm:$0xff]
        %v457 = vld [vmem:[%s387 + $0x88] sm:$0xff]
        %v458 = vld [vmem:[%s387 + $0x90] sm:$0xff]
        %v459 = vld [vmem:[%s387 + $0x98] sm:$0xff]
        %v460 = vld [vmem:[%s387 + $0xa0] sm:$0xff]
        %v461 = vld [vmem:[%s387 + $0xa8] sm:$0xff]
        %v462 = vld [vmem:[%s387 + $0xb0] sm:$0xff]
        %v463 = vld [vmem:[%s387 + $0xb8] sm:$0xff]
        %v464 = vld [vmem:[%s387 + $0xc0] sm:$0xff]
        %v465 = vld [vmem:[%s387 + $0xc8] sm:$0xff]
        %v466 = vld [vmem:[%s387 + $0xd0] sm:$0xff]
        %v467 = vld [vmem:[%s387 + $0xd8] sm:$0xff]
        %v468 = vld [vmem:[%s387 + $0xe0] sm:$0xff]
        %v469 = vld [vmem:[%s387 + $0xe8] sm:$0xff]
        %v470 = vld [vmem:[%s387 + $0xf0] sm:$0xff]
        %v471 = vld [vmem:[%s387 + $0xf8] sm:$0xff]
        %v472 = vld [vmem:[%s399] sm:$0xff]
        %v473 = vld [vmem:[%s399 + $0x8] sm:$0xff]
        %v474 = vld [vmem:[%s399 + $0x10] sm:$0xff]
        %v475 = vld [vmem:[%s399 + $0x18] sm:$0xff]
        %v476 = vld [vmem:[%s399 + $0x20] sm:$0xff]
        %v477 = vld [vmem:[%s399 + $0x28] sm:$0xff]
        %v478 = vld [vmem:[%s399 + $0x30] sm:$0xff]
        %v479 = vld [vmem:[%s399 + $0x38] sm:$0xff]
        %v480 = vld [vmem:[%s399 + $0x40] sm:$0xff]
        %v481 = vld [vmem:[%s399 + $0x48] sm:$0xff]
        %v482 = vld [vmem:[%s399 + $0x50] sm:$0xff]
        %v483 = vld [vmem:[%s399 + $0x58] sm:$0xff]
        %v484 = vld [vmem:[%s399 + $0x60] sm:$0xff]
        %v485 = vld [vmem:[%s399 + $0x68] sm:$0xff]
        %v486 = vld [vmem:[%s399 + $0x70] sm:$0xff]
        %v487 = vld [vmem:[%s399 + $0x78] sm:$0xff]
        %v488 = vld [vmem:[%s399 + $0x80] sm:$0xff]
        %v489 = vld [vmem:[%s399 + $0x88] sm:$0xff]
        %v490 = vld [vmem:[%s399 + $0x90] sm:$0xff]
        %v491 = vld [vmem:[%s399 + $0x98] sm:$0xff]
        %v492 = vld [vmem:[%s399 + $0xa0] sm:$0xff]
        %v493 = vld [vmem:[%s399 + $0xa8] sm:$0xff]
        %v494 = vld [vmem:[%s399 + $0xb0] sm:$0xff]
        %v495 = vld [vmem:[%s399 + $0xb8] sm:$0xff]
        %v496 = vld [vmem:[%s399 + $0xc0] sm:$0xff]
        %v497 = vld [vmem:[%s399 + $0xc8] sm:$0xff]
        %v498 = vld [vmem:[%s399 + $0xd0] sm:$0xff]
        %v499 = vld [vmem:[%s399 + $0xd8] sm:$0xff]
        %v500 = vld [vmem:[%s399 + $0xe0] sm:$0xff]
        %v501 = vld [vmem:[%s399 + $0xe8] sm:$0xff]
        %v502 = vld [vmem:[%s399 + $0xf0] sm:$0xff]
        %v503 = vld [vmem:[%s399 + $0xf8] sm:$0xff]
        %p504 = scmp.eq.s32.totalorder %s25, 0
        %s505 = scalar_select %p504, 1, 0
        %s506 = scvt.s32.f32 %s505
        %v507 = vld [vmem:[%s407] sm:$0xff]
        %v508 = vld [vmem:[%s407 + $0x8] sm:$0xff]
        %v509 = vld [vmem:[%s407 + $0x10] sm:$0xff]
        %v510 = vld [vmem:[%s407 + $0x18] sm:$0xff]
        %v511 = vld [vmem:[%s407 + $0x20] sm:$0xff]
        %v512 = vld [vmem:[%s407 + $0x28] sm:$0xff]
        %v513 = vld [vmem:[%s407 + $0x30] sm:$0xff]
        %v514 = vld [vmem:[%s407 + $0x38] sm:$0xff]
        %v515 = vld [vmem:[%s407 + $0x40] sm:$0xff]
        %v516 = vld [vmem:[%s407 + $0x48] sm:$0xff]
        %v517 = vld [vmem:[%s407 + $0x50] sm:$0xff]
        %v518 = vld [vmem:[%s407 + $0x58] sm:$0xff]
        %v519 = vld [vmem:[%s407 + $0x60] sm:$0xff]
        %v520 = vld [vmem:[%s407 + $0x68] sm:$0xff]
        %v521 = vld [vmem:[%s407 + $0x70] sm:$0xff]
        %v522 = vld [vmem:[%s407 + $0x78] sm:$0xff]
        %v523 = vld [vmem:[%s407 + $0x80] sm:$0xff]
        %v524 = vld [vmem:[%s407 + $0x88] sm:$0xff]
        %v525 = vld [vmem:[%s407 + $0x90] sm:$0xff]
        %v526 = vld [vmem:[%s407 + $0x98] sm:$0xff]
        %v527 = vld [vmem:[%s407 + $0xa0] sm:$0xff]
        %v528 = vld [vmem:[%s407 + $0xa8] sm:$0xff]
        %v529 = vld [vmem:[%s407 + $0xb0] sm:$0xff]
        %v530 = vld [vmem:[%s407 + $0xb8] sm:$0xff]
        %v531 = vld [vmem:[%s407 + $0xc0] sm:$0xff]
        %v532 = vld [vmem:[%s407 + $0xc8] sm:$0xff]
        %v533 = vld [vmem:[%s407 + $0xd0] sm:$0xff]
        %v534 = vld [vmem:[%s407 + $0xd8] sm:$0xff]
        %v535 = vld [vmem:[%s407 + $0xe0] sm:$0xff]
        %v536 = vld [vmem:[%s407 + $0xe8] sm:$0xff]
        %v537 = vld [vmem:[%s407 + $0xf0] sm:$0xff]
        %v538 = vld [vmem:[%s407 + $0xf8] sm:$0xff]
        %v539 = vstv %s506
        %v540 = vmul.f32 %v507, %v539
        %v541 = vmul.f32 %v508, %v539
        %v542 = vmul.f32 %v509, %v539
        %v543 = vmul.f32 %v510, %v539
        %v544 = vmul.f32 %v511, %v539
        %v545 = vmul.f32 %v512, %v539
        %v546 = vmul.f32 %v513, %v539
        %v547 = vmul.f32 %v514, %v539
        %v548 = vmul.f32 %v515, %v539
        %v549 = vmul.f32 %v516, %v539
        %v550 = vmul.f32 %v517, %v539
        %v551 = vmul.f32 %v518, %v539
        %v552 = vmul.f32 %v519, %v539
        %v553 = vmul.f32 %v520, %v539
        %v554 = vmul.f32 %v521, %v539
        %v555 = vmul.f32 %v522, %v539
        %v556 = vmul.f32 %v523, %v539
        %v557 = vmul.f32 %v524, %v539
        %v558 = vmul.f32 %v525, %v539
        %v559 = vmul.f32 %v526, %v539
        %v560 = vmul.f32 %v527, %v539
        %v561 = vmul.f32 %v528, %v539
        %v562 = vmul.f32 %v529, %v539
        %v563 = vmul.f32 %v530, %v539
        %v564 = vmul.f32 %v531, %v539
        %v565 = vmul.f32 %v532, %v539
        %v566 = vmul.f32 %v533, %v539
        %v567 = vmul.f32 %v534, %v539
        %v568 = vmul.f32 %v535, %v539
        %v569 = vmul.f32 %v536, %v539
        %v570 = vmul.f32 %v537, %v539
        %v571 = vmul.f32 %v538, %v539
        %s572 = ssub.f32 1.0, %s506
        %v573 = vstv %s572
        %v574 = vmul.f32 %v408, %v573
        %v575 = vmul.f32 %v409, %v573
        %v576 = vmul.f32 %v410, %v573
        %v577 = vmul.f32 %v411, %v573
        %v578 = vmul.f32 %v412, %v573
        %v579 = vmul.f32 %v413, %v573
        %v580 = vmul.f32 %v414, %v573
        %v581 = vmul.f32 %v415, %v573
        %v582 = vmul.f32 %v416, %v573
        %v583 = vmul.f32 %v417, %v573
        %v584 = vmul.f32 %v418, %v573
        %v585 = vmul.f32 %v419, %v573
        %v586 = vmul.f32 %v420, %v573
        %v587 = vmul.f32 %v421, %v573
        %v588 = vmul.f32 %v422, %v573
        %v589 = vmul.f32 %v423, %v573
        %v590 = vmul.f32 %v424, %v573
        %v591 = vmul.f32 %v425, %v573
        %v592 = vmul.f32 %v426, %v573
        %v593 = vmul.f32 %v427, %v573
        %v594 = vmul.f32 %v428, %v573
        %v595 = vmul.f32 %v429, %v573
        %v596 = vmul.f32 %v430, %v573
        %v597 = vmul.f32 %v431, %v573
        %v598 = vmul.f32 %v432, %v573
        %v599 = vmul.f32 %v433, %v573
        %v600 = vmul.f32 %v434, %v573
        %v601 = vmul.f32 %v435, %v573
        %v602 = vmul.f32 %v436, %v573
        %v603 = vmul.f32 %v437, %v573
        %v604 = vmul.f32 %v438, %v573
        %v605 = vmul.f32 %v439, %v573
        %v606 = vadd.f32 %v540, %v574
        %v607 = vadd.f32 %v541, %v575
        %v608 = vadd.f32 %v542, %v576
        %v609 = vadd.f32 %v543, %v577
        %v610 = vadd.f32 %v544, %v578
        %v611 = vadd.f32 %v545, %v579
        %v612 = vadd.f32 %v546, %v580
        %v613 = vadd.f32 %v547, %v581
        %v614 = vadd.f32 %v548, %v582
        %v615 = vadd.f32 %v549, %v583
        %v616 = vadd.f32 %v550, %v584
        %v617 = vadd.f32 %v551, %v585
        %v618 = vadd.f32 %v552, %v586
        %v619 = vadd.f32 %v553, %v587
        %v620 = vadd.f32 %v554, %v588
        %v621 = vadd.f32 %v555, %v589
        %v622 = vadd.f32 %v556, %v590
        %v623 = vadd.f32 %v557, %v591
        %v624 = vadd.f32 %v558, %v592
        %v625 = vadd.f32 %v559, %v593
        %v626 = vadd.f32 %v560, %v594
        %v627 = vadd.f32 %v561, %v595
        %v628 = vadd.f32 %v562, %v596
        %v629 = vadd.f32 %v563, %v597
        %v630 = vadd.f32 %v564, %v598
        %v631 = vadd.f32 %v565, %v599
        %v632 = vadd.f32 %v566, %v600
        %v633 = vadd.f32 %v567, %v601
        %v634 = vadd.f32 %v568, %v602
        %v635 = vadd.f32 %v569, %v603
        %v636 = vadd.f32 %v570, %v604
        %v637 = vadd.f32 %v571, %v605
        %s638 = sadd.s32 %s25, 1
        %p639 = scmp.lt.s32.totalorder %s638, 0
        %s640 = ssub.s32 0, %s638
        %s641 = scalar_select %p639, %s640, %s638
        %s642 = sand.u32 %s641, 1
        %s643 = ssub.s32 0, %s642
        %s644 = scalar_select %p639, %s643, %s642
        %p645 = scmp.ne.s32.totalorder %s644, 0
        %p646 = scmp.lt.s32.totalorder %s644, 0
        %p647 = pnand %p646, %p645
        %p648 = pneg %p647
        %s649 = sadd.s32 %s644, 2
        %s650 = scalar_select %p648, %s649, %s644
        %p651 = scmp.ne.s32.totalorder %s650, 0
        %s652 = scalar_select %p651, 1, 0
        %s653 = scvt.s32.f32 %s652
        %v654 = vstv %s653
        %v655 = vmul.f32 %v472, %v654
        %v656 = vmul.f32 %v473, %v654
        %v657 = vmul.f32 %v474, %v654
        %v658 = vmul.f32 %v475, %v654
        %v659 = vmul.f32 %v476, %v654
        %v660 = vmul.f32 %v477, %v654
        %v661 = vmul.f32 %v478, %v654
        %v662 = vmul.f32 %v479, %v654
        %v663 = vmul.f32 %v480, %v654
        %v664 = vmul.f32 %v481, %v654
        %v665 = vmul.f32 %v482, %v654
        %v666 = vmul.f32 %v483, %v654
        %v667 = vmul.f32 %v484, %v654
        %v668 = vmul.f32 %v485, %v654
        %v669 = vmul.f32 %v486, %v654
        %v670 = vmul.f32 %v487, %v654
        %v671 = vmul.f32 %v488, %v654
        %v672 = vmul.f32 %v489, %v654
        %v673 = vmul.f32 %v490, %v654
        %v674 = vmul.f32 %v491, %v654
        %v675 = vmul.f32 %v492, %v654
        %v676 = vmul.f32 %v493, %v654
        %v677 = vmul.f32 %v494, %v654
        %v678 = vmul.f32 %v495, %v654
        %v679 = vmul.f32 %v496, %v654
        %v680 = vmul.f32 %v497, %v654
        %v681 = vmul.f32 %v498, %v654
        %v682 = vmul.f32 %v499, %v654
        %v683 = vmul.f32 %v500, %v654
        %v684 = vmul.f32 %v501, %v654
        %v685 = vmul.f32 %v502, %v654
        %v686 = vmul.f32 %v503, %v654
        %vm687 = vcmask 31744
        %688 = vst.msk [vmem:[#allocation2] sm:$0xff] %vm687, 0.0
        %689 = vst.msk [vmem:[#allocation2 + $0x8] sm:$0xff] %vm687, 0.0
        %vm690 = vcmask 25600
        %691 = vst.msk [vmem:[#allocation2 + $0x10] sm:$0x3] %vm690, 0.0
        %692 = vst.msk [vmem:[#allocation2 + $0x18] sm:$0xff] %vm687, 0.0
        %693 = vst.msk [vmem:[#allocation2 + $0x20] sm:$0xff] %vm687, 0.0
        %694 = vst.msk [vmem:[#allocation2 + $0x28] sm:$0x3] %vm690, 0.0
        %695 = vst.msk [vmem:[#allocation2 + $0x30] sm:$0xff] %vm687, 0.0
        %696 = vst.msk [vmem:[#allocation2 + $0x38] sm:$0xff] %vm687, 0.0
        %697 = vst.msk [vmem:[#allocation2 + $0x40] sm:$0x3] %vm690, 0.0
        %698 = vst.msk [vmem:[#allocation2 + $0x48] sm:$0xff] %vm687, 0.0
        %699 = vst.msk [vmem:[#allocation2 + $0x50] sm:$0xff] %vm687, 0.0
        %700 = vst.msk [vmem:[#allocation2 + $0x58] sm:$0x3] %vm690, 0.0
        %701 = vst.msk [vmem:[#allocation2 + $0x60] sm:$0xff] %vm687, 0.0
        %702 = vst.msk [vmem:[#allocation2 + $0x68] sm:$0xff] %vm687, 0.0
        %703 = vst.msk [vmem:[#allocation2 + $0x70] sm:$0x3] %vm690, 0.0
        %704 = vst.msk [vmem:[#allocation2 + $0x78] sm:$0xff] %vm687, 0.0
        %705 = vst.msk [vmem:[#allocation2 + $0x80] sm:$0xff] %vm687, 0.0
        %706 = vst.msk [vmem:[#allocation2 + $0x88] sm:$0x3] %vm690, 0.0
        %707 = vst.msk [vmem:[#allocation2 + $0x90] sm:$0xff] %vm687, 0.0
        %708 = vst.msk [vmem:[#allocation2 + $0x98] sm:$0xff] %vm687, 0.0
        %709 = vst.msk [vmem:[#allocation2 + $0xa0] sm:$0x3] %vm690, 0.0
        %710 = vst.msk [vmem:[#allocation2 + $0xa8] sm:$0xff] %vm687, 0.0
        %711 = vst.msk [vmem:[#allocation2 + $0xb0] sm:$0xff] %vm687, 0.0
        %712 = vst.msk [vmem:[#allocation2 + $0xb8] sm:$0x3] %vm690, 0.0
        %713 = vst.msk [vmem:[#allocation2 + $0xc0] sm:$0xff] %vm687, 0.0
        %714 = vst.msk [vmem:[#allocation2 + $0xc8] sm:$0xff] %vm687, 0.0
        %715 = vst.msk [vmem:[#allocation2 + $0xd0] sm:$0x3] %vm690, 0.0
        %716 = vst.msk [vmem:[#allocation2 + $0xd8] sm:$0xff] %vm687, 0.0
        %717 = vst.msk [vmem:[#allocation2 + $0xe0] sm:$0xff] %vm687, 0.0
        %718 = vst.msk [vmem:[#allocation2 + $0xe8] sm:$0x3] %vm690, 0.0
        %719 = vst.msk [vmem:[#allocation2 + $0xf0] sm:$0xff] %vm687, 0.0
        %720 = vst.msk [vmem:[#allocation2 + $0xf8] sm:$0xff] %vm687, 0.0
        %721 = vst.msk [vmem:[#allocation2 + $0x100] sm:$0x3] %vm690, 0.0
        %722 = vst.msk [vmem:[#allocation2 + $0x108] sm:$0xff] %vm687, 0.0
        %723 = vst.msk [vmem:[#allocation2 + $0x110] sm:$0xff] %vm687, 0.0
        %724 = vst.msk [vmem:[#allocation2 + $0x118] sm:$0x3] %vm690, 0.0
        %725 = vst.msk [vmem:[#allocation2 + $0x120] sm:$0xff] %vm687, 0.0
        %726 = vst.msk [vmem:[#allocation2 + $0x128] sm:$0xff] %vm687, 0.0
        %727 = vst.msk [vmem:[#allocation2 + $0x130] sm:$0x3] %vm690, 0.0
        %728 = vst.msk [vmem:[#allocation2 + $0x138] sm:$0xff] %vm687, 0.0
        %729 = vst.msk [vmem:[#allocation2 + $0x140] sm:$0xff] %vm687, 0.0
        %730 = vst.msk [vmem:[#allocation2 + $0x148] sm:$0x3] %vm690, 0.0
        %731 = vst.msk [vmem:[#allocation2 + $0x150] sm:$0xff] %vm687, 0.0
        %732 = vst.msk [vmem:[#allocation2 + $0x158] sm:$0xff] %vm687, 0.0
        %733 = vst.msk [vmem:[#allocation2 + $0x160] sm:$0x3] %vm690, 0.0
        %734 = vst.msk [vmem:[#allocation2 + $0x168] sm:$0xff] %vm687, 0.0
        %735 = vst.msk [vmem:[#allocation2 + $0x170] sm:$0xff] %vm687, 0.0
        %736 = vst.msk [vmem:[#allocation2 + $0x178] sm:$0x3] %vm690, 0.0
        %737 = vst.msk [vmem:[#allocation2 + $0x180] sm:$0xff] %vm687, 0.0
        %738 = vst.msk [vmem:[#allocation2 + $0x188] sm:$0xff] %vm687, 0.0
        %739 = vst.msk [vmem:[#allocation2 + $0x190] sm:$0x3] %vm690, 0.0
        %740 = vst.msk [vmem:[#allocation2 + $0x198] sm:$0xff] %vm687, 0.0
        %741 = vst.msk [vmem:[#allocation2 + $0x1a0] sm:$0xff] %vm687, 0.0
        %742 = vst.msk [vmem:[#allocation2 + $0x1a8] sm:$0x3] %vm690, 0.0
        %743 = vst.msk [vmem:[#allocation2 + $0x1b0] sm:$0xff] %vm687, 0.0
        %744 = vst.msk [vmem:[#allocation2 + $0x1b8] sm:$0xff] %vm687, 0.0
        %745 = vst.msk [vmem:[#allocation2 + $0x1c0] sm:$0x3] %vm690, 0.0
        %746 = vst.msk [vmem:[#allocation2 + $0x1c8] sm:$0xff] %vm687, 0.0
        %747 = vst.msk [vmem:[#allocation2 + $0x1d0] sm:$0xff] %vm687, 0.0
        %748 = vst.msk [vmem:[#allocation2 + $0x1d8] sm:$0x3] %vm690, 0.0
        %749 = vst.msk [vmem:[#allocation2 + $0x1e0] sm:$0xff] %vm687, 0.0
        %750 = vst.msk [vmem:[#allocation2 + $0x1e8] sm:$0xff] %vm687, 0.0
        %751 = vst.msk [vmem:[#allocation2 + $0x1f0] sm:$0x3] %vm690, 0.0
        %752 = vst.msk [vmem:[#allocation2 + $0x1f8] sm:$0xff] %vm687, 0.0
        %753 = vst.msk [vmem:[#allocation2 + $0x200] sm:$0xff] %vm687, 0.0
        %754 = vst.msk [vmem:[#allocation2 + $0x208] sm:$0x3] %vm690, 0.0
        %755 = vst.msk [vmem:[#allocation2 + $0x210] sm:$0xff] %vm687, 0.0
        %756 = vst.msk [vmem:[#allocation2 + $0x218] sm:$0xff] %vm687, 0.0
        %757 = vst.msk [vmem:[#allocation2 + $0x220] sm:$0x3] %vm690, 0.0
        %758 = vst.msk [vmem:[#allocation2 + $0x228] sm:$0xff] %vm687, 0.0
        %759 = vst.msk [vmem:[#allocation2 + $0x230] sm:$0xff] %vm687, 0.0
        %760 = vst.msk [vmem:[#allocation2 + $0x238] sm:$0x3] %vm690, 0.0
        %761 = vst.msk [vmem:[#allocation2 + $0x240] sm:$0xff] %vm687, 0.0
        %762 = vst.msk [vmem:[#allocation2 + $0x248] sm:$0xff] %vm687, 0.0
        %763 = vst.msk [vmem:[#allocation2 + $0x250] sm:$0x3] %vm690, 0.0
        %764 = vst.msk [vmem:[#allocation2 + $0x258] sm:$0xff] %vm687, 0.0
        %765 = vst.msk [vmem:[#allocation2 + $0x260] sm:$0xff] %vm687, 0.0
        %766 = vst.msk [vmem:[#allocation2 + $0x268] sm:$0x3] %vm690, 0.0
        %767 = vst.msk [vmem:[#allocation2 + $0x270] sm:$0xff] %vm687, 0.0
        %768 = vst.msk [vmem:[#allocation2 + $0x278] sm:$0xff] %vm687, 0.0
        %769 = vst.msk [vmem:[#allocation2 + $0x280] sm:$0x3] %vm690, 0.0
        %770 = vst.msk [vmem:[#allocation2 + $0x288] sm:$0xff] %vm687, 0.0
        %771 = vst.msk [vmem:[#allocation2 + $0x290] sm:$0xff] %vm687, 0.0
        %772 = vst.msk [vmem:[#allocation2 + $0x298] sm:$0x3] %vm690, 0.0
        %773 = vst.msk [vmem:[#allocation2 + $0x2a0] sm:$0xff] %vm687, 0.0
        %774 = vst.msk [vmem:[#allocation2 + $0x2a8] sm:$0xff] %vm687, 0.0
        %775 = vst.msk [vmem:[#allocation2 + $0x2b0] sm:$0x3] %vm690, 0.0
        %776 = vst.msk [vmem:[#allocation2 + $0x2b8] sm:$0xff] %vm687, 0.0
        %777 = vst.msk [vmem:[#allocation2 + $0x2c0] sm:$0xff] %vm687, 0.0
        %778 = vst.msk [vmem:[#allocation2 + $0x2c8] sm:$0x3] %vm690, 0.0
        %779 = vst.msk [vmem:[#allocation2 + $0x2d0] sm:$0xff] %vm687, 0.0
        %780 = vst.msk [vmem:[#allocation2 + $0x2d8] sm:$0xff] %vm687, 0.0
        %781 = vst.msk [vmem:[#allocation2 + $0x2e0] sm:$0x3] %vm690, 0.0
        %782 = vst.msk [vmem:[#allocation2 + $0x2e8] sm:$0xff] %vm687, 0.0
        %783 = vst.msk [vmem:[#allocation2 + $0x2f0] sm:$0xff] %vm687, 0.0
        %784 = vst.msk [vmem:[#allocation2 + $0x2f8] sm:$0x3] %vm690, 0.0
        %785 = vst.msk [vmem:[#allocation2 + $0x300] sm:$0xff] %vm687, 0.0
        %786 = vst.msk [vmem:[#allocation2 + $0x308] sm:$0xff] %vm687, 0.0
        %787 = vst.msk [vmem:[#allocation2 + $0x310] sm:$0x3] %vm690, 0.0
        %788 = vst.msk [vmem:[#allocation2 + $0x318] sm:$0xff] %vm687, 0.0
        %789 = vst.msk [vmem:[#allocation2 + $0x320] sm:$0xff] %vm687, 0.0
        %790 = vst.msk [vmem:[#allocation2 + $0x328] sm:$0x3] %vm690, 0.0
        %791 = vst.msk [vmem:[#allocation2 + $0x330] sm:$0xff] %vm687, 0.0
        %792 = vst.msk [vmem:[#allocation2 + $0x338] sm:$0xff] %vm687, 0.0
        %793 = vst.msk [vmem:[#allocation2 + $0x340] sm:$0x3] %vm690, 0.0
        %794 = vst.msk [vmem:[#allocation2 + $0x348] sm:$0xff] %vm687, 0.0
        %795 = vst.msk [vmem:[#allocation2 + $0x350] sm:$0xff] %vm687, 0.0
        %796 = vst.msk [vmem:[#allocation2 + $0x358] sm:$0x3] %vm690, 0.0
        %797 = vst.msk [vmem:[#allocation2 + $0x360] sm:$0xff] %vm687, 0.0
        %798 = vst.msk [vmem:[#allocation2 + $0x368] sm:$0xff] %vm687, 0.0
        %799 = vst.msk [vmem:[#allocation2 + $0x370] sm:$0x3] %vm690, 0.0
        %800 = vst.msk [vmem:[#allocation2 + $0x378] sm:$0xff] %vm687, 0.0
        %801 = vst.msk [vmem:[#allocation2 + $0x380] sm:$0xff] %vm687, 0.0
        %802 = vst.msk [vmem:[#allocation2 + $0x388] sm:$0x3] %vm690, 0.0
        %803 = vst.msk [vmem:[#allocation2 + $0x390] sm:$0xff] %vm687, 0.0
        %804 = vst.msk [vmem:[#allocation2 + $0x398] sm:$0xff] %vm687, 0.0
        %805 = vst.msk [vmem:[#allocation2 + $0x3a0] sm:$0x3] %vm690, 0.0
        %806 = vst.msk [vmem:[#allocation2 + $0x3a8] sm:$0xff] %vm687, 0.0
        %807 = vst.msk [vmem:[#allocation2 + $0x3b0] sm:$0xff] %vm687, 0.0
        %808 = vst.msk [vmem:[#allocation2 + $0x3b8] sm:$0x3] %vm690, 0.0
        %809 = vst.msk [vmem:[#allocation2 + $0x3c0] sm:$0xff] %vm687, 0.0
        %810 = vst.msk [vmem:[#allocation2 + $0x3c8] sm:$0xff] %vm687, 0.0
        %811 = vst.msk [vmem:[#allocation2 + $0x3d0] sm:$0x3] %vm690, 0.0
        %812 = vst.msk [vmem:[#allocation2 + $0x3d8] sm:$0xff] %vm687, 0.0
        %813 = vst.msk [vmem:[#allocation2 + $0x3e0] sm:$0xff] %vm687, 0.0
        %814 = vst.msk [vmem:[#allocation2 + $0x3e8] sm:$0x3] %vm690, 0.0
        %815 = vst.msk [vmem:[#allocation2 + $0x3f0] sm:$0xff] %vm687, 0.0
        %816 = vst.msk [vmem:[#allocation2 + $0x3f8] sm:$0xff] %vm687, 0.0
        %817 = vst.msk [vmem:[#allocation2 + $0x400] sm:$0x3] %vm690, 0.0
        %818 = vst.msk [vmem:[#allocation2 + $0x408] sm:$0xff] %vm687, 0.0
        %819 = vst.msk [vmem:[#allocation2 + $0x410] sm:$0xff] %vm687, 0.0
        %820 = vst.msk [vmem:[#allocation2 + $0x418] sm:$0x3] %vm690, 0.0
        %821 = vst.msk [vmem:[#allocation2 + $0x420] sm:$0xff] %vm687, 0.0
        %822 = vst.msk [vmem:[#allocation2 + $0x428] sm:$0xff] %vm687, 0.0
        %823 = vst.msk [vmem:[#allocation2 + $0x430] sm:$0x3] %vm690, 0.0
        %824 = vst.msk [vmem:[#allocation2 + $0x438] sm:$0xff] %vm687, 0.0
        %825 = vst.msk [vmem:[#allocation2 + $0x440] sm:$0xff] %vm687, 0.0
        %826 = vst.msk [vmem:[#allocation2 + $0x448] sm:$0x3] %vm690, 0.0
        %827 = vst.msk [vmem:[#allocation2 + $0x450] sm:$0xff] %vm687, 0.0
        %828 = vst.msk [vmem:[#allocation2 + $0x458] sm:$0xff] %vm687, 0.0
        %829 = vst.msk [vmem:[#allocation2 + $0x460] sm:$0x3] %vm690, 0.0
        %830 = vst.msk [vmem:[#allocation2 + $0x468] sm:$0xff] %vm687, 0.0
        %831 = vst.msk [vmem:[#allocation2 + $0x470] sm:$0xff] %vm687, 0.0
        %832 = vst.msk [vmem:[#allocation2 + $0x478] sm:$0x3] %vm690, 0.0
        %833 = vst.msk [vmem:[#allocation2 + $0x480] sm:$0xff] %vm687, 0.0
        %834 = vst.msk [vmem:[#allocation2 + $0x488] sm:$0xff] %vm687, 0.0
        %835 = vst.msk [vmem:[#allocation2 + $0x490] sm:$0x3] %vm690, 0.0
        %836 = vst.msk [vmem:[#allocation2 + $0x498] sm:$0xff] %vm687, 0.0
        %837 = vst.msk [vmem:[#allocation2 + $0x4a0] sm:$0xff] %vm687, 0.0
        %838 = vst.msk [vmem:[#allocation2 + $0x4a8] sm:$0x3] %vm690, 0.0
        %839 = vst.msk [vmem:[#allocation2 + $0x4b0] sm:$0xff] %vm687, 0.0
        %840 = vst.msk [vmem:[#allocation2 + $0x4b8] sm:$0xff] %vm687, 0.0
        %841 = vst.msk [vmem:[#allocation2 + $0x4c0] sm:$0x3] %vm690, 0.0
        %842 = vst.msk [vmem:[#allocation2 + $0x4c8] sm:$0xff] %vm687, 0.0
        %843 = vst.msk [vmem:[#allocation2 + $0x4d0] sm:$0xff] %vm687, 0.0
        %844 = vst.msk [vmem:[#allocation2 + $0x4d8] sm:$0x3] %vm690, 0.0
        %845 = vst.msk [vmem:[#allocation2 + $0x4e0] sm:$0xff] %vm687, 0.0
        %846 = vst.msk [vmem:[#allocation2 + $0x4e8] sm:$0xff] %vm687, 0.0
        %847 = vst.msk [vmem:[#allocation2 + $0x4f0] sm:$0x3] %vm690, 0.0
        %848 = vst.msk [vmem:[#allocation2 + $0x4f8] sm:$0xff] %vm687, 0.0
        %849 = vst.msk [vmem:[#allocation2 + $0x500] sm:$0xff] %vm687, 0.0
        %850 = vst.msk [vmem:[#allocation2 + $0x508] sm:$0x3] %vm690, 0.0
        %s851 = scalar_lea.vmem [#allocation2], 24
        %852 = vst.msk [vmem:[%s851 + $0x1] sm:$0xff] %vm687, %v606
        %853 = vst.msk [vmem:[%s851 + $0x9] sm:$0xff] %vm687, %v607
        %854 = vst.msk [vmem:[%s851 + $0x19] sm:$0xff] %vm687, %v608
        %855 = vst.msk [vmem:[%s851 + $0x21] sm:$0xff] %vm687, %v609
        %856 = vst.msk [vmem:[%s851 + $0x31] sm:$0xff] %vm687, %v610
        %857 = vst.msk [vmem:[%s851 + $0x39] sm:$0xff] %vm687, %v611
        %858 = vst.msk [vmem:[%s851 + $0x49] sm:$0xff] %vm687, %v612
        %859 = vst.msk [vmem:[%s851 + $0x51] sm:$0xff] %vm687, %v613
        %860 = vst.msk [vmem:[%s851 + $0x61] sm:$0xff] %vm687, %v614
        %861 = vst.msk [vmem:[%s851 + $0x69] sm:$0xff] %vm687, %v615
        %862 = vst.msk [vmem:[%s851 + $0x79] sm:$0xff] %vm687, %v616
        %863 = vst.msk [vmem:[%s851 + $0x81] sm:$0xff] %vm687, %v617
        %864 = vst.msk [vmem:[%s851 + $0x91] sm:$0xff] %vm687, %v618
        %865 = vst.msk [vmem:[%s851 + $0x99] sm:$0xff] %vm687, %v619
        %866 = vst.msk [vmem:[%s851 + $0xa9] sm:$0xff] %vm687, %v620
        %867 = vst.msk [vmem:[%s851 + $0xb1] sm:$0xff] %vm687, %v621
        %868 = vst.msk [vmem:[%s851 + $0xc1] sm:$0xff] %vm687, %v622
        %869 = vst.msk [vmem:[%s851 + $0xc9] sm:$0xff] %vm687, %v623
        %870 = vst.msk [vmem:[%s851 + $0xd9] sm:$0xff] %vm687, %v624
        %871 = vst.msk [vmem:[%s851 + $0xe1] sm:$0xff] %vm687, %v625
        %872 = vst.msk [vmem:[%s851 + $0xf1] sm:$0xff] %vm687, %v626
        %873 = vst.msk [vmem:[%s851 + $0xf9] sm:$0xff] %vm687, %v627
        %874 = vst.msk [vmem:[%s851 + $0x109] sm:$0xff] %vm687, %v628
        %875 = vst.msk [vmem:[%s851 + $0x111] sm:$0xff] %vm687, %v629
        %876 = vst.msk [vmem:[%s851 + $0x121] sm:$0xff] %vm687, %v630
        %877 = vst.msk [vmem:[%s851 + $0x129] sm:$0xff] %vm687, %v631
        %878 = vst.msk [vmem:[%s851 + $0x139] sm:$0xff] %vm687, %v632
        %879 = vst.msk [vmem:[%s851 + $0x141] sm:$0xff] %vm687, %v633
        %880 = vst.msk [vmem:[%s851 + $0x151] sm:$0xff] %vm687, %v634
        %881 = vst.msk [vmem:[%s851 + $0x159] sm:$0xff] %vm687, %v635
        %882 = vst.msk [vmem:[%s851 + $0x169] sm:$0xff] %vm687, %v636
        %883 = vst.msk [vmem:[%s851 + $0x171] sm:$0xff] %vm687, %v637
        %s884 = scalar_lea.vmem [#allocation2], 456
        %885 = vst.msk [vmem:[%s884 + $0x1] sm:$0xff] %vm687, %v440
        %886 = vst.msk [vmem:[%s884 + $0x9] sm:$0xff] %vm687, %v441
        %887 = vst.msk [vmem:[%s884 + $0x19] sm:$0xff] %vm687, %v442
        %888 = vst.msk [vmem:[%s884 + $0x21] sm:$0xff] %vm687, %v443
        %889 = vst.msk [vmem:[%s884 + $0x31] sm:$0xff] %vm687, %v444
        %890 = vst.msk [vmem:[%s884 + $0x39] sm:$0xff] %vm687, %v445
        %891 = vst.msk [vmem:[%s884 + $0x49] sm:$0xff] %vm687, %v446
        %892 = vst.msk [vmem:[%s884 + $0x51] sm:$0xff] %vm687, %v447
        %893 = vst.msk [vmem:[%s884 + $0x61] sm:$0xff] %vm687, %v448
        %894 = vst.msk [vmem:[%s884 + $0x69] sm:$0xff] %vm687, %v449
        %895 = vst.msk [vmem:[%s884 + $0x79] sm:$0xff] %vm687, %v450
        %896 = vst.msk [vmem:[%s884 + $0x81] sm:$0xff] %vm687, %v451
        %897 = vst.msk [vmem:[%s884 + $0x91] sm:$0xff] %vm687, %v452
        %898 = vst.msk [vmem:[%s884 + $0x99] sm:$0xff] %vm687, %v453
        %899 = vst.msk [vmem:[%s884 + $0xa9] sm:$0xff] %vm687, %v454
        %900 = vst.msk [vmem:[%s884 + $0xb1] sm:$0xff] %vm687, %v455
        %901 = vst.msk [vmem:[%s884 + $0xc1] sm:$0xff] %vm687, %v456
        %902 = vst.msk [vmem:[%s884 + $0xc9] sm:$0xff] %vm687, %v457
        %903 = vst.msk [vmem:[%s884 + $0xd9] sm:$0xff] %vm687, %v458
        %904 = vst.msk [vmem:[%s884 + $0xe1] sm:$0xff] %vm687, %v459
        %905 = vst.msk [vmem:[%s884 + $0xf1] sm:$0xff] %vm687, %v460
        %906 = vst.msk [vmem:[%s884 + $0xf9] sm:$0xff] %vm687, %v461
        %907 = vst.msk [vmem:[%s884 + $0x109] sm:$0xff] %vm687, %v462
        %908 = vst.msk [vmem:[%s884 + $0x111] sm:$0xff] %vm687, %v463
        %909 = vst.msk [vmem:[%s884 + $0x121] sm:$0xff] %vm687, %v464
        %910 = vst.msk [vmem:[%s884 + $0x129] sm:$0xff] %vm687, %v465
        %911 = vst.msk [vmem:[%s884 + $0x139] sm:$0xff] %vm687, %v466
        %912 = vst.msk [vmem:[%s884 + $0x141] sm:$0xff] %vm687, %v467
        %913 = vst.msk [vmem:[%s884 + $0x151] sm:$0xff] %vm687, %v468
        %914 = vst.msk [vmem:[%s884 + $0x159] sm:$0xff] %vm687, %v469
        %915 = vst.msk [vmem:[%s884 + $0x169] sm:$0xff] %vm687, %v470
        %916 = vst.msk [vmem:[%s884 + $0x171] sm:$0xff] %vm687, %v471
        %s917 = scalar_lea.vmem [#allocation2], 888
        %918 = vst.msk [vmem:[%s917 + $0x1] sm:$0xff] %vm687, %v655
        %919 = vst.msk [vmem:[%s917 + $0x9] sm:$0xff] %vm687, %v656
        %920 = vst.msk [vmem:[%s917 + $0x19] sm:$0xff] %vm687, %v657
        %921 = vst.msk [vmem:[%s917 + $0x21] sm:$0xff] %vm687, %v658
        %922 = vst.msk [vmem:[%s917 + $0x31] sm:$0xff] %vm687, %v659
        %923 = vst.msk [vmem:[%s917 + $0x39] sm:$0xff] %vm687, %v660
        %924 = vst.msk [vmem:[%s917 + $0x49] sm:$0xff] %vm687, %v661
        %925 = vst.msk [vmem:[%s917 + $0x51] sm:$0xff] %vm687, %v662
        %926 = vst.msk [vmem:[%s917 + $0x61] sm:$0xff] %vm687, %v663
        %927 = vst.msk [vmem:[%s917 + $0x69] sm:$0xff] %vm687, %v664
        %928 = vst.msk [vmem:[%s917 + $0x79] sm:$0xff] %vm687, %v665
        %929 = vst.msk [vmem:[%s917 + $0x81] sm:$0xff] %vm687, %v666
        %930 = vst.msk [vmem:[%s917 + $0x91] sm:$0xff] %vm687, %v667
        %931 = vst.msk [vmem:[%s917 + $0x99] sm:$0xff] %vm687, %v668
        %932 = vst.msk [vmem:[%s917 + $0xa9] sm:$0xff] %vm687, %v669
        %933 = vst.msk [vmem:[%s917 + $0xb1] sm:$0xff] %vm687, %v670
        %934 = vst.msk [vmem:[%s917 + $0xc1] sm:$0xff] %vm687, %v671
        %935 = vst.msk [vmem:[%s917 + $0xc9] sm:$0xff] %vm687, %v672
        %936 = vst.msk [vmem:[%s917 + $0xd9] sm:$0xff] %vm687, %v673
        %937 = vst.msk [vmem:[%s917 + $0xe1] sm:$0xff] %vm687, %v674
        %938 = vst.msk [vmem:[%s917 + $0xf1] sm:$0xff] %vm687, %v675
        %939 = vst.msk [vmem:[%s917 + $0xf9] sm:$0xff] %vm687, %v676
        %940 = vst.msk [vmem:[%s917 + $0x109] sm:$0xff] %vm687, %v677
        %941 = vst.msk [vmem:[%s917 + $0x111] sm:$0xff] %vm687, %v678
        %942 = vst.msk [vmem:[%s917 + $0x121] sm:$0xff] %vm687, %v679
        %943 = vst.msk [vmem:[%s917 + $0x129] sm:$0xff] %vm687, %v680
        %944 = vst.msk [vmem:[%s917 + $0x139] sm:$0xff] %vm687, %v681
        %945 = vst.msk [vmem:[%s917 + $0x141] sm:$0xff] %vm687, %v682
        %946 = vst.msk [vmem:[%s917 + $0x151] sm:$0xff] %vm687, %v683
        %947 = vst.msk [vmem:[%s917 + $0x159] sm:$0xff] %vm687, %v684
        %948 = vst.msk [vmem:[%s917 + $0x169] sm:$0xff] %vm687, %v685
        %949 = vst.msk [vmem:[%s917 + $0x171] sm:$0xff] %vm687, %v686
        %v950 = vld [vmem:[#allocation2] sm:$0xff]
        %v951 = vld [vmem:[#allocation2 + $0x8] sm:$0xff]
        %v952 = vld [vmem:[#allocation2 + $0x10] sm:$0x3]
        %v953 = vld [vmem:[#allocation2 + $0x18] sm:$0xff]
        %v954 = vld [vmem:[#allocation2 + $0x20] sm:$0xff]
        %v955 = vld [vmem:[#allocation2 + $0x28] sm:$0x3]
        %v956 = vld [vmem:[#allocation2 + $0x30] sm:$0xff]
        %v957 = vld [vmem:[#allocation2 + $0x38] sm:$0xff]
        %v958 = vld [vmem:[#allocation2 + $0x40] sm:$0x3]
        %v959 = vld [vmem:[#allocation2 + $0x48] sm:$0xff]
        %v960 = vld [vmem:[#allocation2 + $0x50] sm:$0xff]
        %v961 = vld [vmem:[#allocation2 + $0x58] sm:$0x3]
        %v962 = vld [vmem:[#allocation2 + $0x60] sm:$0xff]
        %v963 = vld [vmem:[#allocation2 + $0x68] sm:$0xff]
        %v964 = vld [vmem:[#allocation2 + $0x70] sm:$0x3]
        %v965 = vld [vmem:[#allocation2 + $0x78] sm:$0xff]
        %v966 = vld [vmem:[#allocation2 + $0x80] sm:$0xff]
        %v967 = vld [vmem:[#allocation2 + $0x88] sm:$0x3]
        %v968 = vld [vmem:[#allocation2 + $0x90] sm:$0xff]
        %v969 = vld [vmem:[#allocation2 + $0x98] sm:$0xff]
        %v970 = vld [vmem:[#allocation2 + $0xa0] sm:$0x3]
        %v971 = vld [vmem:[#allocation2 + $0xa8] sm:$0xff]
        %v972 = vld [vmem:[#allocation2 + $0xb0] sm:$0xff]
        %v973 = vld [vmem:[#allocation2 + $0xb8] sm:$0x3]
        %v974 = vld [vmem:[#allocation2 + $0xc0] sm:$0xff]
        %v975 = vld [vmem:[#allocation2 + $0xc8] sm:$0xff]
        %v976 = vld [vmem:[#allocation2 + $0xd0] sm:$0x3]
        %v977 = vld [vmem:[#allocation2 + $0xd8] sm:$0xff]
        %v978 = vld [vmem:[#allocation2 + $0xe0] sm:$0xff]
        %v979 = vld [vmem:[#allocation2 + $0xe8] sm:$0x3]
        %v980 = vld [vmem:[#allocation2 + $0xf0] sm:$0xff]
        %v981 = vld [vmem:[#allocation2 + $0xf8] sm:$0xff]
        %v982 = vld [vmem:[#allocation2 + $0x100] sm:$0x3]
        %v983 = vld [vmem:[#allocation2 + $0x108] sm:$0xff]
        %v984 = vld [vmem:[#allocation2 + $0x110] sm:$0xff]
        %v985 = vld [vmem:[#allocation2 + $0x118] sm:$0x3]
        %v986 = vld [vmem:[#allocation2 + $0x120] sm:$0xff]
        %v987 = vld [vmem:[#allocation2 + $0x128] sm:$0xff]
        %v988 = vld [vmem:[#allocation2 + $0x130] sm:$0x3]
        %v989 = vld [vmem:[#allocation2 + $0x138] sm:$0xff]
        %v990 = vld [vmem:[#allocation2 + $0x140] sm:$0xff]
        %v991 = vld [vmem:[#allocation2 + $0x148] sm:$0x3]
        %v992 = vld [vmem:[#allocation2 + $0x150] sm:$0xff]
        %v993 = vld [vmem:[#allocation2 + $0x158] sm:$0xff]
        %v994 = vld [vmem:[#allocation2 + $0x160] sm:$0x3]
        %v995 = vld [vmem:[#allocation2 + $0x168] sm:$0xff]
        %v996 = vld [vmem:[#allocation2 + $0x170] sm:$0xff]
        %v997 = vld [vmem:[#allocation2 + $0x178] sm:$0x3]
        %v998 = vld [vmem:[#allocation2 + $0x180] sm:$0xff]
        %v999 = vld [vmem:[#allocation2 + $0x188] sm:$0xff]
        %v1000 = vld [vmem:[#allocation2 + $0x190] sm:$0x3]
        %v1001 = vld [vmem:[#allocation2 + $0x198] sm:$0xff]
        %v1002 = vld [vmem:[#allocation2 + $0x1a0] sm:$0xff]
        %v1003 = vld [vmem:[#allocation2 + $0x1a8] sm:$0x3]
        %s1004 = scalar_lea.vmem [#allocation2], 432
        %v1005 = vld [vmem:[%s1004] sm:$0xff]
        %v1006 = vld [vmem:[%s1004 + $0x8] sm:$0xff]
        %v1007 = vld [vmem:[%s1004 + $0x10] sm:$0x3]
        %v1008 = vld [vmem:[%s1004 + $0x18] sm:$0xff]
        %v1009 = vld [vmem:[%s1004 + $0x20] sm:$0xff]
        %v1010 = vld [vmem:[%s1004 + $0x28] sm:$0x3]
        %v1011 = vld [vmem:[%s1004 + $0x30] sm:$0xff]
        %v1012 = vld [vmem:[%s1004 + $0x38] sm:$0xff]
        %v1013 = vld [vmem:[%s1004 + $0x40] sm:$0x3]
        %v1014 = vld [vmem:[%s1004 + $0x48] sm:$0xff]
        %v1015 = vld [vmem:[%s1004 + $0x50] sm:$0xff]
        %v1016 = vld [vmem:[%s1004 + $0x58] sm:$0x3]
        %v1017 = vld [vmem:[%s1004 + $0x60] sm:$0xff]
        %v1018 = vld [vmem:[%s1004 + $0x68] sm:$0xff]
        %v1019 = vld [vmem:[%s1004 + $0x70] sm:$0x3]
        %v1020 = vld [vmem:[%s1004 + $0x78] sm:$0xff]
        %v1021 = vld [vmem:[%s1004 + $0x80] sm:$0xff]
        %v1022 = vld [vmem:[%s1004 + $0x88] sm:$0x3]
        %v1023 = vld [vmem:[%s1004 + $0x90] sm:$0xff]
        %v1024 = vld [vmem:[%s1004 + $0x98] sm:$0xff]
        %v1025 = vld [vmem:[%s1004 + $0xa0] sm:$0x3]
        %v1026 = vld [vmem:[%s1004 + $0xa8] sm:$0xff]
        %v1027 = vld [vmem:[%s1004 + $0xb0] sm:$0xff]
        %v1028 = vld [vmem:[%s1004 + $0xb8] sm:$0x3]
        %v1029 = vld [vmem:[%s1004 + $0xc0] sm:$0xff]
        %v1030 = vld [vmem:[%s1004 + $0xc8] sm:$0xff]
        %v1031 = vld [vmem:[%s1004 + $0xd0] sm:$0x3]
        %v1032 = vld [vmem:[%s1004 + $0xd8] sm:$0xff]
        %v1033 = vld [vmem:[%s1004 + $0xe0] sm:$0xff]
        %v1034 = vld [vmem:[%s1004 + $0xe8] sm:$0x3]
        %v1035 = vld [vmem:[%s1004 + $0xf0] sm:$0xff]
        %v1036 = vld [vmem:[%s1004 + $0xf8] sm:$0xff]
        %v1037 = vld [vmem:[%s1004 + $0x100] sm:$0x3]
        %v1038 = vld [vmem:[%s1004 + $0x108] sm:$0xff]
        %v1039 = vld [vmem:[%s1004 + $0x110] sm:$0xff]
        %v1040 = vld [vmem:[%s1004 + $0x118] sm:$0x3]
        %v1041 = vld [vmem:[%s1004 + $0x120] sm:$0xff]
        %v1042 = vld [vmem:[%s1004 + $0x128] sm:$0xff]
        %v1043 = vld [vmem:[%s1004 + $0x130] sm:$0x3]
        %v1044 = vld [vmem:[%s1004 + $0x138] sm:$0xff]
        %v1045 = vld [vmem:[%s1004 + $0x140] sm:$0xff]
        %v1046 = vld [vmem:[%s1004 + $0x148] sm:$0x3]
        %v1047 = vld [vmem:[%s1004 + $0x150] sm:$0xff]
        %v1048 = vld [vmem:[%s1004 + $0x158] sm:$0xff]
        %v1049 = vld [vmem:[%s1004 + $0x160] sm:$0x3]
        %v1050 = vld [vmem:[%s1004 + $0x168] sm:$0xff]
        %v1051 = vld [vmem:[%s1004 + $0x170] sm:$0xff]
        %v1052 = vld [vmem:[%s1004 + $0x178] sm:$0x3]
        %v1053 = vld [vmem:[%s1004 + $0x180] sm:$0xff]
        %v1054 = vld [vmem:[%s1004 + $0x188] sm:$0xff]
        %v1055 = vld [vmem:[%s1004 + $0x190] sm:$0x3]
        %v1056 = vld [vmem:[%s1004 + $0x198] sm:$0xff]
        %v1057 = vld [vmem:[%s1004 + $0x1a0] sm:$0xff]
        %v1058 = vld [vmem:[%s1004 + $0x1a8] sm:$0x3]
        %s1059 = scalar_lea.vmem [#allocation2], 864
        %v1060 = vld [vmem:[%s1059] sm:$0xff]
        %v1061 = vld [vmem:[%s1059 + $0x8] sm:$0xff]
        %v1062 = vld [vmem:[%s1059 + $0x10] sm:$0x3]
        %v1063 = vld [vmem:[%s1059 + $0x18] sm:$0xff]
        %v1064 = vld [vmem:[%s1059 + $0x20] sm:$0xff]
        %v1065 = vld [vmem:[%s1059 + $0x28] sm:$0x3]
        %v1066 = vld [vmem:[%s1059 + $0x30] sm:$0xff]
        %v1067 = vld [vmem:[%s1059 + $0x38] sm:$0xff]
        %v1068 = vld [vmem:[%s1059 + $0x40] sm:$0x3]
        %v1069 = vld [vmem:[%s1059 + $0x48] sm:$0xff]
        %v1070 = vld [vmem:[%s1059 + $0x50] sm:$0xff]
        %v1071 = vld [vmem:[%s1059 + $0x58] sm:$0x3]
        %v1072 = vld [vmem:[%s1059 + $0x60] sm:$0xff]
        %v1073 = vld [vmem:[%s1059 + $0x68] sm:$0xff]
        %v1074 = vld [vmem:[%s1059 + $0x70] sm:$0x3]
        %v1075 = vld [vmem:[%s1059 + $0x78] sm:$0xff]
        %v1076 = vld [vmem:[%s1059 + $0x80] sm:$0xff]
        %v1077 = vld [vmem:[%s1059 + $0x88] sm:$0x3]
        %v1078 = vld [vmem:[%s1059 + $0x90] sm:$0xff]
        %v1079 = vld [vmem:[%s1059 + $0x98] sm:$0xff]
        %v1080 = vld [vmem:[%s1059 + $0xa0] sm:$0x3]
        %v1081 = vld [vmem:[%s1059 + $0xa8] sm:$0xff]
        %v1082 = vld [vmem:[%s1059 + $0xb0] sm:$0xff]
        %v1083 = vld [vmem:[%s1059 + $0xb8] sm:$0x3]
        %v1084 = vld [vmem:[%s1059 + $0xc0] sm:$0xff]
        %v1085 = vld [vmem:[%s1059 + $0xc8] sm:$0xff]
        %v1086 = vld [vmem:[%s1059 + $0xd0] sm:$0x3]
        %v1087 = vld [vmem:[%s1059 + $0xd8] sm:$0xff]
        %v1088 = vld [vmem:[%s1059 + $0xe0] sm:$0xff]
        %v1089 = vld [vmem:[%s1059 + $0xe8] sm:$0x3]
        %v1090 = vld [vmem:[%s1059 + $0xf0] sm:$0xff]
        %v1091 = vld [vmem:[%s1059 + $0xf8] sm:$0xff]
        %v1092 = vld [vmem:[%s1059 + $0x100] sm:$0x3]
        %v1093 = vld [vmem:[%s1059 + $0x108] sm:$0xff]
        %v1094 = vld [vmem:[%s1059 + $0x110] sm:$0xff]
        %v1095 = vld [vmem:[%s1059 + $0x118] sm:$0x3]
        %v1096 = vld [vmem:[%s1059 + $0x120] sm:$0xff]
        %v1097 = vld [vmem:[%s1059 + $0x128] sm:$0xff]
        %v1098 = vld [vmem:[%s1059 + $0x130] sm:$0x3]
        %v1099 = vld [vmem:[%s1059 + $0x138] sm:$0xff]
        %v1100 = vld [vmem:[%s1059 + $0x140] sm:$0xff]
        %v1101 = vld [vmem:[%s1059 + $0x148] sm:$0x3]
        %v1102 = vld [vmem:[%s1059 + $0x150] sm:$0xff]
        %v1103 = vld [vmem:[%s1059 + $0x158] sm:$0xff]
        %v1104 = vld [vmem:[%s1059 + $0x160] sm:$0x3]
        %v1105 = vld [vmem:[%s1059 + $0x168] sm:$0xff]
        %v1106 = vld [vmem:[%s1059 + $0x170] sm:$0xff]
        %v1107 = vld [vmem:[%s1059 + $0x178] sm:$0x3]
        %v1108 = vld [vmem:[%s1059 + $0x180] sm:$0xff]
        %v1109 = vld [vmem:[%s1059 + $0x188] sm:$0xff]
        %v1110 = vld [vmem:[%s1059 + $0x190] sm:$0x3]
        %v1111 = vld [vmem:[%s1059 + $0x198] sm:$0xff]
        %v1112 = vld [vmem:[%s1059 + $0x1a0] sm:$0xff]
        %v1113 = vld [vmem:[%s1059 + $0x1a8] sm:$0x3]
        %vm1162 = vcmask 1046528
        %v1163 = vrot.slane %v950, 1
        %v1164 = vrot.slane %v951, 1
        %v1165 = vsel %vm1162, %v1163, %v1164
        %v1166 = vrot.slane %v952, 1
        %v1167 = vsel %vm1162, %v1164, %v1166
        %v1168 = vrot.slane %v953, 1
        %v1169 = vrot.slane %v954, 1
        %v1170 = vsel %vm1162, %v1168, %v1169
        %v1171 = vrot.slane %v955, 1
        %v1172 = vsel %vm1162, %v1169, %v1171
        %v1173 = vrot.slane %v956, 1
        %v1174 = vrot.slane %v957, 1
        %v1175 = vsel %vm1162, %v1173, %v1174
        %v1176 = vrot.slane %v958, 1
        %v1177 = vsel %vm1162, %v1174, %v1176
        %v1178 = vrot.slane %v959, 1
        %v1179 = vrot.slane %v960, 1
        %v1180 = vsel %vm1162, %v1178, %v1179
        %v1181 = vrot.slane %v961, 1
        %v1182 = vsel %vm1162, %v1179, %v1181
        %v1183 = vrot.slane %v962, 1
        %v1184 = vrot.slane %v963, 1
        %v1185 = vsel %vm1162, %v1183, %v1184
        %v1186 = vrot.slane %v964, 1
        %v1187 = vsel %vm1162, %v1184, %v1186
        %v1188 = vrot.slane %v965, 1
        %v1189 = vrot.slane %v966, 1
        %v1190 = vsel %vm1162, %v1188, %v1189
        %v1191 = vrot.slane %v967, 1
        %v1192 = vsel %vm1162, %v1189, %v1191
        %v1193 = vrot.slane %v968, 1
        %v1194 = vrot.slane %v969, 1
        %v1195 = vsel %vm1162, %v1193, %v1194
        %v1196 = vrot.slane %v970, 1
        %v1197 = vsel %vm1162, %v1194, %v1196
        %v1198 = vrot.slane %v971, 1
        %v1199 = vrot.slane %v972, 1
        %v1200 = vsel %vm1162, %v1198, %v1199
        %v1201 = vrot.slane %v973, 1
        %v1202 = vsel %vm1162, %v1199, %v1201
        %v1203 = vrot.slane %v974, 1
        %v1204 = vrot.slane %v975, 1
        %v1205 = vsel %vm1162, %v1203, %v1204
        %v1206 = vrot.slane %v976, 1
        %v1207 = vsel %vm1162, %v1204, %v1206
        %v1208 = vrot.slane %v977, 1
        %v1209 = vrot.slane %v978, 1
        %v1210 = vsel %vm1162, %v1208, %v1209
        %v1211 = vrot.slane %v979, 1
        %v1212 = vsel %vm1162, %v1209, %v1211
        %v1213 = vrot.slane %v980, 1
        %v1214 = vrot.slane %v981, 1
        %v1215 = vsel %vm1162, %v1213, %v1214
        %v1216 = vrot.slane %v982, 1
        %v1217 = vsel %vm1162, %v1214, %v1216
        %v1218 = vrot.slane %v983, 1
        %v1219 = vrot.slane %v984, 1
        %v1220 = vsel %vm1162, %v1218, %v1219
        %v1221 = vrot.slane %v985, 1
        %v1222 = vsel %vm1162, %v1219, %v1221
        %v1223 = vrot.slane %v986, 1
        %v1224 = vrot.slane %v987, 1
        %v1225 = vsel %vm1162, %v1223, %v1224
        %v1226 = vrot.slane %v988, 1
        %v1227 = vsel %vm1162, %v1224, %v1226
        %v1228 = vrot.slane %v989, 1
        %v1229 = vrot.slane %v990, 1
        %v1230 = vsel %vm1162, %v1228, %v1229
        %v1231 = vrot.slane %v991, 1
        %v1232 = vsel %vm1162, %v1229, %v1231
        %v1233 = vrot.slane %v992, 1
        %v1234 = vrot.slane %v993, 1
        %v1235 = vsel %vm1162, %v1233, %v1234
        %v1236 = vrot.slane %v994, 1
        %v1237 = vsel %vm1162, %v1234, %v1236
        %v1238 = vrot.slane %v995, 1
        %v1239 = vrot.slane %v996, 1
        %v1240 = vsel %vm1162, %v1238, %v1239
        %v1241 = vrot.slane %v997, 1
        %v1242 = vsel %vm1162, %v1239, %v1241
        %1243 = vrot.lane.b32.xlu0 %v1165, 4
        %v1244 = vpop.permute.xlu0 %1243
        %1245 = vrot.lane.b32.xlu0 %v1167, 4
        %v1246 = vpop.permute.xlu0 %1245
        %1247 = vrot.lane.b32.xlu0 %v1170, 4
        %v1248 = vpop.permute.xlu0 %1247
        %1249 = vrot.lane.b32.xlu0 %v1172, 4
        %v1250 = vpop.permute.xlu0 %1249
        %1251 = vrot.lane.b32.xlu0 %v1175, 4
        %v1252 = vpop.permute.xlu0 %1251
        %1253 = vrot.lane.b32.xlu0 %v1177, 4
        %v1254 = vpop.permute.xlu0 %1253
        %1255 = vrot.lane.b32.xlu0 %v1180, 4
        %v1256 = vpop.permute.xlu0 %1255
        %1257 = vrot.lane.b32.xlu0 %v1182, 4
        %v1258 = vpop.permute.xlu0 %1257
        %1259 = vrot.lane.b32.xlu0 %v1185, 4
        %v1260 = vpop.permute.xlu0 %1259
        %1261 = vrot.lane.b32.xlu0 %v1187, 4
        %v1262 = vpop.permute.xlu0 %1261
        %1263 = vrot.lane.b32.xlu0 %v1190, 4
        %v1264 = vpop.permute.xlu0 %1263
        %1265 = vrot.lane.b32.xlu0 %v1192, 4
        %v1266 = vpop.permute.xlu0 %1265
        %1267 = vrot.lane.b32.xlu0 %v1195, 4
        %v1268 = vpop.permute.xlu0 %1267
        %1269 = vrot.lane.b32.xlu0 %v1197, 4
        %v1270 = vpop.permute.xlu0 %1269
        %1271 = vrot.lane.b32.xlu0 %v1200, 4
        %v1272 = vpop.permute.xlu0 %1271
        %1273 = vrot.lane.b32.xlu0 %v1202, 4
        %v1274 = vpop.permute.xlu0 %1273
        %1275 = vrot.lane.b32.xlu0 %v1205, 4
        %v1276 = vpop.permute.xlu0 %1275
        %1277 = vrot.lane.b32.xlu0 %v1207, 4
        %v1278 = vpop.permute.xlu0 %1277
        %1279 = vrot.lane.b32.xlu0 %v1210, 4
        %v1280 = vpop.permute.xlu0 %1279
        %1281 = vrot.lane.b32.xlu0 %v1212, 4
        %v1282 = vpop.permute.xlu0 %1281
        %1283 = vrot.lane.b32.xlu0 %v1215, 4
        %v1284 = vpop.permute.xlu0 %1283
        %1285 = vrot.lane.b32.xlu0 %v1217, 4
        %v1286 = vpop.permute.xlu0 %1285
        %1287 = vrot.lane.b32.xlu0 %v1220, 4
        %v1288 = vpop.permute.xlu0 %1287
        %1289 = vrot.lane.b32.xlu0 %v1222, 4
        %v1290 = vpop.permute.xlu0 %1289
        %1291 = vrot.lane.b32.xlu0 %v1225, 4
        %v1292 = vpop.permute.xlu0 %1291
        %1293 = vrot.lane.b32.xlu0 %v1227, 4
        %v1294 = vpop.permute.xlu0 %1293
        %1295 = vrot.lane.b32.xlu0 %v1230, 4
        %v1296 = vpop.permute.xlu0 %1295
        %1297 = vrot.lane.b32.xlu0 %v1232, 4
        %v1298 = vpop.permute.xlu0 %1297
        %1299 = vrot.lane.b32.xlu0 %v1235, 4
        %v1300 = vpop.permute.xlu0 %1299
        %1301 = vrot.lane.b32.xlu0 %v1237, 4
        %v1302 = vpop.permute.xlu0 %1301
        %1303 = vrot.lane.b32.xlu0 %v1240, 4
        %v1304 = vpop.permute.xlu0 %1303
        %1305 = vrot.lane.b32.xlu0 %v1242, 4
        %v1306 = vpop.permute.xlu0 %1305
        %vm1339 = vcmask 1045504
        %v1340 = vrot.slane %v950, 2
        %v1341 = vrot.slane %v951, 2
        %v1342 = vsel %vm1339, %v1340, %v1341
        %v1343 = vrot.slane %v952, 2
        %v1344 = vsel %vm1339, %v1341, %v1343
        %v1345 = vrot.slane %v953, 2
        %v1346 = vrot.slane %v954, 2
        %v1347 = vsel %vm1339, %v1345, %v1346
        %v1348 = vrot.slane %v955, 2
        %v1349 = vsel %vm1339, %v1346, %v1348
        %v1350 = vrot.slane %v956, 2
        %v1351 = vrot.slane %v957, 2
        %v1352 = vsel %vm1339, %v1350, %v1351
        %v1353 = vrot.slane %v958, 2
        %v1354 = vsel %vm1339, %v1351, %v1353
        %v1355 = vrot.slane %v959, 2
        %v1356 = vrot.slane %v960, 2
        %v1357 = vsel %vm1339, %v1355, %v1356
        %v1358 = vrot.slane %v961, 2
        %v1359 = vsel %vm1339, %v1356, %v1358
        %v1360 = vrot.slane %v962, 2
        %v1361 = vrot.slane %v963, 2
        %v1362 = vsel %vm1339, %v1360, %v1361
        %v1363 = vrot.slane %v964, 2
        %v1364 = vsel %vm1339, %v1361, %v1363
        %v1365 = vrot.slane %v965, 2
        %v1366 = vrot.slane %v966, 2
        %v1367 = vsel %vm1339, %v1365, %v1366
        %v1368 = vrot.slane %v967, 2
        %v1369 = vsel %vm1339, %v1366, %v1368
        %v1370 = vrot.slane %v968, 2
        %v1371 = vrot.slane %v969, 2
        %v1372 = vsel %vm1339, %v1370, %v1371
        %v1373 = vrot.slane %v970, 2
        %v1374 = vsel %vm1339, %v1371, %v1373
        %v1375 = vrot.slane %v971, 2
        %v1376 = vrot.slane %v972, 2
        %v1377 = vsel %vm1339, %v1375, %v1376
        %v1378 = vrot.slane %v973, 2
        %v1379 = vsel %vm1339, %v1376, %v1378
        %v1380 = vrot.slane %v974, 2
        %v1381 = vrot.slane %v975, 2
        %v1382 = vsel %vm1339, %v1380, %v1381
        %v1383 = vrot.slane %v976, 2
        %v1384 = vsel %vm1339, %v1381, %v1383
        %v1385 = vrot.slane %v977, 2
        %v1386 = vrot.slane %v978, 2
        %v1387 = vsel %vm1339, %v1385, %v1386
        %v1388 = vrot.slane %v979, 2
        %v1389 = vsel %vm1339, %v1386, %v1388
        %v1390 = vrot.slane %v980, 2
        %v1391 = vrot.slane %v981, 2
        %v1392 = vsel %vm1339, %v1390, %v1391
        %v1393 = vrot.slane %v982, 2
        %v1394 = vsel %vm1339, %v1391, %v1393
        %v1395 = vrot.slane %v983, 2
        %v1396 = vrot.slane %v984, 2
        %v1397 = vsel %vm1339, %v1395, %v1396
        %v1398 = vrot.slane %v985, 2
        %v1399 = vsel %vm1339, %v1396, %v1398
        %v1400 = vrot.slane %v986, 2
        %v1401 = vrot.slane %v987, 2
        %v1402 = vsel %vm1339, %v1400, %v1401
        %v1403 = vrot.slane %v988, 2
        %v1404 = vsel %vm1339, %v1401, %v1403
        %v1405 = vrot.slane %v989, 2
        %v1406 = vrot.slane %v990, 2
        %v1407 = vsel %vm1339, %v1405, %v1406
        %v1408 = vrot.slane %v991, 2
        %v1409 = vsel %vm1339, %v1406, %v1408
        %v1410 = vrot.slane %v992, 2
        %v1411 = vrot.slane %v993, 2
        %v1412 = vsel %vm1339, %v1410, %v1411
        %v1413 = vrot.slane %v994, 2
        %v1414 = vsel %vm1339, %v1411, %v1413
        %v1415 = vrot.slane %v995, 2
        %v1416 = vrot.slane %v996, 2
        %v1417 = vsel %vm1339, %v1415, %v1416
        %v1418 = vrot.slane %v997, 2
        %v1419 = vsel %vm1339, %v1416, %v1418
        %1420 = vrot.lane.b32.xlu0 %v1342, 8
        %v1421 = vpop.permute.xlu0 %1420
        %1422 = vrot.lane.b32.xlu0 %v1344, 8
        %v1423 = vpop.permute.xlu0 %1422
        %1424 = vrot.lane.b32.xlu0 %v1347, 8
        %v1425 = vpop.permute.xlu0 %1424
        %1426 = vrot.lane.b32.xlu0 %v1349, 8
        %v1427 = vpop.permute.xlu0 %1426
        %1428 = vrot.lane.b32.xlu0 %v1352, 8
        %v1429 = vpop.permute.xlu0 %1428
        %1430 = vrot.lane.b32.xlu0 %v1354, 8
        %v1431 = vpop.permute.xlu0 %1430
        %1432 = vrot.lane.b32.xlu0 %v1357, 8
        %v1433 = vpop.permute.xlu0 %1432
        %1434 = vrot.lane.b32.xlu0 %v1359, 8
        %v1435 = vpop.permute.xlu0 %1434
        %1436 = vrot.lane.b32.xlu0 %v1362, 8
        %v1437 = vpop.permute.xlu0 %1436
        %1438 = vrot.lane.b32.xlu0 %v1364, 8
        %v1439 = vpop.permute.xlu0 %1438
        %1440 = vrot.lane.b32.xlu0 %v1367, 8
        %v1441 = vpop.permute.xlu0 %1440
        %1442 = vrot.lane.b32.xlu0 %v1369, 8
        %v1443 = vpop.permute.xlu0 %1442
        %1444 = vrot.lane.b32.xlu0 %v1372, 8
        %v1445 = vpop.permute.xlu0 %1444
        %1446 = vrot.lane.b32.xlu0 %v1374, 8
        %v1447 = vpop.permute.xlu0 %1446
        %1448 = vrot.lane.b32.xlu0 %v1377, 8
        %v1449 = vpop.permute.xlu0 %1448
        %1450 = vrot.lane.b32.xlu0 %v1379, 8
        %v1451 = vpop.permute.xlu0 %1450
        %1452 = vrot.lane.b32.xlu0 %v1382, 8
        %v1453 = vpop.permute.xlu0 %1452
        %1454 = vrot.lane.b32.xlu0 %v1384, 8
        %v1455 = vpop.permute.xlu0 %1454
        %1456 = vrot.lane.b32.xlu0 %v1387, 8
        %v1457 = vpop.permute.xlu0 %1456
        %1458 = vrot.lane.b32.xlu0 %v1389, 8
        %v1459 = vpop.permute.xlu0 %1458
        %1460 = vrot.lane.b32.xlu0 %v1392, 8
        %v1461 = vpop.permute.xlu0 %1460
        %1462 = vrot.lane.b32.xlu0 %v1394, 8
        %v1463 = vpop.permute.xlu0 %1462
        %1464 = vrot.lane.b32.xlu0 %v1397, 8
        %v1465 = vpop.permute.xlu0 %1464
        %1466 = vrot.lane.b32.xlu0 %v1399, 8
        %v1467 = vpop.permute.xlu0 %1466
        %1468 = vrot.lane.b32.xlu0 %v1402, 8
        %v1469 = vpop.permute.xlu0 %1468
        %1470 = vrot.lane.b32.xlu0 %v1404, 8
        %v1471 = vpop.permute.xlu0 %1470
        %1472 = vrot.lane.b32.xlu0 %v1407, 8
        %v1473 = vpop.permute.xlu0 %1472
        %1474 = vrot.lane.b32.xlu0 %v1409, 8
        %v1475 = vpop.permute.xlu0 %1474
        %1476 = vrot.lane.b32.xlu0 %v1412, 8
        %v1477 = vpop.permute.xlu0 %1476
        %1478 = vrot.lane.b32.xlu0 %v1414, 8
        %v1479 = vpop.permute.xlu0 %1478
        %1480 = vrot.lane.b32.xlu0 %v1417, 8
        %v1481 = vpop.permute.xlu0 %1480
        %1482 = vrot.lane.b32.xlu0 %v1419, 8
        %v1483 = vpop.permute.xlu0 %1482
        %1518 = vrot.lane.b32.xlu0 %v953, 12
        %v1519 = vpop.permute.xlu0 %1518
        %1520 = vrot.lane.b32.xlu0 %v954, 12
        %v1521 = vpop.permute.xlu0 %1520
        %1522 = vrot.lane.b32.xlu0 %v956, 12
        %v1523 = vpop.permute.xlu0 %1522
        %1524 = vrot.lane.b32.xlu0 %v957, 12
        %v1525 = vpop.permute.xlu0 %1524
        %1526 = vrot.lane.b32.xlu0 %v959, 12
        %v1527 = vpop.permute.xlu0 %1526
        %1528 = vrot.lane.b32.xlu0 %v960, 12
        %v1529 = vpop.permute.xlu0 %1528
        %1530 = vrot.lane.b32.xlu0 %v962, 12
        %v1531 = vpop.permute.xlu0 %1530
        %1532 = vrot.lane.b32.xlu0 %v963, 12
        %v1533 = vpop.permute.xlu0 %1532
        %1534 = vrot.lane.b32.xlu0 %v965, 12
        %v1535 = vpop.permute.xlu0 %1534
        %1536 = vrot.lane.b32.xlu0 %v966, 12
        %v1537 = vpop.permute.xlu0 %1536
        %1538 = vrot.lane.b32.xlu0 %v968, 12
        %v1539 = vpop.permute.xlu0 %1538
        %1540 = vrot.lane.b32.xlu0 %v969, 12
        %v1541 = vpop.permute.xlu0 %1540
        %1542 = vrot.lane.b32.xlu0 %v971, 12
        %v1543 = vpop.permute.xlu0 %1542
        %1544 = vrot.lane.b32.xlu0 %v972, 12
        %v1545 = vpop.permute.xlu0 %1544
        %1546 = vrot.lane.b32.xlu0 %v974, 12
        %v1547 = vpop.permute.xlu0 %1546
        %1548 = vrot.lane.b32.xlu0 %v975, 12
        %v1549 = vpop.permute.xlu0 %1548
        %1550 = vrot.lane.b32.xlu0 %v977, 12
        %v1551 = vpop.permute.xlu0 %1550
        %1552 = vrot.lane.b32.xlu0 %v978, 12
        %v1553 = vpop.permute.xlu0 %1552
        %1554 = vrot.lane.b32.xlu0 %v980, 12
        %v1555 = vpop.permute.xlu0 %1554
        %1556 = vrot.lane.b32.xlu0 %v981, 12
        %v1557 = vpop.permute.xlu0 %1556
        %1558 = vrot.lane.b32.xlu0 %v983, 12
        %v1559 = vpop.permute.xlu0 %1558
        %1560 = vrot.lane.b32.xlu0 %v984, 12
        %v1561 = vpop.permute.xlu0 %1560
        %1562 = vrot.lane.b32.xlu0 %v986, 12
        %v1563 = vpop.permute.xlu0 %1562
        %1564 = vrot.lane.b32.xlu0 %v987, 12
        %v1565 = vpop.permute.xlu0 %1564
        %1566 = vrot.lane.b32.xlu0 %v989, 12
        %v1567 = vpop.permute.xlu0 %1566
        %1568 = vrot.lane.b32.xlu0 %v990, 12
        %v1569 = vpop.permute.xlu0 %1568
        %1570 = vrot.lane.b32.xlu0 %v992, 12
        %v1571 = vpop.permute.xlu0 %1570
        %1572 = vrot.lane.b32.xlu0 %v993, 12
        %v1573 = vpop.permute.xlu0 %1572
        %1574 = vrot.lane.b32.xlu0 %v995, 12
        %v1575 = vpop.permute.xlu0 %1574
        %1576 = vrot.lane.b32.xlu0 %v996, 12
        %v1577 = vpop.permute.xlu0 %1576
        %1578 = vrot.lane.b32.xlu0 %v998, 12
        %v1579 = vpop.permute.xlu0 %1578
        %1580 = vrot.lane.b32.xlu0 %v999, 12
        %v1581 = vpop.permute.xlu0 %1580
        %v1615 = vrot.slane %v998, 1
        %v1616 = vrot.slane %v999, 1
        %v1617 = vsel %vm1162, %v1615, %v1616
        %v1618 = vrot.slane %v1000, 1
        %v1619 = vsel %vm1162, %v1616, %v1618
        %1620 = vrot.lane.b32.xlu0 %v1170, 16
        %v1621 = vpop.permute.xlu0 %1620
        %1622 = vrot.lane.b32.xlu0 %v1172, 16
        %v1623 = vpop.permute.xlu0 %1622
        %1624 = vrot.lane.b32.xlu0 %v1175, 16
        %v1625 = vpop.permute.xlu0 %1624
        %1626 = vrot.lane.b32.xlu0 %v1177, 16
        %v1627 = vpop.permute.xlu0 %1626
        %1628 = vrot.lane.b32.xlu0 %v1180, 16
        %v1629 = vpop.permute.xlu0 %1628
        %1630 = vrot.lane.b32.xlu0 %v1182, 16
        %v1631 = vpop.permute.xlu0 %1630
        %1632 = vrot.lane.b32.xlu0 %v1185, 16
        %v1633 = vpop.permute.xlu0 %1632
        %1634 = vrot.lane.b32.xlu0 %v1187, 16
        %v1635 = vpop.permute.xlu0 %1634
        %1636 = vrot.lane.b32.xlu0 %v1190, 16
        %v1637 = vpop.permute.xlu0 %1636
        %1638 = vrot.lane.b32.xlu0 %v1192, 16
        %v1639 = vpop.permute.xlu0 %1638
        %1640 = vrot.lane.b32.xlu0 %v1195, 16
        %v1641 = vpop.permute.xlu0 %1640
        %1642 = vrot.lane.b32.xlu0 %v1197, 16
        %v1643 = vpop.permute.xlu0 %1642
        %1644 = vrot.lane.b32.xlu0 %v1200, 16
        %v1645 = vpop.permute.xlu0 %1644
        %1646 = vrot.lane.b32.xlu0 %v1202, 16
        %v1647 = vpop.permute.xlu0 %1646
        %1648 = vrot.lane.b32.xlu0 %v1205, 16
        %v1649 = vpop.permute.xlu0 %1648
        %1650 = vrot.lane.b32.xlu0 %v1207, 16
        %v1651 = vpop.permute.xlu0 %1650
        %1652 = vrot.lane.b32.xlu0 %v1210, 16
        %v1653 = vpop.permute.xlu0 %1652
        %1654 = vrot.lane.b32.xlu0 %v1212, 16
        %v1655 = vpop.permute.xlu0 %1654
        %1656 = vrot.lane.b32.xlu0 %v1215, 16
        %v1657 = vpop.permute.xlu0 %1656
        %1658 = vrot.lane.b32.xlu0 %v1217, 16
        %v1659 = vpop.permute.xlu0 %1658
        %1660 = vrot.lane.b32.xlu0 %v1220, 16
        %v1661 = vpop.permute.xlu0 %1660
        %1662 = vrot.lane.b32.xlu0 %v1222, 16
        %v1663 = vpop.permute.xlu0 %1662
        %1664 = vrot.lane.b32.xlu0 %v1225, 16
        %v1665 = vpop.permute.xlu0 %1664
        %1666 = vrot.lane.b32.xlu0 %v1227, 16
        %v1667 = vpop.permute.xlu0 %1666
        %1668 = vrot.lane.b32.xlu0 %v1230, 16
        %v1669 = vpop.permute.xlu0 %1668
        %1670 = vrot.lane.b32.xlu0 %v1232, 16
        %v1671 = vpop.permute.xlu0 %1670
        %1672 = vrot.lane.b32.xlu0 %v1235, 16
        %v1673 = vpop.permute.xlu0 %1672
        %1674 = vrot.lane.b32.xlu0 %v1237, 16
        %v1675 = vpop.permute.xlu0 %1674
        %1676 = vrot.lane.b32.xlu0 %v1240, 16
        %v1677 = vpop.permute.xlu0 %1676
        %1678 = vrot.lane.b32.xlu0 %v1242, 16
        %v1679 = vpop.permute.xlu0 %1678
        %1680 = vrot.lane.b32.xlu0 %v1617, 16
        %v1681 = vpop.permute.xlu0 %1680
        %1682 = vrot.lane.b32.xlu0 %v1619, 16
        %v1683 = vpop.permute.xlu0 %1682
        %v1716 = vrot.slane %v998, 2
        %v1717 = vrot.slane %v999, 2
        %v1718 = vsel %vm1339, %v1716, %v1717
        %v1719 = vrot.slane %v1000, 2
        %v1720 = vsel %vm1339, %v1717, %v1719
        %1721 = vrot.lane.b32.xlu0 %v1347, 20
        %v1722 = vpop.permute.xlu0 %1721
        %1723 = vrot.lane.b32.xlu0 %v1349, 20
        %v1724 = vpop.permute.xlu0 %1723
        %1725 = vrot.lane.b32.xlu0 %v1352, 20
        %v1726 = vpop.permute.xlu0 %1725
        %1727 = vrot.lane.b32.xlu0 %v1354, 20
        %v1728 = vpop.permute.xlu0 %1727
        %1729 = vrot.lane.b32.xlu0 %v1357, 20
        %v1730 = vpop.permute.xlu0 %1729
        %1731 = vrot.lane.b32.xlu0 %v1359, 20
        %v1732 = vpop.permute.xlu0 %1731
        %1733 = vrot.lane.b32.xlu0 %v1362, 20
        %v1734 = vpop.permute.xlu0 %1733
        %1735 = vrot.lane.b32.xlu0 %v1364, 20
        %v1736 = vpop.permute.xlu0 %1735
        %1737 = vrot.lane.b32.xlu0 %v1367, 20
        %v1738 = vpop.permute.xlu0 %1737
        %1739 = vrot.lane.b32.xlu0 %v1369, 20
        %v1740 = vpop.permute.xlu0 %1739
        %1741 = vrot.lane.b32.xlu0 %v1372, 20
        %v1742 = vpop.permute.xlu0 %1741
        %1743 = vrot.lane.b32.xlu0 %v1374, 20
        %v1744 = vpop.permute.xlu0 %1743
        %1745 = vrot.lane.b32.xlu0 %v1377, 20
        %v1746 = vpop.permute.xlu0 %1745
        %1747 = vrot.lane.b32.xlu0 %v1379, 20
        %v1748 = vpop.permute.xlu0 %1747
        %1749 = vrot.lane.b32.xlu0 %v1382, 20
        %v1750 = vpop.permute.xlu0 %1749
        %1751 = vrot.lane.b32.xlu0 %v1384, 20
        %v1752 = vpop.permute.xlu0 %1751
        %1753 = vrot.lane.b32.xlu0 %v1387, 20
        %v1754 = vpop.permute.xlu0 %1753
        %1755 = vrot.lane.b32.xlu0 %v1389, 20
        %v1756 = vpop.permute.xlu0 %1755
        %1757 = vrot.lane.b32.xlu0 %v1392, 20
        %v1758 = vpop.permute.xlu0 %1757
        %1759 = vrot.lane.b32.xlu0 %v1394, 20
        %v1760 = vpop.permute.xlu0 %1759
        %1761 = vrot.lane.b32.xlu0 %v1397, 20
        %v1762 = vpop.permute.xlu0 %1761
        %1763 = vrot.lane.b32.xlu0 %v1399, 20
        %v1764 = vpop.permute.xlu0 %1763
        %1765 = vrot.lane.b32.xlu0 %v1402, 20
        %v1766 = vpop.permute.xlu0 %1765
        %1767 = vrot.lane.b32.xlu0 %v1404, 20
        %v1768 = vpop.permute.xlu0 %1767
        %1769 = vrot.lane.b32.xlu0 %v1407, 20
        %v1770 = vpop.permute.xlu0 %1769
        %1771 = vrot.lane.b32.xlu0 %v1409, 20
        %v1772 = vpop.permute.xlu0 %1771
        %1773 = vrot.lane.b32.xlu0 %v1412, 20
        %v1774 = vpop.permute.xlu0 %1773
        %1775 = vrot.lane.b32.xlu0 %v1414, 20
        %v1776 = vpop.permute.xlu0 %1775
        %1777 = vrot.lane.b32.xlu0 %v1417, 20
        %v1778 = vpop.permute.xlu0 %1777
        %1779 = vrot.lane.b32.xlu0 %v1419, 20
        %v1780 = vpop.permute.xlu0 %1779
        %1781 = vrot.lane.b32.xlu0 %v1718, 20
        %v1782 = vpop.permute.xlu0 %1781
        %1783 = vrot.lane.b32.xlu0 %v1720, 20
        %v1784 = vpop.permute.xlu0 %1783
        %1819 = vrot.lane.b32.xlu0 %v956, 24
        %v1820 = vpop.permute.xlu0 %1819
        %1821 = vrot.lane.b32.xlu0 %v957, 24
        %v1822 = vpop.permute.xlu0 %1821
        %1823 = vrot.lane.b32.xlu0 %v959, 24
        %v1824 = vpop.permute.xlu0 %1823
        %1825 = vrot.lane.b32.xlu0 %v960, 24
        %v1826 = vpop.permute.xlu0 %1825
        %1827 = vrot.lane.b32.xlu0 %v962, 24
        %v1828 = vpop.permute.xlu0 %1827
        %1829 = vrot.lane.b32.xlu0 %v963, 24
        %v1830 = vpop.permute.xlu0 %1829
        %1831 = vrot.lane.b32.xlu0 %v965, 24
        %v1832 = vpop.permute.xlu0 %1831
        %1833 = vrot.lane.b32.xlu0 %v966, 24
        %v1834 = vpop.permute.xlu0 %1833
        %1835 = vrot.lane.b32.xlu0 %v968, 24
        %v1836 = vpop.permute.xlu0 %1835
        %1837 = vrot.lane.b32.xlu0 %v969, 24
        %v1838 = vpop.permute.xlu0 %1837
        %1839 = vrot.lane.b32.xlu0 %v971, 24
        %v1840 = vpop.permute.xlu0 %1839
        %1841 = vrot.lane.b32.xlu0 %v972, 24
        %v1842 = vpop.permute.xlu0 %1841
        %1843 = vrot.lane.b32.xlu0 %v974, 24
        %v1844 = vpop.permute.xlu0 %1843
        %1845 = vrot.lane.b32.xlu0 %v975, 24
        %v1846 = vpop.permute.xlu0 %1845
        %1847 = vrot.lane.b32.xlu0 %v977, 24
        %v1848 = vpop.permute.xlu0 %1847
        %1849 = vrot.lane.b32.xlu0 %v978, 24
        %v1850 = vpop.permute.xlu0 %1849
        %1851 = vrot.lane.b32.xlu0 %v980, 24
        %v1852 = vpop.permute.xlu0 %1851
        %1853 = vrot.lane.b32.xlu0 %v981, 24
        %v1854 = vpop.permute.xlu0 %1853
        %1855 = vrot.lane.b32.xlu0 %v983, 24
        %v1856 = vpop.permute.xlu0 %1855
        %1857 = vrot.lane.b32.xlu0 %v984, 24
        %v1858 = vpop.permute.xlu0 %1857
        %1859 = vrot.lane.b32.xlu0 %v986, 24
        %v1860 = vpop.permute.xlu0 %1859
        %1861 = vrot.lane.b32.xlu0 %v987, 24
        %v1862 = vpop.permute.xlu0 %1861
        %1863 = vrot.lane.b32.xlu0 %v989, 24
        %v1864 = vpop.permute.xlu0 %1863
        %1865 = vrot.lane.b32.xlu0 %v990, 24
        %v1866 = vpop.permute.xlu0 %1865
        %1867 = vrot.lane.b32.xlu0 %v992, 24
        %v1868 = vpop.permute.xlu0 %1867
        %1869 = vrot.lane.b32.xlu0 %v993, 24
        %v1870 = vpop.permute.xlu0 %1869
        %1871 = vrot.lane.b32.xlu0 %v995, 24
        %v1872 = vpop.permute.xlu0 %1871
        %1873 = vrot.lane.b32.xlu0 %v996, 24
        %v1874 = vpop.permute.xlu0 %1873
        %1875 = vrot.lane.b32.xlu0 %v998, 24
        %v1876 = vpop.permute.xlu0 %1875
        %1877 = vrot.lane.b32.xlu0 %v999, 24
        %v1878 = vpop.permute.xlu0 %1877
        %1879 = vrot.lane.b32.xlu0 %v1001, 24
        %v1880 = vpop.permute.xlu0 %1879
        %1881 = vrot.lane.b32.xlu0 %v1002, 24
        %v1882 = vpop.permute.xlu0 %1881
        %v1916 = vrot.slane %v1001, 1
        %v1917 = vrot.slane %v1002, 1
        %v1918 = vsel %vm1162, %v1916, %v1917
        %v1919 = vrot.slane %v1003, 1
        %v1920 = vsel %vm1162, %v1917, %v1919
        %1921 = vrot.lane.b32.xlu0 %v1175, 28
        %v1922 = vpop.permute.xlu0 %1921
        %1923 = vrot.lane.b32.xlu0 %v1177, 28
        %v1924 = vpop.permute.xlu0 %1923
        %1925 = vrot.lane.b32.xlu0 %v1180, 28
        %v1926 = vpop.permute.xlu0 %1925
        %1927 = vrot.lane.b32.xlu0 %v1182, 28
        %v1928 = vpop.permute.xlu0 %1927
        %1929 = vrot.lane.b32.xlu0 %v1185, 28
        %v1930 = vpop.permute.xlu0 %1929
        %1931 = vrot.lane.b32.xlu0 %v1187, 28
        %v1932 = vpop.permute.xlu0 %1931
        %1933 = vrot.lane.b32.xlu0 %v1190, 28
        %v1934 = vpop.permute.xlu0 %1933
        %1935 = vrot.lane.b32.xlu0 %v1192, 28
        %v1936 = vpop.permute.xlu0 %1935
        %1937 = vrot.lane.b32.xlu0 %v1195, 28
        %v1938 = vpop.permute.xlu0 %1937
        %1939 = vrot.lane.b32.xlu0 %v1197, 28
        %v1940 = vpop.permute.xlu0 %1939
        %1941 = vrot.lane.b32.xlu0 %v1200, 28
        %v1942 = vpop.permute.xlu0 %1941
        %1943 = vrot.lane.b32.xlu0 %v1202, 28
        %v1944 = vpop.permute.xlu0 %1943
        %1945 = vrot.lane.b32.xlu0 %v1205, 28
        %v1946 = vpop.permute.xlu0 %1945
        %1947 = vrot.lane.b32.xlu0 %v1207, 28
        %v1948 = vpop.permute.xlu0 %1947
        %1949 = vrot.lane.b32.xlu0 %v1210, 28
        %v1950 = vpop.permute.xlu0 %1949
        %1951 = vrot.lane.b32.xlu0 %v1212, 28
        %v1952 = vpop.permute.xlu0 %1951
        %1953 = vrot.lane.b32.xlu0 %v1215, 28
        %v1954 = vpop.permute.xlu0 %1953
        %1955 = vrot.lane.b32.xlu0 %v1217, 28
        %v1956 = vpop.permute.xlu0 %1955
        %1957 = vrot.lane.b32.xlu0 %v1220, 28
        %v1958 = vpop.permute.xlu0 %1957
        %1959 = vrot.lane.b32.xlu0 %v1222, 28
        %v1960 = vpop.permute.xlu0 %1959
        %1961 = vrot.lane.b32.xlu0 %v1225, 28
        %v1962 = vpop.permute.xlu0 %1961
        %1963 = vrot.lane.b32.xlu0 %v1227, 28
        %v1964 = vpop.permute.xlu0 %1963
        %1965 = vrot.lane.b32.xlu0 %v1230, 28
        %v1966 = vpop.permute.xlu0 %1965
        %1967 = vrot.lane.b32.xlu0 %v1232, 28
        %v1968 = vpop.permute.xlu0 %1967
        %1969 = vrot.lane.b32.xlu0 %v1235, 28
        %v1970 = vpop.permute.xlu0 %1969
        %1971 = vrot.lane.b32.xlu0 %v1237, 28
        %v1972 = vpop.permute.xlu0 %1971
        %1973 = vrot.lane.b32.xlu0 %v1240, 28
        %v1974 = vpop.permute.xlu0 %1973
        %1975 = vrot.lane.b32.xlu0 %v1242, 28
        %v1976 = vpop.permute.xlu0 %1975
        %1977 = vrot.lane.b32.xlu0 %v1617, 28
        %v1978 = vpop.permute.xlu0 %1977
        %1979 = vrot.lane.b32.xlu0 %v1619, 28
        %v1980 = vpop.permute.xlu0 %1979
        %1981 = vrot.lane.b32.xlu0 %v1918, 28
        %v1982 = vpop.permute.xlu0 %1981
        %1983 = vrot.lane.b32.xlu0 %v1920, 28
        %v1984 = vpop.permute.xlu0 %1983
        %v2017 = vrot.slane %v1001, 2
        %v2018 = vrot.slane %v1002, 2
        %v2019 = vsel %vm1339, %v2017, %v2018
        %v2020 = vrot.slane %v1003, 2
        %v2021 = vsel %vm1339, %v2018, %v2020
        %2022 = vrot.lane.b32.xlu0 %v1352, 32
        %v2023 = vpop.permute.xlu0 %2022
        %2024 = vrot.lane.b32.xlu0 %v1354, 32
        %v2025 = vpop.permute.xlu0 %2024
        %2026 = vrot.lane.b32.xlu0 %v1357, 32
        %v2027 = vpop.permute.xlu0 %2026
        %2028 = vrot.lane.b32.xlu0 %v1359, 32
        %v2029 = vpop.permute.xlu0 %2028
        %2030 = vrot.lane.b32.xlu0 %v1362, 32
        %v2031 = vpop.permute.xlu0 %2030
        %2032 = vrot.lane.b32.xlu0 %v1364, 32
        %v2033 = vpop.permute.xlu0 %2032
        %2034 = vrot.lane.b32.xlu0 %v1367, 32
        %v2035 = vpop.permute.xlu0 %2034
        %2036 = vrot.lane.b32.xlu0 %v1369, 32
        %v2037 = vpop.permute.xlu0 %2036
        %2038 = vrot.lane.b32.xlu0 %v1372, 32
        %v2039 = vpop.permute.xlu0 %2038
        %2040 = vrot.lane.b32.xlu0 %v1374, 32
        %v2041 = vpop.permute.xlu0 %2040
        %2042 = vrot.lane.b32.xlu0 %v1377, 32
        %v2043 = vpop.permute.xlu0 %2042
        %2044 = vrot.lane.b32.xlu0 %v1379, 32
        %v2045 = vpop.permute.xlu0 %2044
        %2046 = vrot.lane.b32.xlu0 %v1382, 32
        %v2047 = vpop.permute.xlu0 %2046
        %2048 = vrot.lane.b32.xlu0 %v1384, 32
        %v2049 = vpop.permute.xlu0 %2048
        %2050 = vrot.lane.b32.xlu0 %v1387, 32
        %v2051 = vpop.permute.xlu0 %2050
        %2052 = vrot.lane.b32.xlu0 %v1389, 32
        %v2053 = vpop.permute.xlu0 %2052
        %2054 = vrot.lane.b32.xlu0 %v1392, 32
        %v2055 = vpop.permute.xlu0 %2054
        %2056 = vrot.lane.b32.xlu0 %v1394, 32
        %v2057 = vpop.permute.xlu0 %2056
        %2058 = vrot.lane.b32.xlu0 %v1397, 32
        %v2059 = vpop.permute.xlu0 %2058
        %2060 = vrot.lane.b32.xlu0 %v1399, 32
        %v2061 = vpop.permute.xlu0 %2060
        %2062 = vrot.lane.b32.xlu0 %v1402, 32
        %v2063 = vpop.permute.xlu0 %2062
        %2064 = vrot.lane.b32.xlu0 %v1404, 32
        %v2065 = vpop.permute.xlu0 %2064
        %2066 = vrot.lane.b32.xlu0 %v1407, 32
        %v2067 = vpop.permute.xlu0 %2066
        %2068 = vrot.lane.b32.xlu0 %v1409, 32
        %v2069 = vpop.permute.xlu0 %2068
        %2070 = vrot.lane.b32.xlu0 %v1412, 32
        %v2071 = vpop.permute.xlu0 %2070
        %2072 = vrot.lane.b32.xlu0 %v1414, 32
        %v2073 = vpop.permute.xlu0 %2072
        %2074 = vrot.lane.b32.xlu0 %v1417, 32
        %v2075 = vpop.permute.xlu0 %2074
        %2076 = vrot.lane.b32.xlu0 %v1419, 32
        %v2077 = vpop.permute.xlu0 %2076
        %2078 = vrot.lane.b32.xlu0 %v1718, 32
        %v2079 = vpop.permute.xlu0 %2078
        %2080 = vrot.lane.b32.xlu0 %v1720, 32
        %v2081 = vpop.permute.xlu0 %2080
        %2082 = vrot.lane.b32.xlu0 %v2019, 32
        %v2083 = vpop.permute.xlu0 %2082
        %2084 = vrot.lane.b32.xlu0 %v2021, 32
        %v2085 = vpop.permute.xlu0 %2084
        %2150 = vrot.lane.b32.xlu0 %v1005, 36
        %v2151 = vpop.permute.xlu0 %2150
        %2152 = vrot.lane.b32.xlu0 %v1006, 36
        %v2153 = vpop.permute.xlu0 %2152
        %2154 = vrot.lane.b32.xlu0 %v1008, 36
        %v2155 = vpop.permute.xlu0 %2154
        %2156 = vrot.lane.b32.xlu0 %v1009, 36
        %v2157 = vpop.permute.xlu0 %2156
        %2158 = vrot.lane.b32.xlu0 %v1011, 36
        %v2159 = vpop.permute.xlu0 %2158
        %2160 = vrot.lane.b32.xlu0 %v1012, 36
        %v2161 = vpop.permute.xlu0 %2160
        %2162 = vrot.lane.b32.xlu0 %v1014, 36
        %v2163 = vpop.permute.xlu0 %2162
        %2164 = vrot.lane.b32.xlu0 %v1015, 36
        %v2165 = vpop.permute.xlu0 %2164
        %2166 = vrot.lane.b32.xlu0 %v1017, 36
        %v2167 = vpop.permute.xlu0 %2166
        %2168 = vrot.lane.b32.xlu0 %v1018, 36
        %v2169 = vpop.permute.xlu0 %2168
        %2170 = vrot.lane.b32.xlu0 %v1020, 36
        %v2171 = vpop.permute.xlu0 %2170
        %2172 = vrot.lane.b32.xlu0 %v1021, 36
        %v2173 = vpop.permute.xlu0 %2172
        %2174 = vrot.lane.b32.xlu0 %v1023, 36
        %v2175 = vpop.permute.xlu0 %2174
        %2176 = vrot.lane.b32.xlu0 %v1024, 36
        %v2177 = vpop.permute.xlu0 %2176
        %2178 = vrot.lane.b32.xlu0 %v1026, 36
        %v2179 = vpop.permute.xlu0 %2178
        %2180 = vrot.lane.b32.xlu0 %v1027, 36
        %v2181 = vpop.permute.xlu0 %2180
        %2182 = vrot.lane.b32.xlu0 %v1029, 36
        %v2183 = vpop.permute.xlu0 %2182
        %2184 = vrot.lane.b32.xlu0 %v1030, 36
        %v2185 = vpop.permute.xlu0 %2184
        %2186 = vrot.lane.b32.xlu0 %v1032, 36
        %v2187 = vpop.permute.xlu0 %2186
        %2188 = vrot.lane.b32.xlu0 %v1033, 36
        %v2189 = vpop.permute.xlu0 %2188
        %2190 = vrot.lane.b32.xlu0 %v1035, 36
        %v2191 = vpop.permute.xlu0 %2190
        %2192 = vrot.lane.b32.xlu0 %v1036, 36
        %v2193 = vpop.permute.xlu0 %2192
        %2194 = vrot.lane.b32.xlu0 %v1038, 36
        %v2195 = vpop.permute.xlu0 %2194
        %2196 = vrot.lane.b32.xlu0 %v1039, 36
        %v2197 = vpop.permute.xlu0 %2196
        %2198 = vrot.lane.b32.xlu0 %v1041, 36
        %v2199 = vpop.permute.xlu0 %2198
        %2200 = vrot.lane.b32.xlu0 %v1042, 36
        %v2201 = vpop.permute.xlu0 %2200
        %2202 = vrot.lane.b32.xlu0 %v1044, 36
        %v2203 = vpop.permute.xlu0 %2202
        %2204 = vrot.lane.b32.xlu0 %v1045, 36
        %v2205 = vpop.permute.xlu0 %2204
        %2206 = vrot.lane.b32.xlu0 %v1047, 36
        %v2207 = vpop.permute.xlu0 %2206
        %2208 = vrot.lane.b32.xlu0 %v1048, 36
        %v2209 = vpop.permute.xlu0 %2208
        %2210 = vrot.lane.b32.xlu0 %v1050, 36
        %v2211 = vpop.permute.xlu0 %2210
        %2212 = vrot.lane.b32.xlu0 %v1051, 36
        %v2213 = vpop.permute.xlu0 %2212
        %v2262 = vrot.slane %v1005, 1
        %v2263 = vrot.slane %v1006, 1
        %v2264 = vsel %vm1162, %v2262, %v2263
        %v2265 = vrot.slane %v1007, 1
        %v2266 = vsel %vm1162, %v2263, %v2265
        %v2267 = vrot.slane %v1008, 1
        %v2268 = vrot.slane %v1009, 1
        %v2269 = vsel %vm1162, %v2267, %v2268
        %v2270 = vrot.slane %v1010, 1
        %v2271 = vsel %vm1162, %v2268, %v2270
        %v2272 = vrot.slane %v1011, 1
        %v2273 = vrot.slane %v1012, 1
        %v2274 = vsel %vm1162, %v2272, %v2273
        %v2275 = vrot.slane %v1013, 1
        %v2276 = vsel %vm1162, %v2273, %v2275
        %v2277 = vrot.slane %v1014, 1
        %v2278 = vrot.slane %v1015, 1
        %v2279 = vsel %vm1162, %v2277, %v2278
        %v2280 = vrot.slane %v1016, 1
        %v2281 = vsel %vm1162, %v2278, %v2280
        %v2282 = vrot.slane %v1017, 1
        %v2283 = vrot.slane %v1018, 1
        %v2284 = vsel %vm1162, %v2282, %v2283
        %v2285 = vrot.slane %v1019, 1
        %v2286 = vsel %vm1162, %v2283, %v2285
        %v2287 = vrot.slane %v1020, 1
        %v2288 = vrot.slane %v1021, 1
        %v2289 = vsel %vm1162, %v2287, %v2288
        %v2290 = vrot.slane %v1022, 1
        %v2291 = vsel %vm1162, %v2288, %v2290
        %v2292 = vrot.slane %v1023, 1
        %v2293 = vrot.slane %v1024, 1
        %v2294 = vsel %vm1162, %v2292, %v2293
        %v2295 = vrot.slane %v1025, 1
        %v2296 = vsel %vm1162, %v2293, %v2295
        %v2297 = vrot.slane %v1026, 1
        %v2298 = vrot.slane %v1027, 1
        %v2299 = vsel %vm1162, %v2297, %v2298
        %v2300 = vrot.slane %v1028, 1
        %v2301 = vsel %vm1162, %v2298, %v2300
        %v2302 = vrot.slane %v1029, 1
        %v2303 = vrot.slane %v1030, 1
        %v2304 = vsel %vm1162, %v2302, %v2303
        %v2305 = vrot.slane %v1031, 1
        %v2306 = vsel %vm1162, %v2303, %v2305
        %v2307 = vrot.slane %v1032, 1
        %v2308 = vrot.slane %v1033, 1
        %v2309 = vsel %vm1162, %v2307, %v2308
        %v2310 = vrot.slane %v1034, 1
        %v2311 = vsel %vm1162, %v2308, %v2310
        %v2312 = vrot.slane %v1035, 1
        %v2313 = vrot.slane %v1036, 1
        %v2314 = vsel %vm1162, %v2312, %v2313
        %v2315 = vrot.slane %v1037, 1
        %v2316 = vsel %vm1162, %v2313, %v2315
        %v2317 = vrot.slane %v1038, 1
        %v2318 = vrot.slane %v1039, 1
        %v2319 = vsel %vm1162, %v2317, %v2318
        %v2320 = vrot.slane %v1040, 1
        %v2321 = vsel %vm1162, %v2318, %v2320
        %v2322 = vrot.slane %v1041, 1
        %v2323 = vrot.slane %v1042, 1
        %v2324 = vsel %vm1162, %v2322, %v2323
        %v2325 = vrot.slane %v1043, 1
        %v2326 = vsel %vm1162, %v2323, %v2325
        %v2327 = vrot.slane %v1044, 1
        %v2328 = vrot.slane %v1045, 1
        %v2329 = vsel %vm1162, %v2327, %v2328
        %v2330 = vrot.slane %v1046, 1
        %v2331 = vsel %vm1162, %v2328, %v2330
        %v2332 = vrot.slane %v1047, 1
        %v2333 = vrot.slane %v1048, 1
        %v2334 = vsel %vm1162, %v2332, %v2333
        %v2335 = vrot.slane %v1049, 1
        %v2336 = vsel %vm1162, %v2333, %v2335
        %v2337 = vrot.slane %v1050, 1
        %v2338 = vrot.slane %v1051, 1
        %v2339 = vsel %vm1162, %v2337, %v2338
        %v2340 = vrot.slane %v1052, 1
        %v2341 = vsel %vm1162, %v2338, %v2340
        %2342 = vrot.lane.b32.xlu0 %v2264, 40
        %v2343 = vpop.permute.xlu0 %2342
        %2344 = vrot.lane.b32.xlu0 %v2266, 40
        %v2345 = vpop.permute.xlu0 %2344
        %2346 = vrot.lane.b32.xlu0 %v2269, 40
        %v2347 = vpop.permute.xlu0 %2346
        %2348 = vrot.lane.b32.xlu0 %v2271, 40
        %v2349 = vpop.permute.xlu0 %2348
        %2350 = vrot.lane.b32.xlu0 %v2274, 40
        %v2351 = vpop.permute.xlu0 %2350
        %2352 = vrot.lane.b32.xlu0 %v2276, 40
        %v2353 = vpop.permute.xlu0 %2352
        %2354 = vrot.lane.b32.xlu0 %v2279, 40
        %v2355 = vpop.permute.xlu0 %2354
        %2356 = vrot.lane.b32.xlu0 %v2281, 40
        %v2357 = vpop.permute.xlu0 %2356
        %2358 = vrot.lane.b32.xlu0 %v2284, 40
        %v2359 = vpop.permute.xlu0 %2358
        %2360 = vrot.lane.b32.xlu0 %v2286, 40
        %v2361 = vpop.permute.xlu0 %2360
        %2362 = vrot.lane.b32.xlu0 %v2289, 40
        %v2363 = vpop.permute.xlu0 %2362
        %2364 = vrot.lane.b32.xlu0 %v2291, 40
        %v2365 = vpop.permute.xlu0 %2364
        %2366 = vrot.lane.b32.xlu0 %v2294, 40
        %v2367 = vpop.permute.xlu0 %2366
        %2368 = vrot.lane.b32.xlu0 %v2296, 40
        %v2369 = vpop.permute.xlu0 %2368
        %2370 = vrot.lane.b32.xlu0 %v2299, 40
        %v2371 = vpop.permute.xlu0 %2370
        %2372 = vrot.lane.b32.xlu0 %v2301, 40
        %v2373 = vpop.permute.xlu0 %2372
        %2374 = vrot.lane.b32.xlu0 %v2304, 40
        %v2375 = vpop.permute.xlu0 %2374
        %2376 = vrot.lane.b32.xlu0 %v2306, 40
        %v2377 = vpop.permute.xlu0 %2376
        %2378 = vrot.lane.b32.xlu0 %v2309, 40
        %v2379 = vpop.permute.xlu0 %2378
        %2380 = vrot.lane.b32.xlu0 %v2311, 40
        %v2381 = vpop.permute.xlu0 %2380
        %2382 = vrot.lane.b32.xlu0 %v2314, 40
        %v2383 = vpop.permute.xlu0 %2382
        %2384 = vrot.lane.b32.xlu0 %v2316, 40
        %v2385 = vpop.permute.xlu0 %2384
        %2386 = vrot.lane.b32.xlu0 %v2319, 40
        %v2387 = vpop.permute.xlu0 %2386
        %2388 = vrot.lane.b32.xlu0 %v2321, 40
        %v2389 = vpop.permute.xlu0 %2388
        %2390 = vrot.lane.b32.xlu0 %v2324, 40
        %v2391 = vpop.permute.xlu0 %2390
        %2392 = vrot.lane.b32.xlu0 %v2326, 40
        %v2393 = vpop.permute.xlu0 %2392
        %2394 = vrot.lane.b32.xlu0 %v2329, 40
        %v2395 = vpop.permute.xlu0 %2394
        %2396 = vrot.lane.b32.xlu0 %v2331, 40
        %v2397 = vpop.permute.xlu0 %2396
        %2398 = vrot.lane.b32.xlu0 %v2334, 40
        %v2399 = vpop.permute.xlu0 %2398
        %2400 = vrot.lane.b32.xlu0 %v2336, 40
        %v2401 = vpop.permute.xlu0 %2400
        %2402 = vrot.lane.b32.xlu0 %v2339, 40
        %v2403 = vpop.permute.xlu0 %2402
        %2404 = vrot.lane.b32.xlu0 %v2341, 40
        %v2405 = vpop.permute.xlu0 %2404
        %v2438 = vrot.slane %v1005, 2
        %v2439 = vrot.slane %v1006, 2
        %v2440 = vsel %vm1339, %v2438, %v2439
        %v2441 = vrot.slane %v1007, 2
        %v2442 = vsel %vm1339, %v2439, %v2441
        %v2443 = vrot.slane %v1008, 2
        %v2444 = vrot.slane %v1009, 2
        %v2445 = vsel %vm1339, %v2443, %v2444
        %v2446 = vrot.slane %v1010, 2
        %v2447 = vsel %vm1339, %v2444, %v2446
        %v2448 = vrot.slane %v1011, 2
        %v2449 = vrot.slane %v1012, 2
        %v2450 = vsel %vm1339, %v2448, %v2449
        %v2451 = vrot.slane %v1013, 2
        %v2452 = vsel %vm1339, %v2449, %v2451
        %v2453 = vrot.slane %v1014, 2
        %v2454 = vrot.slane %v1015, 2
        %v2455 = vsel %vm1339, %v2453, %v2454
        %v2456 = vrot.slane %v1016, 2
        %v2457 = vsel %vm1339, %v2454, %v2456
        %v2458 = vrot.slane %v1017, 2
        %v2459 = vrot.slane %v1018, 2
        %v2460 = vsel %vm1339, %v2458, %v2459
        %v2461 = vrot.slane %v1019, 2
        %v2462 = vsel %vm1339, %v2459, %v2461
        %v2463 = vrot.slane %v1020, 2
        %v2464 = vrot.slane %v1021, 2
        %v2465 = vsel %vm1339, %v2463, %v2464
        %v2466 = vrot.slane %v1022, 2
        %v2467 = vsel %vm1339, %v2464, %v2466
        %v2468 = vrot.slane %v1023, 2
        %v2469 = vrot.slane %v1024, 2
        %v2470 = vsel %vm1339, %v2468, %v2469
        %v2471 = vrot.slane %v1025, 2
        %v2472 = vsel %vm1339, %v2469, %v2471
        %v2473 = vrot.slane %v1026, 2
        %v2474 = vrot.slane %v1027, 2
        %v2475 = vsel %vm1339, %v2473, %v2474
        %v2476 = vrot.slane %v1028, 2
        %v2477 = vsel %vm1339, %v2474, %v2476
        %v2478 = vrot.slane %v1029, 2
        %v2479 = vrot.slane %v1030, 2
        %v2480 = vsel %vm1339, %v2478, %v2479
        %v2481 = vrot.slane %v1031, 2
        %v2482 = vsel %vm1339, %v2479, %v2481
        %v2483 = vrot.slane %v1032, 2
        %v2484 = vrot.slane %v1033, 2
        %v2485 = vsel %vm1339, %v2483, %v2484
        %v2486 = vrot.slane %v1034, 2
        %v2487 = vsel %vm1339, %v2484, %v2486
        %v2488 = vrot.slane %v1035, 2
        %v2489 = vrot.slane %v1036, 2
        %v2490 = vsel %vm1339, %v2488, %v2489
        %v2491 = vrot.slane %v1037, 2
        %v2492 = vsel %vm1339, %v2489, %v2491
        %v2493 = vrot.slane %v1038, 2
        %v2494 = vrot.slane %v1039, 2
        %v2495 = vsel %vm1339, %v2493, %v2494
        %v2496 = vrot.slane %v1040, 2
        %v2497 = vsel %vm1339, %v2494, %v2496
        %v2498 = vrot.slane %v1041, 2
        %v2499 = vrot.slane %v1042, 2
        %v2500 = vsel %vm1339, %v2498, %v2499
        %v2501 = vrot.slane %v1043, 2
        %v2502 = vsel %vm1339, %v2499, %v2501
        %v2503 = vrot.slane %v1044, 2
        %v2504 = vrot.slane %v1045, 2
        %v2505 = vsel %vm1339, %v2503, %v2504
        %v2506 = vrot.slane %v1046, 2
        %v2507 = vsel %vm1339, %v2504, %v2506
        %v2508 = vrot.slane %v1047, 2
        %v2509 = vrot.slane %v1048, 2
        %v2510 = vsel %vm1339, %v2508, %v2509
        %v2511 = vrot.slane %v1049, 2
        %v2512 = vsel %vm1339, %v2509, %v2511
        %v2513 = vrot.slane %v1050, 2
        %v2514 = vrot.slane %v1051, 2
        %v2515 = vsel %vm1339, %v2513, %v2514
        %v2516 = vrot.slane %v1052, 2
        %v2517 = vsel %vm1339, %v2514, %v2516
        %2518 = vrot.lane.b32.xlu0 %v2440, 44
        %v2519 = vpop.permute.xlu0 %2518
        %2520 = vrot.lane.b32.xlu0 %v2442, 44
        %v2521 = vpop.permute.xlu0 %2520
        %2522 = vrot.lane.b32.xlu0 %v2445, 44
        %v2523 = vpop.permute.xlu0 %2522
        %2524 = vrot.lane.b32.xlu0 %v2447, 44
        %v2525 = vpop.permute.xlu0 %2524
        %2526 = vrot.lane.b32.xlu0 %v2450, 44
        %v2527 = vpop.permute.xlu0 %2526
        %2528 = vrot.lane.b32.xlu0 %v2452, 44
        %v2529 = vpop.permute.xlu0 %2528
        %2530 = vrot.lane.b32.xlu0 %v2455, 44
        %v2531 = vpop.permute.xlu0 %2530
        %2532 = vrot.lane.b32.xlu0 %v2457, 44
        %v2533 = vpop.permute.xlu0 %2532
        %2534 = vrot.lane.b32.xlu0 %v2460, 44
        %v2535 = vpop.permute.xlu0 %2534
        %2536 = vrot.lane.b32.xlu0 %v2462, 44
        %v2537 = vpop.permute.xlu0 %2536
        %2538 = vrot.lane.b32.xlu0 %v2465, 44
        %v2539 = vpop.permute.xlu0 %2538
        %2540 = vrot.lane.b32.xlu0 %v2467, 44
        %v2541 = vpop.permute.xlu0 %2540
        %2542 = vrot.lane.b32.xlu0 %v2470, 44
        %v2543 = vpop.permute.xlu0 %2542
        %2544 = vrot.lane.b32.xlu0 %v2472, 44
        %v2545 = vpop.permute.xlu0 %2544
        %2546 = vrot.lane.b32.xlu0 %v2475, 44
        %v2547 = vpop.permute.xlu0 %2546
        %2548 = vrot.lane.b32.xlu0 %v2477, 44
        %v2549 = vpop.permute.xlu0 %2548
        %2550 = vrot.lane.b32.xlu0 %v2480, 44
        %v2551 = vpop.permute.xlu0 %2550
        %2552 = vrot.lane.b32.xlu0 %v2482, 44
        %v2553 = vpop.permute.xlu0 %2552
        %2554 = vrot.lane.b32.xlu0 %v2485, 44
        %v2555 = vpop.permute.xlu0 %2554
        %2556 = vrot.lane.b32.xlu0 %v2487, 44
        %v2557 = vpop.permute.xlu0 %2556
        %2558 = vrot.lane.b32.xlu0 %v2490, 44
        %v2559 = vpop.permute.xlu0 %2558
        %2560 = vrot.lane.b32.xlu0 %v2492, 44
        %v2561 = vpop.permute.xlu0 %2560
        %2562 = vrot.lane.b32.xlu0 %v2495, 44
        %v2563 = vpop.permute.xlu0 %2562
        %2564 = vrot.lane.b32.xlu0 %v2497, 44
        %v2565 = vpop.permute.xlu0 %2564
        %2566 = vrot.lane.b32.xlu0 %v2500, 44
        %v2567 = vpop.permute.xlu0 %2566
        %2568 = vrot.lane.b32.xlu0 %v2502, 44
        %v2569 = vpop.permute.xlu0 %2568
        %2570 = vrot.lane.b32.xlu0 %v2505, 44
        %v2571 = vpop.permute.xlu0 %2570
        %2572 = vrot.lane.b32.xlu0 %v2507, 44
        %v2573 = vpop.permute.xlu0 %2572
        %2574 = vrot.lane.b32.xlu0 %v2510, 44
        %v2575 = vpop.permute.xlu0 %2574
        %2576 = vrot.lane.b32.xlu0 %v2512, 44
        %v2577 = vpop.permute.xlu0 %2576
        %2578 = vrot.lane.b32.xlu0 %v2515, 44
        %v2579 = vpop.permute.xlu0 %2578
        %2580 = vrot.lane.b32.xlu0 %v2517, 44
        %v2581 = vpop.permute.xlu0 %2580
        %2616 = vrot.lane.b32.xlu0 %v1008, 48
        %v2617 = vpop.permute.xlu0 %2616
        %2618 = vrot.lane.b32.xlu0 %v1009, 48
        %v2619 = vpop.permute.xlu0 %2618
        %2620 = vrot.lane.b32.xlu0 %v1011, 48
        %v2621 = vpop.permute.xlu0 %2620
        %2622 = vrot.lane.b32.xlu0 %v1012, 48
        %v2623 = vpop.permute.xlu0 %2622
        %2624 = vrot.lane.b32.xlu0 %v1014, 48
        %v2625 = vpop.permute.xlu0 %2624
        %2626 = vrot.lane.b32.xlu0 %v1015, 48
        %v2627 = vpop.permute.xlu0 %2626
        %2628 = vrot.lane.b32.xlu0 %v1017, 48
        %v2629 = vpop.permute.xlu0 %2628
        %2630 = vrot.lane.b32.xlu0 %v1018, 48
        %v2631 = vpop.permute.xlu0 %2630
        %2632 = vrot.lane.b32.xlu0 %v1020, 48
        %v2633 = vpop.permute.xlu0 %2632
        %2634 = vrot.lane.b32.xlu0 %v1021, 48
        %v2635 = vpop.permute.xlu0 %2634
        %2636 = vrot.lane.b32.xlu0 %v1023, 48
        %v2637 = vpop.permute.xlu0 %2636
        %2638 = vrot.lane.b32.xlu0 %v1024, 48
        %v2639 = vpop.permute.xlu0 %2638
        %2640 = vrot.lane.b32.xlu0 %v1026, 48
        %v2641 = vpop.permute.xlu0 %2640
        %2642 = vrot.lane.b32.xlu0 %v1027, 48
        %v2643 = vpop.permute.xlu0 %2642
        %2644 = vrot.lane.b32.xlu0 %v1029, 48
        %v2645 = vpop.permute.xlu0 %2644
        %2646 = vrot.lane.b32.xlu0 %v1030, 48
        %v2647 = vpop.permute.xlu0 %2646
        %2648 = vrot.lane.b32.xlu0 %v1032, 48
        %v2649 = vpop.permute.xlu0 %2648
        %2650 = vrot.lane.b32.xlu0 %v1033, 48
        %v2651 = vpop.permute.xlu0 %2650
        %2652 = vrot.lane.b32.xlu0 %v1035, 48
        %v2653 = vpop.permute.xlu0 %2652
        %2654 = vrot.lane.b32.xlu0 %v1036, 48
        %v2655 = vpop.permute.xlu0 %2654
        %2656 = vrot.lane.b32.xlu0 %v1038, 48
        %v2657 = vpop.permute.xlu0 %2656
        %2658 = vrot.lane.b32.xlu0 %v1039, 48
        %v2659 = vpop.permute.xlu0 %2658
        %2660 = vrot.lane.b32.xlu0 %v1041, 48
        %v2661 = vpop.permute.xlu0 %2660
        %2662 = vrot.lane.b32.xlu0 %v1042, 48
        %v2663 = vpop.permute.xlu0 %2662
        %2664 = vrot.lane.b32.xlu0 %v1044, 48
        %v2665 = vpop.permute.xlu0 %2664
        %2666 = vrot.lane.b32.xlu0 %v1045, 48
        %v2667 = vpop.permute.xlu0 %2666
        %2668 = vrot.lane.b32.xlu0 %v1047, 48
        %v2669 = vpop.permute.xlu0 %2668
        %2670 = vrot.lane.b32.xlu0 %v1048, 48
        %v2671 = vpop.permute.xlu0 %2670
        %2672 = vrot.lane.b32.xlu0 %v1050, 48
        %v2673 = vpop.permute.xlu0 %2672
        %2674 = vrot.lane.b32.xlu0 %v1051, 48
        %v2675 = vpop.permute.xlu0 %2674
        %2676 = vrot.lane.b32.xlu0 %v1053, 48
        %v2677 = vpop.permute.xlu0 %2676
        %2678 = vrot.lane.b32.xlu0 %v1054, 48
        %v2679 = vpop.permute.xlu0 %2678
        %v2713 = vrot.slane %v1053, 1
        %v2714 = vrot.slane %v1054, 1
        %v2715 = vsel %vm1162, %v2713, %v2714
        %v2716 = vrot.slane %v1055, 1
        %v2717 = vsel %vm1162, %v2714, %v2716
        %2718 = vrot.lane.b32.xlu0 %v2269, 52
        %v2719 = vpop.permute.xlu0 %2718
        %2720 = vrot.lane.b32.xlu0 %v2271, 52
        %v2721 = vpop.permute.xlu0 %2720
        %2722 = vrot.lane.b32.xlu0 %v2274, 52
        %v2723 = vpop.permute.xlu0 %2722
        %2724 = vrot.lane.b32.xlu0 %v2276, 52
        %v2725 = vpop.permute.xlu0 %2724
        %2726 = vrot.lane.b32.xlu0 %v2279, 52
        %v2727 = vpop.permute.xlu0 %2726
        %2728 = vrot.lane.b32.xlu0 %v2281, 52
        %v2729 = vpop.permute.xlu0 %2728
        %2730 = vrot.lane.b32.xlu0 %v2284, 52
        %v2731 = vpop.permute.xlu0 %2730
        %2732 = vrot.lane.b32.xlu0 %v2286, 52
        %v2733 = vpop.permute.xlu0 %2732
        %2734 = vrot.lane.b32.xlu0 %v2289, 52
        %v2735 = vpop.permute.xlu0 %2734
        %2736 = vrot.lane.b32.xlu0 %v2291, 52
        %v2737 = vpop.permute.xlu0 %2736
        %2738 = vrot.lane.b32.xlu0 %v2294, 52
        %v2739 = vpop.permute.xlu0 %2738
        %2740 = vrot.lane.b32.xlu0 %v2296, 52
        %v2741 = vpop.permute.xlu0 %2740
        %2742 = vrot.lane.b32.xlu0 %v2299, 52
        %v2743 = vpop.permute.xlu0 %2742
        %2744 = vrot.lane.b32.xlu0 %v2301, 52
        %v2745 = vpop.permute.xlu0 %2744
        %2746 = vrot.lane.b32.xlu0 %v2304, 52
        %v2747 = vpop.permute.xlu0 %2746
        %2748 = vrot.lane.b32.xlu0 %v2306, 52
        %v2749 = vpop.permute.xlu0 %2748
        %2750 = vrot.lane.b32.xlu0 %v2309, 52
        %v2751 = vpop.permute.xlu0 %2750
        %2752 = vrot.lane.b32.xlu0 %v2311, 52
        %v2753 = vpop.permute.xlu0 %2752
        %2754 = vrot.lane.b32.xlu0 %v2314, 52
        %v2755 = vpop.permute.xlu0 %2754
        %2756 = vrot.lane.b32.xlu0 %v2316, 52
        %v2757 = vpop.permute.xlu0 %2756
        %2758 = vrot.lane.b32.xlu0 %v2319, 52
        %v2759 = vpop.permute.xlu0 %2758
        %2760 = vrot.lane.b32.xlu0 %v2321, 52
        %v2761 = vpop.permute.xlu0 %2760
        %2762 = vrot.lane.b32.xlu0 %v2324, 52
        %v2763 = vpop.permute.xlu0 %2762
        %2764 = vrot.lane.b32.xlu0 %v2326, 52
        %v2765 = vpop.permute.xlu0 %2764
        %2766 = vrot.lane.b32.xlu0 %v2329, 52
        %v2767 = vpop.permute.xlu0 %2766
        %2768 = vrot.lane.b32.xlu0 %v2331, 52
        %v2769 = vpop.permute.xlu0 %2768
        %2770 = vrot.lane.b32.xlu0 %v2334, 52
        %v2771 = vpop.permute.xlu0 %2770
        %2772 = vrot.lane.b32.xlu0 %v2336, 52
        %v2773 = vpop.permute.xlu0 %2772
        %2774 = vrot.lane.b32.xlu0 %v2339, 52
        %v2775 = vpop.permute.xlu0 %2774
        %2776 = vrot.lane.b32.xlu0 %v2341, 52
        %v2777 = vpop.permute.xlu0 %2776
        %2778 = vrot.lane.b32.xlu0 %v2715, 52
        %v2779 = vpop.permute.xlu0 %2778
        %2780 = vrot.lane.b32.xlu0 %v2717, 52
        %v2781 = vpop.permute.xlu0 %2780
        %v2814 = vrot.slane %v1053, 2
        %v2815 = vrot.slane %v1054, 2
        %v2816 = vsel %vm1339, %v2814, %v2815
        %v2817 = vrot.slane %v1055, 2
        %v2818 = vsel %vm1339, %v2815, %v2817
        %2819 = vrot.lane.b32.xlu0 %v2445, 56
        %v2820 = vpop.permute.xlu0 %2819
        %2821 = vrot.lane.b32.xlu0 %v2447, 56
        %v2822 = vpop.permute.xlu0 %2821
        %2823 = vrot.lane.b32.xlu0 %v2450, 56
        %v2824 = vpop.permute.xlu0 %2823
        %2825 = vrot.lane.b32.xlu0 %v2452, 56
        %v2826 = vpop.permute.xlu0 %2825
        %2827 = vrot.lane.b32.xlu0 %v2455, 56
        %v2828 = vpop.permute.xlu0 %2827
        %2829 = vrot.lane.b32.xlu0 %v2457, 56
        %v2830 = vpop.permute.xlu0 %2829
        %2831 = vrot.lane.b32.xlu0 %v2460, 56
        %v2832 = vpop.permute.xlu0 %2831
        %2833 = vrot.lane.b32.xlu0 %v2462, 56
        %v2834 = vpop.permute.xlu0 %2833
        %2835 = vrot.lane.b32.xlu0 %v2465, 56
        %v2836 = vpop.permute.xlu0 %2835
        %2837 = vrot.lane.b32.xlu0 %v2467, 56
        %v2838 = vpop.permute.xlu0 %2837
        %2839 = vrot.lane.b32.xlu0 %v2470, 56
        %v2840 = vpop.permute.xlu0 %2839
        %2841 = vrot.lane.b32.xlu0 %v2472, 56
        %v2842 = vpop.permute.xlu0 %2841
        %2843 = vrot.lane.b32.xlu0 %v2475, 56
        %v2844 = vpop.permute.xlu0 %2843
        %2845 = vrot.lane.b32.xlu0 %v2477, 56
        %v2846 = vpop.permute.xlu0 %2845
        %2847 = vrot.lane.b32.xlu0 %v2480, 56
        %v2848 = vpop.permute.xlu0 %2847
        %2849 = vrot.lane.b32.xlu0 %v2482, 56
        %v2850 = vpop.permute.xlu0 %2849
        %2851 = vrot.lane.b32.xlu0 %v2485, 56
        %v2852 = vpop.permute.xlu0 %2851
        %2853 = vrot.lane.b32.xlu0 %v2487, 56
        %v2854 = vpop.permute.xlu0 %2853
        %2855 = vrot.lane.b32.xlu0 %v2490, 56
        %v2856 = vpop.permute.xlu0 %2855
        %2857 = vrot.lane.b32.xlu0 %v2492, 56
        %v2858 = vpop.permute.xlu0 %2857
        %2859 = vrot.lane.b32.xlu0 %v2495, 56
        %v2860 = vpop.permute.xlu0 %2859
        %2861 = vrot.lane.b32.xlu0 %v2497, 56
        %v2862 = vpop.permute.xlu0 %2861
        %2863 = vrot.lane.b32.xlu0 %v2500, 56
        %v2864 = vpop.permute.xlu0 %2863
        %2865 = vrot.lane.b32.xlu0 %v2502, 56
        %v2866 = vpop.permute.xlu0 %2865
        %2867 = vrot.lane.b32.xlu0 %v2505, 56
        %v2868 = vpop.permute.xlu0 %2867
        %2869 = vrot.lane.b32.xlu0 %v2507, 56
        %v2870 = vpop.permute.xlu0 %2869
        %2871 = vrot.lane.b32.xlu0 %v2510, 56
        %v2872 = vpop.permute.xlu0 %2871
        %2873 = vrot.lane.b32.xlu0 %v2512, 56
        %v2874 = vpop.permute.xlu0 %2873
        %2875 = vrot.lane.b32.xlu0 %v2515, 56
        %v2876 = vpop.permute.xlu0 %2875
        %2877 = vrot.lane.b32.xlu0 %v2517, 56
        %v2878 = vpop.permute.xlu0 %2877
        %2879 = vrot.lane.b32.xlu0 %v2816, 56
        %v2880 = vpop.permute.xlu0 %2879
        %2881 = vrot.lane.b32.xlu0 %v2818, 56
        %v2882 = vpop.permute.xlu0 %2881
        %2917 = vrot.lane.b32.xlu0 %v1011, 60
        %v2918 = vpop.permute.xlu0 %2917
        %2919 = vrot.lane.b32.xlu0 %v1012, 60
        %v2920 = vpop.permute.xlu0 %2919
        %2921 = vrot.lane.b32.xlu0 %v1014, 60
        %v2922 = vpop.permute.xlu0 %2921
        %2923 = vrot.lane.b32.xlu0 %v1015, 60
        %v2924 = vpop.permute.xlu0 %2923
        %2925 = vrot.lane.b32.xlu0 %v1017, 60
        %v2926 = vpop.permute.xlu0 %2925
        %2927 = vrot.lane.b32.xlu0 %v1018, 60
        %v2928 = vpop.permute.xlu0 %2927
        %2929 = vrot.lane.b32.xlu0 %v1020, 60
        %v2930 = vpop.permute.xlu0 %2929
        %2931 = vrot.lane.b32.xlu0 %v1021, 60
        %v2932 = vpop.permute.xlu0 %2931
        %2933 = vrot.lane.b32.xlu0 %v1023, 60
        %v2934 = vpop.permute.xlu0 %2933
        %2935 = vrot.lane.b32.xlu0 %v1024, 60
        %v2936 = vpop.permute.xlu0 %2935
        %2937 = vrot.lane.b32.xlu0 %v1026, 60
        %v2938 = vpop.permute.xlu0 %2937
        %2939 = vrot.lane.b32.xlu0 %v1027, 60
        %v2940 = vpop.permute.xlu0 %2939
        %2941 = vrot.lane.b32.xlu0 %v1029, 60
        %v2942 = vpop.permute.xlu0 %2941
        %2943 = vrot.lane.b32.xlu0 %v1030, 60
        %v2944 = vpop.permute.xlu0 %2943
        %2945 = vrot.lane.b32.xlu0 %v1032, 60
        %v2946 = vpop.permute.xlu0 %2945
        %2947 = vrot.lane.b32.xlu0 %v1033, 60
        %v2948 = vpop.permute.xlu0 %2947
        %2949 = vrot.lane.b32.xlu0 %v1035, 60
        %v2950 = vpop.permute.xlu0 %2949
        %2951 = vrot.lane.b32.xlu0 %v1036, 60
        %v2952 = vpop.permute.xlu0 %2951
        %2953 = vrot.lane.b32.xlu0 %v1038, 60
        %v2954 = vpop.permute.xlu0 %2953
        %2955 = vrot.lane.b32.xlu0 %v1039, 60
        %v2956 = vpop.permute.xlu0 %2955
        %2957 = vrot.lane.b32.xlu0 %v1041, 60
        %v2958 = vpop.permute.xlu0 %2957
        %2959 = vrot.lane.b32.xlu0 %v1042, 60
        %v2960 = vpop.permute.xlu0 %2959
        %2961 = vrot.lane.b32.xlu0 %v1044, 60
        %v2962 = vpop.permute.xlu0 %2961
        %2963 = vrot.lane.b32.xlu0 %v1045, 60
        %v2964 = vpop.permute.xlu0 %2963
        %2965 = vrot.lane.b32.xlu0 %v1047, 60
        %v2966 = vpop.permute.xlu0 %2965
        %2967 = vrot.lane.b32.xlu0 %v1048, 60
        %v2968 = vpop.permute.xlu0 %2967
        %2969 = vrot.lane.b32.xlu0 %v1050, 60
        %v2970 = vpop.permute.xlu0 %2969
        %2971 = vrot.lane.b32.xlu0 %v1051, 60
        %v2972 = vpop.permute.xlu0 %2971
        %2973 = vrot.lane.b32.xlu0 %v1053, 60
        %v2974 = vpop.permute.xlu0 %2973
        %2975 = vrot.lane.b32.xlu0 %v1054, 60
        %v2976 = vpop.permute.xlu0 %2975
        %2977 = vrot.lane.b32.xlu0 %v1056, 60
        %v2978 = vpop.permute.xlu0 %2977
        %2979 = vrot.lane.b32.xlu0 %v1057, 60
        %v2980 = vpop.permute.xlu0 %2979
        %v3013 = vsel %vm687, %v950, %v1244
        %v3014 = vsel %vm687, %v951, %v1246
        %v3015 = vsel %vm687, %v953, %v1248
        %v3016 = vsel %vm687, %v954, %v1250
        %v3017 = vsel %vm687, %v956, %v1252
        %v3018 = vsel %vm687, %v957, %v1254
        %v3019 = vsel %vm687, %v959, %v1256
        %v3020 = vsel %vm687, %v960, %v1258
        %v3021 = vsel %vm687, %v962, %v1260
        %v3022 = vsel %vm687, %v963, %v1262
        %v3023 = vsel %vm687, %v965, %v1264
        %v3024 = vsel %vm687, %v966, %v1266
        %v3025 = vsel %vm687, %v968, %v1268
        %v3026 = vsel %vm687, %v969, %v1270
        %v3027 = vsel %vm687, %v971, %v1272
        %v3028 = vsel %vm687, %v972, %v1274
        %v3029 = vsel %vm687, %v974, %v1276
        %v3030 = vsel %vm687, %v975, %v1278
        %v3031 = vsel %vm687, %v977, %v1280
        %v3032 = vsel %vm687, %v978, %v1282
        %v3033 = vsel %vm687, %v980, %v1284
        %v3034 = vsel %vm687, %v981, %v1286
        %v3035 = vsel %vm687, %v983, %v1288
        %v3036 = vsel %vm687, %v984, %v1290
        %v3037 = vsel %vm687, %v986, %v1292
        %v3038 = vsel %vm687, %v987, %v1294
        %v3039 = vsel %vm687, %v989, %v1296
        %v3040 = vsel %vm687, %v990, %v1298
        %v3041 = vsel %vm687, %v992, %v1300
        %v3042 = vsel %vm687, %v993, %v1302
        %v3043 = vsel %vm687, %v995, %v1304
        %v3044 = vsel %vm687, %v996, %v1306
        %vm3045 = vcmask 64512
        %v3046 = vsel %vm3045, %v3013, %v1421
        %v3047 = vsel %vm3045, %v3014, %v1423
        %v3048 = vsel %vm3045, %v3015, %v1425
        %v3049 = vsel %vm3045, %v3016, %v1427
        %v3050 = vsel %vm3045, %v3017, %v1429
        %v3051 = vsel %vm3045, %v3018, %v1431
        %v3052 = vsel %vm3045, %v3019, %v1433
        %v3053 = vsel %vm3045, %v3020, %v1435
        %v3054 = vsel %vm3045, %v3021, %v1437
        %v3055 = vsel %vm3045, %v3022, %v1439
        %v3056 = vsel %vm3045, %v3023, %v1441
        %v3057 = vsel %vm3045, %v3024, %v1443
        %v3058 = vsel %vm3045, %v3025, %v1445
        %v3059 = vsel %vm3045, %v3026, %v1447
        %v3060 = vsel %vm3045, %v3027, %v1449
        %v3061 = vsel %vm3045, %v3028, %v1451
        %v3062 = vsel %vm3045, %v3029, %v1453
        %v3063 = vsel %vm3045, %v3030, %v1455
        %v3064 = vsel %vm3045, %v3031, %v1457
        %v3065 = vsel %vm3045, %v3032, %v1459
        %v3066 = vsel %vm3045, %v3033, %v1461
        %v3067 = vsel %vm3045, %v3034, %v1463
        %v3068 = vsel %vm3045, %v3035, %v1465
        %v3069 = vsel %vm3045, %v3036, %v1467
        %v3070 = vsel %vm3045, %v3037, %v1469
        %v3071 = vsel %vm3045, %v3038, %v1471
        %v3072 = vsel %vm3045, %v3039, %v1473
        %v3073 = vsel %vm3045, %v3040, %v1475
        %v3074 = vsel %vm3045, %v3041, %v1477
        %v3075 = vsel %vm3045, %v3042, %v1479
        %v3076 = vsel %vm3045, %v3043, %v1481
        %v3077 = vsel %vm3045, %v3044, %v1483
        %vm3078 = vcmask 97280
        %v3079 = vsel %vm3078, %v3046, %v1519
        %v3080 = vsel %vm3078, %v3047, %v1521
        %v3081 = vsel %vm3078, %v3048, %v1523
        %v3082 = vsel %vm3078, %v3049, %v1525
        %v3083 = vsel %vm3078, %v3050, %v1527
        %v3084 = vsel %vm3078, %v3051, %v1529
        %v3085 = vsel %vm3078, %v3052, %v1531
        %v3086 = vsel %vm3078, %v3053, %v1533
        %v3087 = vsel %vm3078, %v3054, %v1535
        %v3088 = vsel %vm3078, %v3055, %v1537
        %v3089 = vsel %vm3078, %v3056, %v1539
        %v3090 = vsel %vm3078, %v3057, %v1541
        %v3091 = vsel %vm3078, %v3058, %v1543
        %v3092 = vsel %vm3078, %v3059, %v1545
        %v3093 = vsel %vm3078, %v3060, %v1547
        %v3094 = vsel %vm3078, %v3061, %v1549
        %v3095 = vsel %vm3078, %v3062, %v1551
        %v3096 = vsel %vm3078, %v3063, %v1553
        %v3097 = vsel %vm3078, %v3064, %v1555
        %v3098 = vsel %vm3078, %v3065, %v1557
        %v3099 = vsel %vm3078, %v3066, %v1559
        %v3100 = vsel %vm3078, %v3067, %v1561
        %v3101 = vsel %vm3078, %v3068, %v1563
        %v3102 = vsel %vm3078, %v3069, %v1565
        %v3103 = vsel %vm3078, %v3070, %v1567
        %v3104 = vsel %vm3078, %v3071, %v1569
        %v3105 = vsel %vm3078, %v3072, %v1571
        %v3106 = vsel %vm3078, %v3073, %v1573
        %v3107 = vsel %vm3078, %v3074, %v1575
        %v3108 = vsel %vm3078, %v3075, %v1577
        %v3109 = vsel %vm3078, %v3076, %v1579
        %v3110 = vsel %vm3078, %v3077, %v1581
        %vm3111 = vcmask 130048
        %v3112 = vsel %vm3111, %v3079, %v1621
        %v3113 = vsel %vm3111, %v3080, %v1623
        %v3114 = vsel %vm3111, %v3081, %v1625
        %v3115 = vsel %vm3111, %v3082, %v1627
        %v3116 = vsel %vm3111, %v3083, %v1629
        %v3117 = vsel %vm3111, %v3084, %v1631
        %v3118 = vsel %vm3111, %v3085, %v1633
        %v3119 = vsel %vm3111, %v3086, %v1635
        %v3120 = vsel %vm3111, %v3087, %v1637
        %v3121 = vsel %vm3111, %v3088, %v1639
        %v3122 = vsel %vm3111, %v3089, %v1641
        %v3123 = vsel %vm3111, %v3090, %v1643
        %v3124 = vsel %vm3111, %v3091, %v1645
        %v3125 = vsel %vm3111, %v3092, %v1647
        %v3126 = vsel %vm3111, %v3093, %v1649
        %v3127 = vsel %vm3111, %v3094, %v1651
        %v3128 = vsel %vm3111, %v3095, %v1653
        %v3129 = vsel %vm3111, %v3096, %v1655
        %v3130 = vsel %vm3111, %v3097, %v1657
        %v3131 = vsel %vm3111, %v3098, %v1659
        %v3132 = vsel %vm3111, %v3099, %v1661
        %v3133 = vsel %vm3111, %v3100, %v1663
        %v3134 = vsel %vm3111, %v3101, %v1665
        %v3135 = vsel %vm3111, %v3102, %v1667
        %v3136 = vsel %vm3111, %v3103, %v1669
        %v3137 = vsel %vm3111, %v3104, %v1671
        %v3138 = vsel %vm3111, %v3105, %v1673
        %v3139 = vsel %vm3111, %v3106, %v1675
        %v3140 = vsel %vm3111, %v3107, %v1677
        %v3141 = vsel %vm3111, %v3108, %v1679
        %v3142 = vsel %vm3111, %v3109, %v1681
        %v3143 = vsel %vm3111, %v3110, %v1683
        %vm3144 = vcmask 162816
        %v3145 = vsel %vm3144, %v3112, %v1722
        %v3146 = vsel %vm3144, %v3113, %v1724
        %v3147 = vsel %vm3144, %v3114, %v1726
        %v3148 = vsel %vm3144, %v3115, %v1728
        %v3149 = vsel %vm3144, %v3116, %v1730
        %v3150 = vsel %vm3144, %v3117, %v1732
        %v3151 = vsel %vm3144, %v3118, %v1734
        %v3152 = vsel %vm3144, %v3119, %v1736
        %v3153 = vsel %vm3144, %v3120, %v1738
        %v3154 = vsel %vm3144, %v3121, %v1740
        %v3155 = vsel %vm3144, %v3122, %v1742
        %v3156 = vsel %vm3144, %v3123, %v1744
        %v3157 = vsel %vm3144, %v3124, %v1746
        %v3158 = vsel %vm3144, %v3125, %v1748
        %v3159 = vsel %vm3144, %v3126, %v1750
        %v3160 = vsel %vm3144, %v3127, %v1752
        %v3161 = vsel %vm3144, %v3128, %v1754
        %v3162 = vsel %vm3144, %v3129, %v1756
        %v3163 = vsel %vm3144, %v3130, %v1758
        %v3164 = vsel %vm3144, %v3131, %v1760
        %v3165 = vsel %vm3144, %v3132, %v1762
        %v3166 = vsel %vm3144, %v3133, %v1764
        %v3167 = vsel %vm3144, %v3134, %v1766
        %v3168 = vsel %vm3144, %v3135, %v1768
        %v3169 = vsel %vm3144, %v3136, %v1770
        %v3170 = vsel %vm3144, %v3137, %v1772
        %v3171 = vsel %vm3144, %v3138, %v1774
        %v3172 = vsel %vm3144, %v3139, %v1776
        %v3173 = vsel %vm3144, %v3140, %v1778
        %v3174 = vsel %vm3144, %v3141, %v1780
        %v3175 = vsel %vm3144, %v3142, %v1782
        %v3176 = vsel %vm3144, %v3143, %v1784
        %vm3177 = vcmask 195584
        %v3178 = vsel %vm3177, %v3145, %v1820
        %v3179 = vsel %vm3177, %v3146, %v1822
        %v3180 = vsel %vm3177, %v3147, %v1824
        %v3181 = vsel %vm3177, %v3148, %v1826
        %v3182 = vsel %vm3177, %v3149, %v1828
        %v3183 = vsel %vm3177, %v3150, %v1830
        %v3184 = vsel %vm3177, %v3151, %v1832
        %v3185 = vsel %vm3177, %v3152, %v1834
        %v3186 = vsel %vm3177, %v3153, %v1836
        %v3187 = vsel %vm3177, %v3154, %v1838
        %v3188 = vsel %vm3177, %v3155, %v1840
        %v3189 = vsel %vm3177, %v3156, %v1842
        %v3190 = vsel %vm3177, %v3157, %v1844
        %v3191 = vsel %vm3177, %v3158, %v1846
        %v3192 = vsel %vm3177, %v3159, %v1848
        %v3193 = vsel %vm3177, %v3160, %v1850
        %v3194 = vsel %vm3177, %v3161, %v1852
        %v3195 = vsel %vm3177, %v3162, %v1854
        %v3196 = vsel %vm3177, %v3163, %v1856
        %v3197 = vsel %vm3177, %v3164, %v1858
        %v3198 = vsel %vm3177, %v3165, %v1860
        %v3199 = vsel %vm3177, %v3166, %v1862
        %v3200 = vsel %vm3177, %v3167, %v1864
        %v3201 = vsel %vm3177, %v3168, %v1866
        %v3202 = vsel %vm3177, %v3169, %v1868
        %v3203 = vsel %vm3177, %v3170, %v1870
        %v3204 = vsel %vm3177, %v3171, %v1872
        %v3205 = vsel %vm3177, %v3172, %v1874
        %v3206 = vsel %vm3177, %v3173, %v1876
        %v3207 = vsel %vm3177, %v3174, %v1878
        %v3208 = vsel %vm3177, %v3175, %v1880
        %v3209 = vsel %vm3177, %v3176, %v1882
        %vm3210 = vcmask 228352
        %v3211 = vsel %vm3210, %v3178, %v1922
        %v3212 = vsel %vm3210, %v3179, %v1924
        %v3213 = vsel %vm3210, %v3180, %v1926
        %v3214 = vsel %vm3210, %v3181, %v1928
        %v3215 = vsel %vm3210, %v3182, %v1930
        %v3216 = vsel %vm3210, %v3183, %v1932
        %v3217 = vsel %vm3210, %v3184, %v1934
        %v3218 = vsel %vm3210, %v3185, %v1936
        %v3219 = vsel %vm3210, %v3186, %v1938
        %v3220 = vsel %vm3210, %v3187, %v1940
        %v3221 = vsel %vm3210, %v3188, %v1942
        %v3222 = vsel %vm3210, %v3189, %v1944
        %v3223 = vsel %vm3210, %v3190, %v1946
        %v3224 = vsel %vm3210, %v3191, %v1948
        %v3225 = vsel %vm3210, %v3192, %v1950
        %v3226 = vsel %vm3210, %v3193, %v1952
        %v3227 = vsel %vm3210, %v3194, %v1954
        %v3228 = vsel %vm3210, %v3195, %v1956
        %v3229 = vsel %vm3210, %v3196, %v1958
        %v3230 = vsel %vm3210, %v3197, %v1960
        %v3231 = vsel %vm3210, %v3198, %v1962
        %v3232 = vsel %vm3210, %v3199, %v1964
        %v3233 = vsel %vm3210, %v3200, %v1966
        %v3234 = vsel %vm3210, %v3201, %v1968
        %v3235 = vsel %vm3210, %v3202, %v1970
        %v3236 = vsel %vm3210, %v3203, %v1972
        %v3237 = vsel %vm3210, %v3204, %v1974
        %v3238 = vsel %vm3210, %v3205, %v1976
        %v3239 = vsel %vm3210, %v3206, %v1978
        %v3240 = vsel %vm3210, %v3207, %v1980
        %v3241 = vsel %vm3210, %v3208, %v1982
        %v3242 = vsel %vm3210, %v3209, %v1984
        %vm3243 = vcmask 261120
        %v3244 = vsel %vm3243, %v3211, %v2023
        %v3245 = vsel %vm3243, %v3212, %v2025
        %v3246 = vsel %vm3243, %v3213, %v2027
        %v3247 = vsel %vm3243, %v3214, %v2029
        %v3248 = vsel %vm3243, %v3215, %v2031
        %v3249 = vsel %vm3243, %v3216, %v2033
        %v3250 = vsel %vm3243, %v3217, %v2035
        %v3251 = vsel %vm3243, %v3218, %v2037
        %v3252 = vsel %vm3243, %v3219, %v2039
        %v3253 = vsel %vm3243, %v3220, %v2041
        %v3254 = vsel %vm3243, %v3221, %v2043
        %v3255 = vsel %vm3243, %v3222, %v2045
        %v3256 = vsel %vm3243, %v3223, %v2047
        %v3257 = vsel %vm3243, %v3224, %v2049
        %v3258 = vsel %vm3243, %v3225, %v2051
        %v3259 = vsel %vm3243, %v3226, %v2053
        %v3260 = vsel %vm3243, %v3227, %v2055
        %v3261 = vsel %vm3243, %v3228, %v2057
        %v3262 = vsel %vm3243, %v3229, %v2059
        %v3263 = vsel %vm3243, %v3230, %v2061
        %v3264 = vsel %vm3243, %v3231, %v2063
        %v3265 = vsel %vm3243, %v3232, %v2065
        %v3266 = vsel %vm3243, %v3233, %v2067
        %v3267 = vsel %vm3243, %v3234, %v2069
        %v3268 = vsel %vm3243, %v3235, %v2071
        %v3269 = vsel %vm3243, %v3236, %v2073
        %v3270 = vsel %vm3243, %v3237, %v2075
        %v3271 = vsel %vm3243, %v3238, %v2077
        %v3272 = vsel %vm3243, %v3239, %v2079
        %v3273 = vsel %vm3243, %v3240, %v2081
        %v3274 = vsel %vm3243, %v3241, %v2083
        %v3275 = vsel %vm3243, %v3242, %v2085
        %vm3276 = vcmask 293888
        %v3277 = vsel %vm3276, %v3244, %v2151
        %v3278 = vsel %vm3276, %v3245, %v2153
        %v3279 = vsel %vm3276, %v3246, %v2155
        %v3280 = vsel %vm3276, %v3247, %v2157
        %v3281 = vsel %vm3276, %v3248, %v2159
        %v3282 = vsel %vm3276, %v3249, %v2161
        %v3283 = vsel %vm3276, %v3250, %v2163
        %v3284 = vsel %vm3276, %v3251, %v2165
        %v3285 = vsel %vm3276, %v3252, %v2167
        %v3286 = vsel %vm3276, %v3253, %v2169
        %v3287 = vsel %vm3276, %v3254, %v2171
        %v3288 = vsel %vm3276, %v3255, %v2173
        %v3289 = vsel %vm3276, %v3256, %v2175
        %v3290 = vsel %vm3276, %v3257, %v2177
        %v3291 = vsel %vm3276, %v3258, %v2179
        %v3292 = vsel %vm3276, %v3259, %v2181
        %v3293 = vsel %vm3276, %v3260, %v2183
        %v3294 = vsel %vm3276, %v3261, %v2185
        %v3295 = vsel %vm3276, %v3262, %v2187
        %v3296 = vsel %vm3276, %v3263, %v2189
        %v3297 = vsel %vm3276, %v3264, %v2191
        %v3298 = vsel %vm3276, %v3265, %v2193
        %v3299 = vsel %vm3276, %v3266, %v2195
        %v3300 = vsel %vm3276, %v3267, %v2197
        %v3301 = vsel %vm3276, %v3268, %v2199
        %v3302 = vsel %vm3276, %v3269, %v2201
        %v3303 = vsel %vm3276, %v3270, %v2203
        %v3304 = vsel %vm3276, %v3271, %v2205
        %v3305 = vsel %vm3276, %v3272, %v2207
        %v3306 = vsel %vm3276, %v3273, %v2209
        %v3307 = vsel %vm3276, %v3274, %v2211
        %v3308 = vsel %vm3276, %v3275, %v2213
        %vm3309 = vcmask 326656
        %v3310 = vsel %vm3309, %v3277, %v2343
        %v3311 = vsel %vm3309, %v3278, %v2345
        %v3312 = vsel %vm3309, %v3279, %v2347
        %v3313 = vsel %vm3309, %v3280, %v2349
        %v3314 = vsel %vm3309, %v3281, %v2351
        %v3315 = vsel %vm3309, %v3282, %v2353
        %v3316 = vsel %vm3309, %v3283, %v2355
        %v3317 = vsel %vm3309, %v3284, %v2357
        %v3318 = vsel %vm3309, %v3285, %v2359
        %v3319 = vsel %vm3309, %v3286, %v2361
        %v3320 = vsel %vm3309, %v3287, %v2363
        %v3321 = vsel %vm3309, %v3288, %v2365
        %v3322 = vsel %vm3309, %v3289, %v2367
        %v3323 = vsel %vm3309, %v3290, %v2369
        %v3324 = vsel %vm3309, %v3291, %v2371
        %v3325 = vsel %vm3309, %v3292, %v2373
        %v3326 = vsel %vm3309, %v3293, %v2375
        %v3327 = vsel %vm3309, %v3294, %v2377
        %v3328 = vsel %vm3309, %v3295, %v2379
        %v3329 = vsel %vm3309, %v3296, %v2381
        %v3330 = vsel %vm3309, %v3297, %v2383
        %v3331 = vsel %vm3309, %v3298, %v2385
        %v3332 = vsel %vm3309, %v3299, %v2387
        %v3333 = vsel %vm3309, %v3300, %v2389
        %v3334 = vsel %vm3309, %v3301, %v2391
        %v3335 = vsel %vm3309, %v3302, %v2393
        %v3336 = vsel %vm3309, %v3303, %v2395
        %v3337 = vsel %vm3309, %v3304, %v2397
        %v3338 = vsel %vm3309, %v3305, %v2399
        %v3339 = vsel %vm3309, %v3306, %v2401
        %v3340 = vsel %vm3309, %v3307, %v2403
        %v3341 = vsel %vm3309, %v3308, %v2405
        %vm3342 = vcmask 359424
        %v3343 = vsel %vm3342, %v3310, %v2519
        %v3344 = vsel %vm3342, %v3311, %v2521
        %v3345 = vsel %vm3342, %v3312, %v2523
        %v3346 = vsel %vm3342, %v3313, %v2525
        %v3347 = vsel %vm3342, %v3314, %v2527
        %v3348 = vsel %vm3342, %v3315, %v2529
        %v3349 = vsel %vm3342, %v3316, %v2531
        %v3350 = vsel %vm3342, %v3317, %v2533
        %v3351 = vsel %vm3342, %v3318, %v2535
        %v3352 = vsel %vm3342, %v3319, %v2537
        %v3353 = vsel %vm3342, %v3320, %v2539
        %v3354 = vsel %vm3342, %v3321, %v2541
        %v3355 = vsel %vm3342, %v3322, %v2543
        %v3356 = vsel %vm3342, %v3323, %v2545
        %v3357 = vsel %vm3342, %v3324, %v2547
        %v3358 = vsel %vm3342, %v3325, %v2549
        %v3359 = vsel %vm3342, %v3326, %v2551
        %v3360 = vsel %vm3342, %v3327, %v2553
        %v3361 = vsel %vm3342, %v3328, %v2555
        %v3362 = vsel %vm3342, %v3329, %v2557
        %v3363 = vsel %vm3342, %v3330, %v2559
        %v3364 = vsel %vm3342, %v3331, %v2561
        %v3365 = vsel %vm3342, %v3332, %v2563
        %v3366 = vsel %vm3342, %v3333, %v2565
        %v3367 = vsel %vm3342, %v3334, %v2567
        %v3368 = vsel %vm3342, %v3335, %v2569
        %v3369 = vsel %vm3342, %v3336, %v2571
        %v3370 = vsel %vm3342, %v3337, %v2573
        %v3371 = vsel %vm3342, %v3338, %v2575
        %v3372 = vsel %vm3342, %v3339, %v2577
        %v3373 = vsel %vm3342, %v3340, %v2579
        %v3374 = vsel %vm3342, %v3341, %v2581
        %vm3375 = vcmask 392192
        %v3376 = vsel %vm3375, %v3343, %v2617
        %v3377 = vsel %vm3375, %v3344, %v2619
        %v3378 = vsel %vm3375, %v3345, %v2621
        %v3379 = vsel %vm3375, %v3346, %v2623
        %v3380 = vsel %vm3375, %v3347, %v2625
        %v3381 = vsel %vm3375, %v3348, %v2627
        %v3382 = vsel %vm3375, %v3349, %v2629
        %v3383 = vsel %vm3375, %v3350, %v2631
        %v3384 = vsel %vm3375, %v3351, %v2633
        %v3385 = vsel %vm3375, %v3352, %v2635
        %v3386 = vsel %vm3375, %v3353, %v2637
        %v3387 = vsel %vm3375, %v3354, %v2639
        %v3388 = vsel %vm3375, %v3355, %v2641
        %v3389 = vsel %vm3375, %v3356, %v2643
        %v3390 = vsel %vm3375, %v3357, %v2645
        %v3391 = vsel %vm3375, %v3358, %v2647
        %v3392 = vsel %vm3375, %v3359, %v2649
        %v3393 = vsel %vm3375, %v3360, %v2651
        %v3394 = vsel %vm3375, %v3361, %v2653
        %v3395 = vsel %vm3375, %v3362, %v2655
        %v3396 = vsel %vm3375, %v3363, %v2657
        %v3397 = vsel %vm3375, %v3364, %v2659
        %v3398 = vsel %vm3375, %v3365, %v2661
        %v3399 = vsel %vm3375, %v3366, %v2663
        %v3400 = vsel %vm3375, %v3367, %v2665
        %v3401 = vsel %vm3375, %v3368, %v2667
        %v3402 = vsel %vm3375, %v3369, %v2669
        %v3403 = vsel %vm3375, %v3370, %v2671
        %v3404 = vsel %vm3375, %v3371, %v2673
        %v3405 = vsel %vm3375, %v3372, %v2675
        %v3406 = vsel %vm3375, %v3373, %v2677
        %v3407 = vsel %vm3375, %v3374, %v2679
        %vm3408 = vcmask 424960
        %v3409 = vsel %vm3408, %v3376, %v2719
        %v3410 = vsel %vm3408, %v3377, %v2721
        %v3411 = vsel %vm3408, %v3378, %v2723
        %v3412 = vsel %vm3408, %v3379, %v2725
        %v3413 = vsel %vm3408, %v3380, %v2727
        %v3414 = vsel %vm3408, %v3381, %v2729
        %v3415 = vsel %vm3408, %v3382, %v2731
        %v3416 = vsel %vm3408, %v3383, %v2733
        %v3417 = vsel %vm3408, %v3384, %v2735
        %v3418 = vsel %vm3408, %v3385, %v2737
        %v3419 = vsel %vm3408, %v3386, %v2739
        %v3420 = vsel %vm3408, %v3387, %v2741
        %v3421 = vsel %vm3408, %v3388, %v2743
        %v3422 = vsel %vm3408, %v3389, %v2745
        %v3423 = vsel %vm3408, %v3390, %v2747
        %v3424 = vsel %vm3408, %v3391, %v2749
        %v3425 = vsel %vm3408, %v3392, %v2751
        %v3426 = vsel %vm3408, %v3393, %v2753
        %v3427 = vsel %vm3408, %v3394, %v2755
        %v3428 = vsel %vm3408, %v3395, %v2757
        %v3429 = vsel %vm3408, %v3396, %v2759
        %v3430 = vsel %vm3408, %v3397, %v2761
        %v3431 = vsel %vm3408, %v3398, %v2763
        %v3432 = vsel %vm3408, %v3399, %v2765
        %v3433 = vsel %vm3408, %v3400, %v2767
        %v3434 = vsel %vm3408, %v3401, %v2769
        %v3435 = vsel %vm3408, %v3402, %v2771
        %v3436 = vsel %vm3408, %v3403, %v2773
        %v3437 = vsel %vm3408, %v3404, %v2775
        %v3438 = vsel %vm3408, %v3405, %v2777
        %v3439 = vsel %vm3408, %v3406, %v2779
        %v3440 = vsel %vm3408, %v3407, %v2781
        %vm3441 = vcmask 457728
        %v3442 = vsel %vm3441, %v3409, %v2820
        %v3443 = vsel %vm3441, %v3410, %v2822
        %v3444 = vsel %vm3441, %v3411, %v2824
        %v3445 = vsel %vm3441, %v3412, %v2826
        %v3446 = vsel %vm3441, %v3413, %v2828
        %v3447 = vsel %vm3441, %v3414, %v2830
        %v3448 = vsel %vm3441, %v3415, %v2832
        %v3449 = vsel %vm3441, %v3416, %v2834
        %v3450 = vsel %vm3441, %v3417, %v2836
        %v3451 = vsel %vm3441, %v3418, %v2838
        %v3452 = vsel %vm3441, %v3419, %v2840
        %v3453 = vsel %vm3441, %v3420, %v2842
        %v3454 = vsel %vm3441, %v3421, %v2844
        %v3455 = vsel %vm3441, %v3422, %v2846
        %v3456 = vsel %vm3441, %v3423, %v2848
        %v3457 = vsel %vm3441, %v3424, %v2850
        %v3458 = vsel %vm3441, %v3425, %v2852
        %v3459 = vsel %vm3441, %v3426, %v2854
        %v3460 = vsel %vm3441, %v3427, %v2856
        %v3461 = vsel %vm3441, %v3428, %v2858
        %v3462 = vsel %vm3441, %v3429, %v2860
        %v3463 = vsel %vm3441, %v3430, %v2862
        %v3464 = vsel %vm3441, %v3431, %v2864
        %v3465 = vsel %vm3441, %v3432, %v2866
        %v3466 = vsel %vm3441, %v3433, %v2868
        %v3467 = vsel %vm3441, %v3434, %v2870
        %v3468 = vsel %vm3441, %v3435, %v2872
        %v3469 = vsel %vm3441, %v3436, %v2874
        %v3470 = vsel %vm3441, %v3437, %v2876
        %v3471 = vsel %vm3441, %v3438, %v2878
        %v3472 = vsel %vm3441, %v3439, %v2880
        %v3473 = vsel %vm3441, %v3440, %v2882
        %vm3474 = vcmask 490496
        %v3475 = vsel %vm3474, %v3442, %v2918
        %v3476 = vsel %vm3474, %v3443, %v2920
        %v3477 = vsel %vm3474, %v3444, %v2922
        %v3478 = vsel %vm3474, %v3445, %v2924
        %v3479 = vsel %vm3474, %v3446, %v2926
        %v3480 = vsel %vm3474, %v3447, %v2928
        %v3481 = vsel %vm3474, %v3448, %v2930
        %v3482 = vsel %vm3474, %v3449, %v2932
        %v3483 = vsel %vm3474, %v3450, %v2934
        %v3484 = vsel %vm3474, %v3451, %v2936
        %v3485 = vsel %vm3474, %v3452, %v2938
        %v3486 = vsel %vm3474, %v3453, %v2940
        %v3487 = vsel %vm3474, %v3454, %v2942
        %v3488 = vsel %vm3474, %v3455, %v2944
        %v3489 = vsel %vm3474, %v3456, %v2946
        %v3490 = vsel %vm3474, %v3457, %v2948
        %v3491 = vsel %vm3474, %v3458, %v2950
        %v3492 = vsel %vm3474, %v3459, %v2952
        %v3493 = vsel %vm3474, %v3460, %v2954
        %v3494 = vsel %vm3474, %v3461, %v2956
        %v3495 = vsel %vm3474, %v3462, %v2958
        %v3496 = vsel %vm3474, %v3463, %v2960
        %v3497 = vsel %vm3474, %v3464, %v2962
        %v3498 = vsel %vm3474, %v3465, %v2964
        %v3499 = vsel %vm3474, %v3466, %v2966
        %v3500 = vsel %vm3474, %v3467, %v2968
        %v3501 = vsel %vm3474, %v3468, %v2970
        %v3502 = vsel %vm3474, %v3469, %v2972
        %v3503 = vsel %vm3474, %v3470, %v2974
        %v3504 = vsel %vm3474, %v3471, %v2976
        %v3505 = vsel %vm3474, %v3472, %v2978
        %v3506 = vsel %vm3474, %v3473, %v2980
        %v3508 = vrot.slane %v1056, 1
        %v3509 = vrot.slane %v1057, 1
        %v3510 = vsel %vm1162, %v3508, %v3509
        %v3511 = vrot.slane %v1058, 1
        %v3512 = vsel %vm1162, %v3509, %v3511
        %3513 = vrot.lane.b32.xlu0 %v2274, 4
        %v3514 = vpop.permute.xlu0 %3513
        %3515 = vrot.lane.b32.xlu0 %v2276, 4
        %v3516 = vpop.permute.xlu0 %3515
        %3517 = vrot.lane.b32.xlu0 %v2275, 4
        %v3518 = vpop.permute.xlu0 %3517
        %3519 = vrot.lane.b32.xlu0 %v2279, 4
        %v3520 = vpop.permute.xlu0 %3519
        %3521 = vrot.lane.b32.xlu0 %v2281, 4
        %v3522 = vpop.permute.xlu0 %3521
        %3523 = vrot.lane.b32.xlu0 %v2280, 4
        %v3524 = vpop.permute.xlu0 %3523
        %3525 = vrot.lane.b32.xlu0 %v2284, 4
        %v3526 = vpop.permute.xlu0 %3525
        %3527 = vrot.lane.b32.xlu0 %v2286, 4
        %v3528 = vpop.permute.xlu0 %3527
        %3529 = vrot.lane.b32.xlu0 %v2285, 4
        %v3530 = vpop.permute.xlu0 %3529
        %3531 = vrot.lane.b32.xlu0 %v2289, 4
        %v3532 = vpop.permute.xlu0 %3531
        %3533 = vrot.lane.b32.xlu0 %v2291, 4
        %v3534 = vpop.permute.xlu0 %3533
        %3535 = vrot.lane.b32.xlu0 %v2290, 4
        %v3536 = vpop.permute.xlu0 %3535
        %3537 = vrot.lane.b32.xlu0 %v2294, 4
        %v3538 = vpop.permute.xlu0 %3537
        %3539 = vrot.lane.b32.xlu0 %v2296, 4
        %v3540 = vpop.permute.xlu0 %3539
        %3541 = vrot.lane.b32.xlu0 %v2295, 4
        %v3542 = vpop.permute.xlu0 %3541
        %3543 = vrot.lane.b32.xlu0 %v2299, 4
        %v3544 = vpop.permute.xlu0 %3543
        %3545 = vrot.lane.b32.xlu0 %v2301, 4
        %v3546 = vpop.permute.xlu0 %3545
        %3547 = vrot.lane.b32.xlu0 %v2300, 4
        %v3548 = vpop.permute.xlu0 %3547
        %3549 = vrot.lane.b32.xlu0 %v2304, 4
        %v3550 = vpop.permute.xlu0 %3549
        %3551 = vrot.lane.b32.xlu0 %v2306, 4
        %v3552 = vpop.permute.xlu0 %3551
        %3553 = vrot.lane.b32.xlu0 %v2305, 4
        %v3554 = vpop.permute.xlu0 %3553
        %3555 = vrot.lane.b32.xlu0 %v2309, 4
        %v3556 = vpop.permute.xlu0 %3555
        %3557 = vrot.lane.b32.xlu0 %v2311, 4
        %v3558 = vpop.permute.xlu0 %3557
        %3559 = vrot.lane.b32.xlu0 %v2310, 4
        %v3560 = vpop.permute.xlu0 %3559
        %3561 = vrot.lane.b32.xlu0 %v2314, 4
        %v3562 = vpop.permute.xlu0 %3561
        %3563 = vrot.lane.b32.xlu0 %v2316, 4
        %v3564 = vpop.permute.xlu0 %3563
        %3565 = vrot.lane.b32.xlu0 %v2315, 4
        %v3566 = vpop.permute.xlu0 %3565
        %3567 = vrot.lane.b32.xlu0 %v2319, 4
        %v3568 = vpop.permute.xlu0 %3567
        %3569 = vrot.lane.b32.xlu0 %v2321, 4
        %v3570 = vpop.permute.xlu0 %3569
        %3571 = vrot.lane.b32.xlu0 %v2320, 4
        %v3572 = vpop.permute.xlu0 %3571
        %3573 = vrot.lane.b32.xlu0 %v2324, 4
        %v3574 = vpop.permute.xlu0 %3573
        %3575 = vrot.lane.b32.xlu0 %v2326, 4
        %v3576 = vpop.permute.xlu0 %3575
        %3577 = vrot.lane.b32.xlu0 %v2325, 4
        %v3578 = vpop.permute.xlu0 %3577
        %3579 = vrot.lane.b32.xlu0 %v2329, 4
        %v3580 = vpop.permute.xlu0 %3579
        %3581 = vrot.lane.b32.xlu0 %v2331, 4
        %v3582 = vpop.permute.xlu0 %3581
        %3583 = vrot.lane.b32.xlu0 %v2330, 4
        %v3584 = vpop.permute.xlu0 %3583
        %3585 = vrot.lane.b32.xlu0 %v2334, 4
        %v3586 = vpop.permute.xlu0 %3585
        %3587 = vrot.lane.b32.xlu0 %v2336, 4
        %v3588 = vpop.permute.xlu0 %3587
        %3589 = vrot.lane.b32.xlu0 %v2335, 4
        %v3590 = vpop.permute.xlu0 %3589
        %3591 = vrot.lane.b32.xlu0 %v2339, 4
        %v3592 = vpop.permute.xlu0 %3591
        %3593 = vrot.lane.b32.xlu0 %v2341, 4
        %v3594 = vpop.permute.xlu0 %3593
        %3595 = vrot.lane.b32.xlu0 %v2340, 4
        %v3596 = vpop.permute.xlu0 %3595
        %3597 = vrot.lane.b32.xlu0 %v2715, 4
        %v3598 = vpop.permute.xlu0 %3597
        %3599 = vrot.lane.b32.xlu0 %v2717, 4
        %v3600 = vpop.permute.xlu0 %3599
        %3601 = vrot.lane.b32.xlu0 %v2716, 4
        %v3602 = vpop.permute.xlu0 %3601
        %3603 = vrot.lane.b32.xlu0 %v3510, 4
        %v3604 = vpop.permute.xlu0 %3603
        %3605 = vrot.lane.b32.xlu0 %v3512, 4
        %v3606 = vpop.permute.xlu0 %3605
        %3607 = vrot.lane.b32.xlu0 %v3511, 4
        %v3608 = vpop.permute.xlu0 %3607
        %vm3689 = vcmask 1040384
        %v3690 = vrot.slane %v1060, 7
        %v3691 = vrot.slane %v1061, 7
        %v3692 = vsel %vm3689, %v3690, %v3691
        %v3693 = vrot.slane %v1063, 7
        %v3694 = vrot.slane %v1064, 7
        %v3695 = vsel %vm3689, %v3693, %v3694
        %v3696 = vrot.slane %v1066, 7
        %v3697 = vrot.slane %v1067, 7
        %v3698 = vsel %vm3689, %v3696, %v3697
        %v3699 = vrot.slane %v1069, 7
        %v3700 = vrot.slane %v1070, 7
        %v3701 = vsel %vm3689, %v3699, %v3700
        %v3702 = vrot.slane %v1072, 7
        %v3703 = vrot.slane %v1073, 7
        %v3704 = vsel %vm3689, %v3702, %v3703
        %v3705 = vrot.slane %v1075, 7
        %v3706 = vrot.slane %v1076, 7
        %v3707 = vsel %vm3689, %v3705, %v3706
        %v3708 = vrot.slane %v1078, 7
        %v3709 = vrot.slane %v1079, 7
        %v3710 = vsel %vm3689, %v3708, %v3709
        %v3711 = vrot.slane %v1081, 7
        %v3712 = vrot.slane %v1082, 7
        %v3713 = vsel %vm3689, %v3711, %v3712
        %v3714 = vrot.slane %v1084, 7
        %v3715 = vrot.slane %v1085, 7
        %v3716 = vsel %vm3689, %v3714, %v3715
        %v3717 = vrot.slane %v1087, 7
        %v3718 = vrot.slane %v1088, 7
        %v3719 = vsel %vm3689, %v3717, %v3718
        %v3720 = vrot.slane %v1090, 7
        %v3721 = vrot.slane %v1091, 7
        %v3722 = vsel %vm3689, %v3720, %v3721
        %v3723 = vrot.slane %v1093, 7
        %v3724 = vrot.slane %v1094, 7
        %v3725 = vsel %vm3689, %v3723, %v3724
        %v3726 = vrot.slane %v1096, 7
        %v3727 = vrot.slane %v1097, 7
        %v3728 = vsel %vm3689, %v3726, %v3727
        %v3729 = vrot.slane %v1099, 7
        %v3730 = vrot.slane %v1100, 7
        %v3731 = vsel %vm3689, %v3729, %v3730
        %v3732 = vrot.slane %v1102, 7
        %v3733 = vrot.slane %v1103, 7
        %v3734 = vsel %vm3689, %v3732, %v3733
        %v3735 = vrot.slane %v1105, 7
        %v3736 = vrot.slane %v1106, 7
        %v3737 = vsel %vm3689, %v3735, %v3736
        %3738 = vrot.lane.b32.xlu0 %v3690, 8
        %v3739 = vpop.permute.xlu0 %3738
        %3740 = vrot.lane.b32.xlu0 %v3692, 8
        %v3741 = vpop.permute.xlu0 %3740
        %3742 = vrot.lane.b32.xlu0 %v3691, 8
        %v3743 = vpop.permute.xlu0 %3742
        %3744 = vrot.lane.b32.xlu0 %v3693, 8
        %v3745 = vpop.permute.xlu0 %3744
        %3746 = vrot.lane.b32.xlu0 %v3695, 8
        %v3747 = vpop.permute.xlu0 %3746
        %3748 = vrot.lane.b32.xlu0 %v3694, 8
        %v3749 = vpop.permute.xlu0 %3748
        %3750 = vrot.lane.b32.xlu0 %v3696, 8
        %v3751 = vpop.permute.xlu0 %3750
        %3752 = vrot.lane.b32.xlu0 %v3698, 8
        %v3753 = vpop.permute.xlu0 %3752
        %3754 = vrot.lane.b32.xlu0 %v3697, 8
        %v3755 = vpop.permute.xlu0 %3754
        %3756 = vrot.lane.b32.xlu0 %v3699, 8
        %v3757 = vpop.permute.xlu0 %3756
        %3758 = vrot.lane.b32.xlu0 %v3701, 8
        %v3759 = vpop.permute.xlu0 %3758
        %3760 = vrot.lane.b32.xlu0 %v3700, 8
        %v3761 = vpop.permute.xlu0 %3760
        %3762 = vrot.lane.b32.xlu0 %v3702, 8
        %v3763 = vpop.permute.xlu0 %3762
        %3764 = vrot.lane.b32.xlu0 %v3704, 8
        %v3765 = vpop.permute.xlu0 %3764
        %3766 = vrot.lane.b32.xlu0 %v3703, 8
        %v3767 = vpop.permute.xlu0 %3766
        %3768 = vrot.lane.b32.xlu0 %v3705, 8
        %v3769 = vpop.permute.xlu0 %3768
        %3770 = vrot.lane.b32.xlu0 %v3707, 8
        %v3771 = vpop.permute.xlu0 %3770
        %3772 = vrot.lane.b32.xlu0 %v3706, 8
        %v3773 = vpop.permute.xlu0 %3772
        %3774 = vrot.lane.b32.xlu0 %v3708, 8
        %v3775 = vpop.permute.xlu0 %3774
        %3776 = vrot.lane.b32.xlu0 %v3710, 8
        %v3777 = vpop.permute.xlu0 %3776
        %3778 = vrot.lane.b32.xlu0 %v3709, 8
        %v3779 = vpop.permute.xlu0 %3778
        %3780 = vrot.lane.b32.xlu0 %v3711, 8
        %v3781 = vpop.permute.xlu0 %3780
        %3782 = vrot.lane.b32.xlu0 %v3713, 8
        %v3783 = vpop.permute.xlu0 %3782
        %3784 = vrot.lane.b32.xlu0 %v3712, 8
        %v3785 = vpop.permute.xlu0 %3784
        %3786 = vrot.lane.b32.xlu0 %v3714, 8
        %v3787 = vpop.permute.xlu0 %3786
        %3788 = vrot.lane.b32.xlu0 %v3716, 8
        %v3789 = vpop.permute.xlu0 %3788
        %3790 = vrot.lane.b32.xlu0 %v3715, 8
        %v3791 = vpop.permute.xlu0 %3790
        %3792 = vrot.lane.b32.xlu0 %v3717, 8
        %v3793 = vpop.permute.xlu0 %3792
        %3794 = vrot.lane.b32.xlu0 %v3719, 8
        %v3795 = vpop.permute.xlu0 %3794
        %3796 = vrot.lane.b32.xlu0 %v3718, 8
        %v3797 = vpop.permute.xlu0 %3796
        %3798 = vrot.lane.b32.xlu0 %v3720, 8
        %v3799 = vpop.permute.xlu0 %3798
        %3800 = vrot.lane.b32.xlu0 %v3722, 8
        %v3801 = vpop.permute.xlu0 %3800
        %3802 = vrot.lane.b32.xlu0 %v3721, 8
        %v3803 = vpop.permute.xlu0 %3802
        %3804 = vrot.lane.b32.xlu0 %v3723, 8
        %v3805 = vpop.permute.xlu0 %3804
        %3806 = vrot.lane.b32.xlu0 %v3725, 8
        %v3807 = vpop.permute.xlu0 %3806
        %3808 = vrot.lane.b32.xlu0 %v3724, 8
        %v3809 = vpop.permute.xlu0 %3808
        %3810 = vrot.lane.b32.xlu0 %v3726, 8
        %v3811 = vpop.permute.xlu0 %3810
        %3812 = vrot.lane.b32.xlu0 %v3728, 8
        %v3813 = vpop.permute.xlu0 %3812
        %3814 = vrot.lane.b32.xlu0 %v3727, 8
        %v3815 = vpop.permute.xlu0 %3814
        %3816 = vrot.lane.b32.xlu0 %v3729, 8
        %v3817 = vpop.permute.xlu0 %3816
        %3818 = vrot.lane.b32.xlu0 %v3731, 8
        %v3819 = vpop.permute.xlu0 %3818
        %3820 = vrot.lane.b32.xlu0 %v3730, 8
        %v3821 = vpop.permute.xlu0 %3820
        %3822 = vrot.lane.b32.xlu0 %v3732, 8
        %v3823 = vpop.permute.xlu0 %3822
        %3824 = vrot.lane.b32.xlu0 %v3734, 8
        %v3825 = vpop.permute.xlu0 %3824
        %3826 = vrot.lane.b32.xlu0 %v3733, 8
        %v3827 = vpop.permute.xlu0 %3826
        %3828 = vrot.lane.b32.xlu0 %v3735, 8
        %v3829 = vpop.permute.xlu0 %3828
        %3830 = vrot.lane.b32.xlu0 %v3737, 8
        %v3831 = vpop.permute.xlu0 %3830
        %3832 = vrot.lane.b32.xlu0 %v3736, 8
        %v3833 = vpop.permute.xlu0 %3832
        %3898 = vrot.lane.b32.xlu0 %v1060, 12
        %v3899 = vpop.permute.xlu0 %3898
        %3900 = vrot.lane.b32.xlu0 %v1061, 12
        %v3901 = vpop.permute.xlu0 %3900
        %3902 = vrot.lane.b32.xlu0 %v1062, 12
        %v3903 = vpop.permute.xlu0 %3902
        %3904 = vrot.lane.b32.xlu0 %v1063, 12
        %v3905 = vpop.permute.xlu0 %3904
        %3906 = vrot.lane.b32.xlu0 %v1064, 12
        %v3907 = vpop.permute.xlu0 %3906
        %3908 = vrot.lane.b32.xlu0 %v1065, 12
        %v3909 = vpop.permute.xlu0 %3908
        %3910 = vrot.lane.b32.xlu0 %v1066, 12
        %v3911 = vpop.permute.xlu0 %3910
        %3912 = vrot.lane.b32.xlu0 %v1067, 12
        %v3913 = vpop.permute.xlu0 %3912
        %3914 = vrot.lane.b32.xlu0 %v1068, 12
        %v3915 = vpop.permute.xlu0 %3914
        %3916 = vrot.lane.b32.xlu0 %v1069, 12
        %v3917 = vpop.permute.xlu0 %3916
        %3918 = vrot.lane.b32.xlu0 %v1070, 12
        %v3919 = vpop.permute.xlu0 %3918
        %3920 = vrot.lane.b32.xlu0 %v1071, 12
        %v3921 = vpop.permute.xlu0 %3920
        %3922 = vrot.lane.b32.xlu0 %v1072, 12
        %v3923 = vpop.permute.xlu0 %3922
        %3924 = vrot.lane.b32.xlu0 %v1073, 12
        %v3925 = vpop.permute.xlu0 %3924
        %3926 = vrot.lane.b32.xlu0 %v1074, 12
        %v3927 = vpop.permute.xlu0 %3926
        %3928 = vrot.lane.b32.xlu0 %v1075, 12
        %v3929 = vpop.permute.xlu0 %3928
        %3930 = vrot.lane.b32.xlu0 %v1076, 12
        %v3931 = vpop.permute.xlu0 %3930
        %3932 = vrot.lane.b32.xlu0 %v1077, 12
        %v3933 = vpop.permute.xlu0 %3932
        %3934 = vrot.lane.b32.xlu0 %v1078, 12
        %v3935 = vpop.permute.xlu0 %3934
        %3936 = vrot.lane.b32.xlu0 %v1079, 12
        %v3937 = vpop.permute.xlu0 %3936
        %3938 = vrot.lane.b32.xlu0 %v1080, 12
        %v3939 = vpop.permute.xlu0 %3938
        %3940 = vrot.lane.b32.xlu0 %v1081, 12
        %v3941 = vpop.permute.xlu0 %3940
        %3942 = vrot.lane.b32.xlu0 %v1082, 12
        %v3943 = vpop.permute.xlu0 %3942
        %3944 = vrot.lane.b32.xlu0 %v1083, 12
        %v3945 = vpop.permute.xlu0 %3944
        %3946 = vrot.lane.b32.xlu0 %v1084, 12
        %v3947 = vpop.permute.xlu0 %3946
        %3948 = vrot.lane.b32.xlu0 %v1085, 12
        %v3949 = vpop.permute.xlu0 %3948
        %3950 = vrot.lane.b32.xlu0 %v1086, 12
        %v3951 = vpop.permute.xlu0 %3950
        %3952 = vrot.lane.b32.xlu0 %v1087, 12
        %v3953 = vpop.permute.xlu0 %3952
        %3954 = vrot.lane.b32.xlu0 %v1088, 12
        %v3955 = vpop.permute.xlu0 %3954
        %3956 = vrot.lane.b32.xlu0 %v1089, 12
        %v3957 = vpop.permute.xlu0 %3956
        %3958 = vrot.lane.b32.xlu0 %v1090, 12
        %v3959 = vpop.permute.xlu0 %3958
        %3960 = vrot.lane.b32.xlu0 %v1091, 12
        %v3961 = vpop.permute.xlu0 %3960
        %3962 = vrot.lane.b32.xlu0 %v1092, 12
        %v3963 = vpop.permute.xlu0 %3962
        %3964 = vrot.lane.b32.xlu0 %v1093, 12
        %v3965 = vpop.permute.xlu0 %3964
        %3966 = vrot.lane.b32.xlu0 %v1094, 12
        %v3967 = vpop.permute.xlu0 %3966
        %3968 = vrot.lane.b32.xlu0 %v1095, 12
        %v3969 = vpop.permute.xlu0 %3968
        %3970 = vrot.lane.b32.xlu0 %v1096, 12
        %v3971 = vpop.permute.xlu0 %3970
        %3972 = vrot.lane.b32.xlu0 %v1097, 12
        %v3973 = vpop.permute.xlu0 %3972
        %3974 = vrot.lane.b32.xlu0 %v1098, 12
        %v3975 = vpop.permute.xlu0 %3974
        %3976 = vrot.lane.b32.xlu0 %v1099, 12
        %v3977 = vpop.permute.xlu0 %3976
        %3978 = vrot.lane.b32.xlu0 %v1100, 12
        %v3979 = vpop.permute.xlu0 %3978
        %3980 = vrot.lane.b32.xlu0 %v1101, 12
        %v3981 = vpop.permute.xlu0 %3980
        %3982 = vrot.lane.b32.xlu0 %v1102, 12
        %v3983 = vpop.permute.xlu0 %3982
        %3984 = vrot.lane.b32.xlu0 %v1103, 12
        %v3985 = vpop.permute.xlu0 %3984
        %3986 = vrot.lane.b32.xlu0 %v1104, 12
        %v3987 = vpop.permute.xlu0 %3986
        %3988 = vrot.lane.b32.xlu0 %v1105, 12
        %v3989 = vpop.permute.xlu0 %3988
        %3990 = vrot.lane.b32.xlu0 %v1106, 12
        %v3991 = vpop.permute.xlu0 %3990
        %3992 = vrot.lane.b32.xlu0 %v1107, 12
        %v3993 = vpop.permute.xlu0 %3992
        %v4042 = vrot.slane %v1060, 1
        %v4043 = vrot.slane %v1061, 1
        %v4044 = vsel %vm1162, %v4042, %v4043
        %v4045 = vrot.slane %v1062, 1
        %v4046 = vsel %vm1162, %v4043, %v4045
        %v4047 = vrot.slane %v1063, 1
        %v4048 = vrot.slane %v1064, 1
        %v4049 = vsel %vm1162, %v4047, %v4048
        %v4050 = vrot.slane %v1065, 1
        %v4051 = vsel %vm1162, %v4048, %v4050
        %v4052 = vrot.slane %v1066, 1
        %v4053 = vrot.slane %v1067, 1
        %v4054 = vsel %vm1162, %v4052, %v4053
        %v4055 = vrot.slane %v1068, 1
        %v4056 = vsel %vm1162, %v4053, %v4055
        %v4057 = vrot.slane %v1069, 1
        %v4058 = vrot.slane %v1070, 1
        %v4059 = vsel %vm1162, %v4057, %v4058
        %v4060 = vrot.slane %v1071, 1
        %v4061 = vsel %vm1162, %v4058, %v4060
        %v4062 = vrot.slane %v1072, 1
        %v4063 = vrot.slane %v1073, 1
        %v4064 = vsel %vm1162, %v4062, %v4063
        %v4065 = vrot.slane %v1074, 1
        %v4066 = vsel %vm1162, %v4063, %v4065
        %v4067 = vrot.slane %v1075, 1
        %v4068 = vrot.slane %v1076, 1
        %v4069 = vsel %vm1162, %v4067, %v4068
        %v4070 = vrot.slane %v1077, 1
        %v4071 = vsel %vm1162, %v4068, %v4070
        %v4072 = vrot.slane %v1078, 1
        %v4073 = vrot.slane %v1079, 1
        %v4074 = vsel %vm1162, %v4072, %v4073
        %v4075 = vrot.slane %v1080, 1
        %v4076 = vsel %vm1162, %v4073, %v4075
        %v4077 = vrot.slane %v1081, 1
        %v4078 = vrot.slane %v1082, 1
        %v4079 = vsel %vm1162, %v4077, %v4078
        %v4080 = vrot.slane %v1083, 1
        %v4081 = vsel %vm1162, %v4078, %v4080
        %v4082 = vrot.slane %v1084, 1
        %v4083 = vrot.slane %v1085, 1
        %v4084 = vsel %vm1162, %v4082, %v4083
        %v4085 = vrot.slane %v1086, 1
        %v4086 = vsel %vm1162, %v4083, %v4085
        %v4087 = vrot.slane %v1087, 1
        %v4088 = vrot.slane %v1088, 1
        %v4089 = vsel %vm1162, %v4087, %v4088
        %v4090 = vrot.slane %v1089, 1
        %v4091 = vsel %vm1162, %v4088, %v4090
        %v4092 = vrot.slane %v1090, 1
        %v4093 = vrot.slane %v1091, 1
        %v4094 = vsel %vm1162, %v4092, %v4093
        %v4095 = vrot.slane %v1092, 1
        %v4096 = vsel %vm1162, %v4093, %v4095
        %v4097 = vrot.slane %v1093, 1
        %v4098 = vrot.slane %v1094, 1
        %v4099 = vsel %vm1162, %v4097, %v4098
        %v4100 = vrot.slane %v1095, 1
        %v4101 = vsel %vm1162, %v4098, %v4100
        %v4102 = vrot.slane %v1096, 1
        %v4103 = vrot.slane %v1097, 1
        %v4104 = vsel %vm1162, %v4102, %v4103
        %v4105 = vrot.slane %v1098, 1
        %v4106 = vsel %vm1162, %v4103, %v4105
        %v4107 = vrot.slane %v1099, 1
        %v4108 = vrot.slane %v1100, 1
        %v4109 = vsel %vm1162, %v4107, %v4108
        %v4110 = vrot.slane %v1101, 1
        %v4111 = vsel %vm1162, %v4108, %v4110
        %v4112 = vrot.slane %v1102, 1
        %v4113 = vrot.slane %v1103, 1
        %v4114 = vsel %vm1162, %v4112, %v4113
        %v4115 = vrot.slane %v1104, 1
        %v4116 = vsel %vm1162, %v4113, %v4115
        %v4117 = vrot.slane %v1105, 1
        %v4118 = vrot.slane %v1106, 1
        %v4119 = vsel %vm1162, %v4117, %v4118
        %v4120 = vrot.slane %v1107, 1
        %v4121 = vsel %vm1162, %v4118, %v4120
        %4122 = vrot.lane.b32.xlu0 %v4044, 16
        %v4123 = vpop.permute.xlu0 %4122
        %4124 = vrot.lane.b32.xlu0 %v4046, 16
        %v4125 = vpop.permute.xlu0 %4124
        %4126 = vrot.lane.b32.xlu0 %v4045, 16
        %v4127 = vpop.permute.xlu0 %4126
        %4128 = vrot.lane.b32.xlu0 %v4049, 16
        %v4129 = vpop.permute.xlu0 %4128
        %4130 = vrot.lane.b32.xlu0 %v4051, 16
        %v4131 = vpop.permute.xlu0 %4130
        %4132 = vrot.lane.b32.xlu0 %v4050, 16
        %v4133 = vpop.permute.xlu0 %4132
        %4134 = vrot.lane.b32.xlu0 %v4054, 16
        %v4135 = vpop.permute.xlu0 %4134
        %4136 = vrot.lane.b32.xlu0 %v4056, 16
        %v4137 = vpop.permute.xlu0 %4136
        %4138 = vrot.lane.b32.xlu0 %v4055, 16
        %v4139 = vpop.permute.xlu0 %4138
        %4140 = vrot.lane.b32.xlu0 %v4059, 16
        %v4141 = vpop.permute.xlu0 %4140
        %4142 = vrot.lane.b32.xlu0 %v4061, 16
        %v4143 = vpop.permute.xlu0 %4142
        %4144 = vrot.lane.b32.xlu0 %v4060, 16
        %v4145 = vpop.permute.xlu0 %4144
        %4146 = vrot.lane.b32.xlu0 %v4064, 16
        %v4147 = vpop.permute.xlu0 %4146
        %4148 = vrot.lane.b32.xlu0 %v4066, 16
        %v4149 = vpop.permute.xlu0 %4148
        %4150 = vrot.lane.b32.xlu0 %v4065, 16
        %v4151 = vpop.permute.xlu0 %4150
        %4152 = vrot.lane.b32.xlu0 %v4069, 16
        %v4153 = vpop.permute.xlu0 %4152
        %4154 = vrot.lane.b32.xlu0 %v4071, 16
        %v4155 = vpop.permute.xlu0 %4154
        %4156 = vrot.lane.b32.xlu0 %v4070, 16
        %v4157 = vpop.permute.xlu0 %4156
        %4158 = vrot.lane.b32.xlu0 %v4074, 16
        %v4159 = vpop.permute.xlu0 %4158
        %4160 = vrot.lane.b32.xlu0 %v4076, 16
        %v4161 = vpop.permute.xlu0 %4160
        %4162 = vrot.lane.b32.xlu0 %v4075, 16
        %v4163 = vpop.permute.xlu0 %4162
        %4164 = vrot.lane.b32.xlu0 %v4079, 16
        %v4165 = vpop.permute.xlu0 %4164
        %4166 = vrot.lane.b32.xlu0 %v4081, 16
        %v4167 = vpop.permute.xlu0 %4166
        %4168 = vrot.lane.b32.xlu0 %v4080, 16
        %v4169 = vpop.permute.xlu0 %4168
        %4170 = vrot.lane.b32.xlu0 %v4084, 16
        %v4171 = vpop.permute.xlu0 %4170
        %4172 = vrot.lane.b32.xlu0 %v4086, 16
        %v4173 = vpop.permute.xlu0 %4172
        %4174 = vrot.lane.b32.xlu0 %v4085, 16
        %v4175 = vpop.permute.xlu0 %4174
        %4176 = vrot.lane.b32.xlu0 %v4089, 16
        %v4177 = vpop.permute.xlu0 %4176
        %4178 = vrot.lane.b32.xlu0 %v4091, 16
        %v4179 = vpop.permute.xlu0 %4178
        %4180 = vrot.lane.b32.xlu0 %v4090, 16
        %v4181 = vpop.permute.xlu0 %4180
        %4182 = vrot.lane.b32.xlu0 %v4094, 16
        %v4183 = vpop.permute.xlu0 %4182
        %4184 = vrot.lane.b32.xlu0 %v4096, 16
        %v4185 = vpop.permute.xlu0 %4184
        %4186 = vrot.lane.b32.xlu0 %v4095, 16
        %v4187 = vpop.permute.xlu0 %4186
        %4188 = vrot.lane.b32.xlu0 %v4099, 16
        %v4189 = vpop.permute.xlu0 %4188
        %4190 = vrot.lane.b32.xlu0 %v4101, 16
        %v4191 = vpop.permute.xlu0 %4190
        %4192 = vrot.lane.b32.xlu0 %v4100, 16
        %v4193 = vpop.permute.xlu0 %4192
        %4194 = vrot.lane.b32.xlu0 %v4104, 16
        %v4195 = vpop.permute.xlu0 %4194
        %4196 = vrot.lane.b32.xlu0 %v4106, 16
        %v4197 = vpop.permute.xlu0 %4196
        %4198 = vrot.lane.b32.xlu0 %v4105, 16
        %v4199 = vpop.permute.xlu0 %4198
        %4200 = vrot.lane.b32.xlu0 %v4109, 16
        %v4201 = vpop.permute.xlu0 %4200
        %4202 = vrot.lane.b32.xlu0 %v4111, 16
        %v4203 = vpop.permute.xlu0 %4202
        %4204 = vrot.lane.b32.xlu0 %v4110, 16
        %v4205 = vpop.permute.xlu0 %4204
        %4206 = vrot.lane.b32.xlu0 %v4114, 16
        %v4207 = vpop.permute.xlu0 %4206
        %4208 = vrot.lane.b32.xlu0 %v4116, 16
        %v4209 = vpop.permute.xlu0 %4208
        %4210 = vrot.lane.b32.xlu0 %v4115, 16
        %v4211 = vpop.permute.xlu0 %4210
        %4212 = vrot.lane.b32.xlu0 %v4119, 16
        %v4213 = vpop.permute.xlu0 %4212
        %4214 = vrot.lane.b32.xlu0 %v4121, 16
        %v4215 = vpop.permute.xlu0 %4214
        %4216 = vrot.lane.b32.xlu0 %v4120, 16
        %v4217 = vpop.permute.xlu0 %4216
        %v4268 = vrot.slane %v1108, 7
        %v4269 = vrot.slane %v1109, 7
        %v4270 = vsel %vm3689, %v4268, %v4269
        %4271 = vrot.lane.b32.xlu0 %v3693, 20
        %v4272 = vpop.permute.xlu0 %4271
        %4273 = vrot.lane.b32.xlu0 %v3695, 20
        %v4274 = vpop.permute.xlu0 %4273
        %4275 = vrot.lane.b32.xlu0 %v3694, 20
        %v4276 = vpop.permute.xlu0 %4275
        %4277 = vrot.lane.b32.xlu0 %v3696, 20
        %v4278 = vpop.permute.xlu0 %4277
        %4279 = vrot.lane.b32.xlu0 %v3698, 20
        %v4280 = vpop.permute.xlu0 %4279
        %4281 = vrot.lane.b32.xlu0 %v3697, 20
        %v4282 = vpop.permute.xlu0 %4281
        %4283 = vrot.lane.b32.xlu0 %v3699, 20
        %v4284 = vpop.permute.xlu0 %4283
        %4285 = vrot.lane.b32.xlu0 %v3701, 20
        %v4286 = vpop.permute.xlu0 %4285
        %4287 = vrot.lane.b32.xlu0 %v3700, 20
        %v4288 = vpop.permute.xlu0 %4287
        %4289 = vrot.lane.b32.xlu0 %v3702, 20
        %v4290 = vpop.permute.xlu0 %4289
        %4291 = vrot.lane.b32.xlu0 %v3704, 20
        %v4292 = vpop.permute.xlu0 %4291
        %4293 = vrot.lane.b32.xlu0 %v3703, 20
        %v4294 = vpop.permute.xlu0 %4293
        %4295 = vrot.lane.b32.xlu0 %v3705, 20
        %v4296 = vpop.permute.xlu0 %4295
        %4297 = vrot.lane.b32.xlu0 %v3707, 20
        %v4298 = vpop.permute.xlu0 %4297
        %4299 = vrot.lane.b32.xlu0 %v3706, 20
        %v4300 = vpop.permute.xlu0 %4299
        %4301 = vrot.lane.b32.xlu0 %v3708, 20
        %v4302 = vpop.permute.xlu0 %4301
        %4303 = vrot.lane.b32.xlu0 %v3710, 20
        %v4304 = vpop.permute.xlu0 %4303
        %4305 = vrot.lane.b32.xlu0 %v3709, 20
        %v4306 = vpop.permute.xlu0 %4305
        %4307 = vrot.lane.b32.xlu0 %v3711, 20
        %v4308 = vpop.permute.xlu0 %4307
        %4309 = vrot.lane.b32.xlu0 %v3713, 20
        %v4310 = vpop.permute.xlu0 %4309
        %4311 = vrot.lane.b32.xlu0 %v3712, 20
        %v4312 = vpop.permute.xlu0 %4311
        %4313 = vrot.lane.b32.xlu0 %v3714, 20
        %v4314 = vpop.permute.xlu0 %4313
        %4315 = vrot.lane.b32.xlu0 %v3716, 20
        %v4316 = vpop.permute.xlu0 %4315
        %4317 = vrot.lane.b32.xlu0 %v3715, 20
        %v4318 = vpop.permute.xlu0 %4317
        %4319 = vrot.lane.b32.xlu0 %v3717, 20
        %v4320 = vpop.permute.xlu0 %4319
        %4321 = vrot.lane.b32.xlu0 %v3719, 20
        %v4322 = vpop.permute.xlu0 %4321
        %4323 = vrot.lane.b32.xlu0 %v3718, 20
        %v4324 = vpop.permute.xlu0 %4323
        %4325 = vrot.lane.b32.xlu0 %v3720, 20
        %v4326 = vpop.permute.xlu0 %4325
        %4327 = vrot.lane.b32.xlu0 %v3722, 20
        %v4328 = vpop.permute.xlu0 %4327
        %4329 = vrot.lane.b32.xlu0 %v3721, 20
        %v4330 = vpop.permute.xlu0 %4329
        %4331 = vrot.lane.b32.xlu0 %v3723, 20
        %v4332 = vpop.permute.xlu0 %4331
        %4333 = vrot.lane.b32.xlu0 %v3725, 20
        %v4334 = vpop.permute.xlu0 %4333
        %4335 = vrot.lane.b32.xlu0 %v3724, 20
        %v4336 = vpop.permute.xlu0 %4335
        %4337 = vrot.lane.b32.xlu0 %v3726, 20
        %v4338 = vpop.permute.xlu0 %4337
        %4339 = vrot.lane.b32.xlu0 %v3728, 20
        %v4340 = vpop.permute.xlu0 %4339
        %4341 = vrot.lane.b32.xlu0 %v3727, 20
        %v4342 = vpop.permute.xlu0 %4341
        %4343 = vrot.lane.b32.xlu0 %v3729, 20
        %v4344 = vpop.permute.xlu0 %4343
        %4345 = vrot.lane.b32.xlu0 %v3731, 20
        %v4346 = vpop.permute.xlu0 %4345
        %4347 = vrot.lane.b32.xlu0 %v3730, 20
        %v4348 = vpop.permute.xlu0 %4347
        %4349 = vrot.lane.b32.xlu0 %v3732, 20
        %v4350 = vpop.permute.xlu0 %4349
        %4351 = vrot.lane.b32.xlu0 %v3734, 20
        %v4352 = vpop.permute.xlu0 %4351
        %4353 = vrot.lane.b32.xlu0 %v3733, 20
        %v4354 = vpop.permute.xlu0 %4353
        %4355 = vrot.lane.b32.xlu0 %v3735, 20
        %v4356 = vpop.permute.xlu0 %4355
        %4357 = vrot.lane.b32.xlu0 %v3737, 20
        %v4358 = vpop.permute.xlu0 %4357
        %4359 = vrot.lane.b32.xlu0 %v3736, 20
        %v4360 = vpop.permute.xlu0 %4359
        %4361 = vrot.lane.b32.xlu0 %v4268, 20
        %v4362 = vpop.permute.xlu0 %4361
        %4363 = vrot.lane.b32.xlu0 %v4270, 20
        %v4364 = vpop.permute.xlu0 %4363
        %4365 = vrot.lane.b32.xlu0 %v4269, 20
        %v4366 = vpop.permute.xlu0 %4365
        %4416 = vrot.lane.b32.xlu0 %v1063, 24
        %v4417 = vpop.permute.xlu0 %4416
        %4418 = vrot.lane.b32.xlu0 %v1064, 24
        %v4419 = vpop.permute.xlu0 %4418
        %4420 = vrot.lane.b32.xlu0 %v1065, 24
        %v4421 = vpop.permute.xlu0 %4420
        %4422 = vrot.lane.b32.xlu0 %v1066, 24
        %v4423 = vpop.permute.xlu0 %4422
        %4424 = vrot.lane.b32.xlu0 %v1067, 24
        %v4425 = vpop.permute.xlu0 %4424
        %4426 = vrot.lane.b32.xlu0 %v1068, 24
        %v4427 = vpop.permute.xlu0 %4426
        %4428 = vrot.lane.b32.xlu0 %v1069, 24
        %v4429 = vpop.permute.xlu0 %4428
        %4430 = vrot.lane.b32.xlu0 %v1070, 24
        %v4431 = vpop.permute.xlu0 %4430
        %4432 = vrot.lane.b32.xlu0 %v1071, 24
        %v4433 = vpop.permute.xlu0 %4432
        %4434 = vrot.lane.b32.xlu0 %v1072, 24
        %v4435 = vpop.permute.xlu0 %4434
        %4436 = vrot.lane.b32.xlu0 %v1073, 24
        %v4437 = vpop.permute.xlu0 %4436
        %4438 = vrot.lane.b32.xlu0 %v1074, 24
        %v4439 = vpop.permute.xlu0 %4438
        %4440 = vrot.lane.b32.xlu0 %v1075, 24
        %v4441 = vpop.permute.xlu0 %4440
        %4442 = vrot.lane.b32.xlu0 %v1076, 24
        %v4443 = vpop.permute.xlu0 %4442
        %4444 = vrot.lane.b32.xlu0 %v1077, 24
        %v4445 = vpop.permute.xlu0 %4444
        %4446 = vrot.lane.b32.xlu0 %v1078, 24
        %v4447 = vpop.permute.xlu0 %4446
        %4448 = vrot.lane.b32.xlu0 %v1079, 24
        %v4449 = vpop.permute.xlu0 %4448
        %4450 = vrot.lane.b32.xlu0 %v1080, 24
        %v4451 = vpop.permute.xlu0 %4450
        %4452 = vrot.lane.b32.xlu0 %v1081, 24
        %v4453 = vpop.permute.xlu0 %4452
        %4454 = vrot.lane.b32.xlu0 %v1082, 24
        %v4455 = vpop.permute.xlu0 %4454
        %4456 = vrot.lane.b32.xlu0 %v1083, 24
        %v4457 = vpop.permute.xlu0 %4456
        %4458 = vrot.lane.b32.xlu0 %v1084, 24
        %v4459 = vpop.permute.xlu0 %4458
        %4460 = vrot.lane.b32.xlu0 %v1085, 24
        %v4461 = vpop.permute.xlu0 %4460
        %4462 = vrot.lane.b32.xlu0 %v1086, 24
        %v4463 = vpop.permute.xlu0 %4462
        %4464 = vrot.lane.b32.xlu0 %v1087, 24
        %v4465 = vpop.permute.xlu0 %4464
        %4466 = vrot.lane.b32.xlu0 %v1088, 24
        %v4467 = vpop.permute.xlu0 %4466
        %4468 = vrot.lane.b32.xlu0 %v1089, 24
        %v4469 = vpop.permute.xlu0 %4468
        %4470 = vrot.lane.b32.xlu0 %v1090, 24
        %v4471 = vpop.permute.xlu0 %4470
        %4472 = vrot.lane.b32.xlu0 %v1091, 24
        %v4473 = vpop.permute.xlu0 %4472
        %4474 = vrot.lane.b32.xlu0 %v1092, 24
        %v4475 = vpop.permute.xlu0 %4474
        %4476 = vrot.lane.b32.xlu0 %v1093, 24
        %v4477 = vpop.permute.xlu0 %4476
        %4478 = vrot.lane.b32.xlu0 %v1094, 24
        %v4479 = vpop.permute.xlu0 %4478
        %4480 = vrot.lane.b32.xlu0 %v1095, 24
        %v4481 = vpop.permute.xlu0 %4480
        %4482 = vrot.lane.b32.xlu0 %v1096, 24
        %v4483 = vpop.permute.xlu0 %4482
        %4484 = vrot.lane.b32.xlu0 %v1097, 24
        %v4485 = vpop.permute.xlu0 %4484
        %4486 = vrot.lane.b32.xlu0 %v1098, 24
        %v4487 = vpop.permute.xlu0 %4486
        %4488 = vrot.lane.b32.xlu0 %v1099, 24
        %v4489 = vpop.permute.xlu0 %4488
        %4490 = vrot.lane.b32.xlu0 %v1100, 24
        %v4491 = vpop.permute.xlu0 %4490
        %4492 = vrot.lane.b32.xlu0 %v1101, 24
        %v4493 = vpop.permute.xlu0 %4492
        %4494 = vrot.lane.b32.xlu0 %v1102, 24
        %v4495 = vpop.permute.xlu0 %4494
        %4496 = vrot.lane.b32.xlu0 %v1103, 24
        %v4497 = vpop.permute.xlu0 %4496
        %4498 = vrot.lane.b32.xlu0 %v1104, 24
        %v4499 = vpop.permute.xlu0 %4498
        %4500 = vrot.lane.b32.xlu0 %v1105, 24
        %v4501 = vpop.permute.xlu0 %4500
        %4502 = vrot.lane.b32.xlu0 %v1106, 24
        %v4503 = vpop.permute.xlu0 %4502
        %4504 = vrot.lane.b32.xlu0 %v1107, 24
        %v4505 = vpop.permute.xlu0 %4504
        %4506 = vrot.lane.b32.xlu0 %v1108, 24
        %v4507 = vpop.permute.xlu0 %4506
        %4508 = vrot.lane.b32.xlu0 %v1109, 24
        %v4509 = vpop.permute.xlu0 %4508
        %4510 = vrot.lane.b32.xlu0 %v1110, 24
        %v4511 = vpop.permute.xlu0 %4510
        %v4560 = vrot.slane %v1108, 1
        %v4561 = vrot.slane %v1109, 1
        %v4562 = vsel %vm1162, %v4560, %v4561
        %v4563 = vrot.slane %v1110, 1
        %v4564 = vsel %vm1162, %v4561, %v4563
        %4565 = vrot.lane.b32.xlu0 %v4049, 28
        %v4566 = vpop.permute.xlu0 %4565
        %4567 = vrot.lane.b32.xlu0 %v4051, 28
        %v4568 = vpop.permute.xlu0 %4567
        %4569 = vrot.lane.b32.xlu0 %v4050, 28
        %v4570 = vpop.permute.xlu0 %4569
        %4571 = vrot.lane.b32.xlu0 %v4054, 28
        %v4572 = vpop.permute.xlu0 %4571
        %4573 = vrot.lane.b32.xlu0 %v4056, 28
        %v4574 = vpop.permute.xlu0 %4573
        %4575 = vrot.lane.b32.xlu0 %v4055, 28
        %v4576 = vpop.permute.xlu0 %4575
        %4577 = vrot.lane.b32.xlu0 %v4059, 28
        %v4578 = vpop.permute.xlu0 %4577
        %4579 = vrot.lane.b32.xlu0 %v4061, 28
        %v4580 = vpop.permute.xlu0 %4579
        %4581 = vrot.lane.b32.xlu0 %v4060, 28
        %v4582 = vpop.permute.xlu0 %4581
        %4583 = vrot.lane.b32.xlu0 %v4064, 28
        %v4584 = vpop.permute.xlu0 %4583
        %4585 = vrot.lane.b32.xlu0 %v4066, 28
        %v4586 = vpop.permute.xlu0 %4585
        %4587 = vrot.lane.b32.xlu0 %v4065, 28
        %v4588 = vpop.permute.xlu0 %4587
        %4589 = vrot.lane.b32.xlu0 %v4069, 28
        %v4590 = vpop.permute.xlu0 %4589
        %4591 = vrot.lane.b32.xlu0 %v4071, 28
        %v4592 = vpop.permute.xlu0 %4591
        %4593 = vrot.lane.b32.xlu0 %v4070, 28
        %v4594 = vpop.permute.xlu0 %4593
        %4595 = vrot.lane.b32.xlu0 %v4074, 28
        %v4596 = vpop.permute.xlu0 %4595
        %4597 = vrot.lane.b32.xlu0 %v4076, 28
        %v4598 = vpop.permute.xlu0 %4597
        %4599 = vrot.lane.b32.xlu0 %v4075, 28
        %v4600 = vpop.permute.xlu0 %4599
        %4601 = vrot.lane.b32.xlu0 %v4079, 28
        %v4602 = vpop.permute.xlu0 %4601
        %4603 = vrot.lane.b32.xlu0 %v4081, 28
        %v4604 = vpop.permute.xlu0 %4603
        %4605 = vrot.lane.b32.xlu0 %v4080, 28
        %v4606 = vpop.permute.xlu0 %4605
        %4607 = vrot.lane.b32.xlu0 %v4084, 28
        %v4608 = vpop.permute.xlu0 %4607
        %4609 = vrot.lane.b32.xlu0 %v4086, 28
        %v4610 = vpop.permute.xlu0 %4609
        %4611 = vrot.lane.b32.xlu0 %v4085, 28
        %v4612 = vpop.permute.xlu0 %4611
        %4613 = vrot.lane.b32.xlu0 %v4089, 28
        %v4614 = vpop.permute.xlu0 %4613
        %4615 = vrot.lane.b32.xlu0 %v4091, 28
        %v4616 = vpop.permute.xlu0 %4615
        %4617 = vrot.lane.b32.xlu0 %v4090, 28
        %v4618 = vpop.permute.xlu0 %4617
        %4619 = vrot.lane.b32.xlu0 %v4094, 28
        %v4620 = vpop.permute.xlu0 %4619
        %4621 = vrot.lane.b32.xlu0 %v4096, 28
        %v4622 = vpop.permute.xlu0 %4621
        %4623 = vrot.lane.b32.xlu0 %v4095, 28
        %v4624 = vpop.permute.xlu0 %4623
        %4625 = vrot.lane.b32.xlu0 %v4099, 28
        %v4626 = vpop.permute.xlu0 %4625
        %4627 = vrot.lane.b32.xlu0 %v4101, 28
        %v4628 = vpop.permute.xlu0 %4627
        %4629 = vrot.lane.b32.xlu0 %v4100, 28
        %v4630 = vpop.permute.xlu0 %4629
        %4631 = vrot.lane.b32.xlu0 %v4104, 28
        %v4632 = vpop.permute.xlu0 %4631
        %4633 = vrot.lane.b32.xlu0 %v4106, 28
        %v4634 = vpop.permute.xlu0 %4633
        %4635 = vrot.lane.b32.xlu0 %v4105, 28
        %v4636 = vpop.permute.xlu0 %4635
        %4637 = vrot.lane.b32.xlu0 %v4109, 28
        %v4638 = vpop.permute.xlu0 %4637
        %4639 = vrot.lane.b32.xlu0 %v4111, 28
        %v4640 = vpop.permute.xlu0 %4639
        %4641 = vrot.lane.b32.xlu0 %v4110, 28
        %v4642 = vpop.permute.xlu0 %4641
        %4643 = vrot.lane.b32.xlu0 %v4114, 28
        %v4644 = vpop.permute.xlu0 %4643
        %4645 = vrot.lane.b32.xlu0 %v4116, 28
        %v4646 = vpop.permute.xlu0 %4645
        %4647 = vrot.lane.b32.xlu0 %v4115, 28
        %v4648 = vpop.permute.xlu0 %4647
        %4649 = vrot.lane.b32.xlu0 %v4119, 28
        %v4650 = vpop.permute.xlu0 %4649
        %4651 = vrot.lane.b32.xlu0 %v4121, 28
        %v4652 = vpop.permute.xlu0 %4651
        %4653 = vrot.lane.b32.xlu0 %v4120, 28
        %v4654 = vpop.permute.xlu0 %4653
        %4655 = vrot.lane.b32.xlu0 %v4562, 28
        %v4656 = vpop.permute.xlu0 %4655
        %4657 = vrot.lane.b32.xlu0 %v4564, 28
        %v4658 = vpop.permute.xlu0 %4657
        %4659 = vrot.lane.b32.xlu0 %v4563, 28
        %v4660 = vpop.permute.xlu0 %4659
        %v4711 = vrot.slane %v1111, 7
        %v4712 = vrot.slane %v1112, 7
        %v4713 = vsel %vm3689, %v4711, %v4712
        %4714 = vrot.lane.b32.xlu0 %v3696, 32
        %v4715 = vpop.permute.xlu0 %4714
        %4716 = vrot.lane.b32.xlu0 %v3698, 32
        %v4717 = vpop.permute.xlu0 %4716
        %4718 = vrot.lane.b32.xlu0 %v3697, 32
        %v4719 = vpop.permute.xlu0 %4718
        %4720 = vrot.lane.b32.xlu0 %v3699, 32
        %v4721 = vpop.permute.xlu0 %4720
        %4722 = vrot.lane.b32.xlu0 %v3701, 32
        %v4723 = vpop.permute.xlu0 %4722
        %4724 = vrot.lane.b32.xlu0 %v3700, 32
        %v4725 = vpop.permute.xlu0 %4724
        %4726 = vrot.lane.b32.xlu0 %v3702, 32
        %v4727 = vpop.permute.xlu0 %4726
        %4728 = vrot.lane.b32.xlu0 %v3704, 32
        %v4729 = vpop.permute.xlu0 %4728
        %4730 = vrot.lane.b32.xlu0 %v3703, 32
        %v4731 = vpop.permute.xlu0 %4730
        %4732 = vrot.lane.b32.xlu0 %v3705, 32
        %v4733 = vpop.permute.xlu0 %4732
        %4734 = vrot.lane.b32.xlu0 %v3707, 32
        %v4735 = vpop.permute.xlu0 %4734
        %4736 = vrot.lane.b32.xlu0 %v3706, 32
        %v4737 = vpop.permute.xlu0 %4736
        %4738 = vrot.lane.b32.xlu0 %v3708, 32
        %v4739 = vpop.permute.xlu0 %4738
        %4740 = vrot.lane.b32.xlu0 %v3710, 32
        %v4741 = vpop.permute.xlu0 %4740
        %4742 = vrot.lane.b32.xlu0 %v3709, 32
        %v4743 = vpop.permute.xlu0 %4742
        %4744 = vrot.lane.b32.xlu0 %v3711, 32
        %v4745 = vpop.permute.xlu0 %4744
        %4746 = vrot.lane.b32.xlu0 %v3713, 32
        %v4747 = vpop.permute.xlu0 %4746
        %4748 = vrot.lane.b32.xlu0 %v3712, 32
        %v4749 = vpop.permute.xlu0 %4748
        %4750 = vrot.lane.b32.xlu0 %v3714, 32
        %v4751 = vpop.permute.xlu0 %4750
        %4752 = vrot.lane.b32.xlu0 %v3716, 32
        %v4753 = vpop.permute.xlu0 %4752
        %4754 = vrot.lane.b32.xlu0 %v3715, 32
        %v4755 = vpop.permute.xlu0 %4754
        %4756 = vrot.lane.b32.xlu0 %v3717, 32
        %v4757 = vpop.permute.xlu0 %4756
        %4758 = vrot.lane.b32.xlu0 %v3719, 32
        %v4759 = vpop.permute.xlu0 %4758
        %4760 = vrot.lane.b32.xlu0 %v3718, 32
        %v4761 = vpop.permute.xlu0 %4760
        %4762 = vrot.lane.b32.xlu0 %v3720, 32
        %v4763 = vpop.permute.xlu0 %4762
        %4764 = vrot.lane.b32.xlu0 %v3722, 32
        %v4765 = vpop.permute.xlu0 %4764
        %4766 = vrot.lane.b32.xlu0 %v3721, 32
        %v4767 = vpop.permute.xlu0 %4766
        %4768 = vrot.lane.b32.xlu0 %v3723, 32
        %v4769 = vpop.permute.xlu0 %4768
        %4770 = vrot.lane.b32.xlu0 %v3725, 32
        %v4771 = vpop.permute.xlu0 %4770
        %4772 = vrot.lane.b32.xlu0 %v3724, 32
        %v4773 = vpop.permute.xlu0 %4772
        %4774 = vrot.lane.b32.xlu0 %v3726, 32
        %v4775 = vpop.permute.xlu0 %4774
        %4776 = vrot.lane.b32.xlu0 %v3728, 32
        %v4777 = vpop.permute.xlu0 %4776
        %4778 = vrot.lane.b32.xlu0 %v3727, 32
        %v4779 = vpop.permute.xlu0 %4778
        %4780 = vrot.lane.b32.xlu0 %v3729, 32
        %v4781 = vpop.permute.xlu0 %4780
        %4782 = vrot.lane.b32.xlu0 %v3731, 32
        %v4783 = vpop.permute.xlu0 %4782
        %4784 = vrot.lane.b32.xlu0 %v3730, 32
        %v4785 = vpop.permute.xlu0 %4784
        %4786 = vrot.lane.b32.xlu0 %v3732, 32
        %v4787 = vpop.permute.xlu0 %4786
        %4788 = vrot.lane.b32.xlu0 %v3734, 32
        %v4789 = vpop.permute.xlu0 %4788
        %4790 = vrot.lane.b32.xlu0 %v3733, 32
        %v4791 = vpop.permute.xlu0 %4790
        %4792 = vrot.lane.b32.xlu0 %v3735, 32
        %v4793 = vpop.permute.xlu0 %4792
        %4794 = vrot.lane.b32.xlu0 %v3737, 32
        %v4795 = vpop.permute.xlu0 %4794
        %4796 = vrot.lane.b32.xlu0 %v3736, 32
        %v4797 = vpop.permute.xlu0 %4796
        %4798 = vrot.lane.b32.xlu0 %v4268, 32
        %v4799 = vpop.permute.xlu0 %4798
        %4800 = vrot.lane.b32.xlu0 %v4270, 32
        %v4801 = vpop.permute.xlu0 %4800
        %4802 = vrot.lane.b32.xlu0 %v4269, 32
        %v4803 = vpop.permute.xlu0 %4802
        %4804 = vrot.lane.b32.xlu0 %v4711, 32
        %v4805 = vpop.permute.xlu0 %4804
        %4806 = vrot.lane.b32.xlu0 %v4713, 32
        %v4807 = vpop.permute.xlu0 %4806
        %4808 = vrot.lane.b32.xlu0 %v4712, 32
        %v4809 = vpop.permute.xlu0 %4808
        %4859 = vrot.lane.b32.xlu0 %v1066, 36
        %v4860 = vpop.permute.xlu0 %4859
        %4861 = vrot.lane.b32.xlu0 %v1067, 36
        %v4862 = vpop.permute.xlu0 %4861
        %4863 = vrot.lane.b32.xlu0 %v1068, 36
        %v4864 = vpop.permute.xlu0 %4863
        %4865 = vrot.lane.b32.xlu0 %v1069, 36
        %v4866 = vpop.permute.xlu0 %4865
        %4867 = vrot.lane.b32.xlu0 %v1070, 36
        %v4868 = vpop.permute.xlu0 %4867
        %4869 = vrot.lane.b32.xlu0 %v1071, 36
        %v4870 = vpop.permute.xlu0 %4869
        %4871 = vrot.lane.b32.xlu0 %v1072, 36
        %v4872 = vpop.permute.xlu0 %4871
        %4873 = vrot.lane.b32.xlu0 %v1073, 36
        %v4874 = vpop.permute.xlu0 %4873
        %4875 = vrot.lane.b32.xlu0 %v1074, 36
        %v4876 = vpop.permute.xlu0 %4875
        %4877 = vrot.lane.b32.xlu0 %v1075, 36
        %v4878 = vpop.permute.xlu0 %4877
        %4879 = vrot.lane.b32.xlu0 %v1076, 36
        %v4880 = vpop.permute.xlu0 %4879
        %4881 = vrot.lane.b32.xlu0 %v1077, 36
        %v4882 = vpop.permute.xlu0 %4881
        %4883 = vrot.lane.b32.xlu0 %v1078, 36
        %v4884 = vpop.permute.xlu0 %4883
        %4885 = vrot.lane.b32.xlu0 %v1079, 36
        %v4886 = vpop.permute.xlu0 %4885
        %4887 = vrot.lane.b32.xlu0 %v1080, 36
        %v4888 = vpop.permute.xlu0 %4887
        %4889 = vrot.lane.b32.xlu0 %v1081, 36
        %v4890 = vpop.permute.xlu0 %4889
        %4891 = vrot.lane.b32.xlu0 %v1082, 36
        %v4892 = vpop.permute.xlu0 %4891
        %4893 = vrot.lane.b32.xlu0 %v1083, 36
        %v4894 = vpop.permute.xlu0 %4893
        %4895 = vrot.lane.b32.xlu0 %v1084, 36
        %v4896 = vpop.permute.xlu0 %4895
        %4897 = vrot.lane.b32.xlu0 %v1085, 36
        %v4898 = vpop.permute.xlu0 %4897
        %4899 = vrot.lane.b32.xlu0 %v1086, 36
        %v4900 = vpop.permute.xlu0 %4899
        %4901 = vrot.lane.b32.xlu0 %v1087, 36
        %v4902 = vpop.permute.xlu0 %4901
        %4903 = vrot.lane.b32.xlu0 %v1088, 36
        %v4904 = vpop.permute.xlu0 %4903
        %4905 = vrot.lane.b32.xlu0 %v1089, 36
        %v4906 = vpop.permute.xlu0 %4905
        %4907 = vrot.lane.b32.xlu0 %v1090, 36
        %v4908 = vpop.permute.xlu0 %4907
        %4909 = vrot.lane.b32.xlu0 %v1091, 36
        %v4910 = vpop.permute.xlu0 %4909
        %4911 = vrot.lane.b32.xlu0 %v1092, 36
        %v4912 = vpop.permute.xlu0 %4911
        %4913 = vrot.lane.b32.xlu0 %v1093, 36
        %v4914 = vpop.permute.xlu0 %4913
        %4915 = vrot.lane.b32.xlu0 %v1094, 36
        %v4916 = vpop.permute.xlu0 %4915
        %4917 = vrot.lane.b32.xlu0 %v1095, 36
        %v4918 = vpop.permute.xlu0 %4917
        %4919 = vrot.lane.b32.xlu0 %v1096, 36
        %v4920 = vpop.permute.xlu0 %4919
        %4921 = vrot.lane.b32.xlu0 %v1097, 36
        %v4922 = vpop.permute.xlu0 %4921
        %4923 = vrot.lane.b32.xlu0 %v1098, 36
        %v4924 = vpop.permute.xlu0 %4923
        %4925 = vrot.lane.b32.xlu0 %v1099, 36
        %v4926 = vpop.permute.xlu0 %4925
        %4927 = vrot.lane.b32.xlu0 %v1100, 36
        %v4928 = vpop.permute.xlu0 %4927
        %4929 = vrot.lane.b32.xlu0 %v1101, 36
        %v4930 = vpop.permute.xlu0 %4929
        %4931 = vrot.lane.b32.xlu0 %v1102, 36
        %v4932 = vpop.permute.xlu0 %4931
        %4933 = vrot.lane.b32.xlu0 %v1103, 36
        %v4934 = vpop.permute.xlu0 %4933
        %4935 = vrot.lane.b32.xlu0 %v1104, 36
        %v4936 = vpop.permute.xlu0 %4935
        %4937 = vrot.lane.b32.xlu0 %v1105, 36
        %v4938 = vpop.permute.xlu0 %4937
        %4939 = vrot.lane.b32.xlu0 %v1106, 36
        %v4940 = vpop.permute.xlu0 %4939
        %4941 = vrot.lane.b32.xlu0 %v1107, 36
        %v4942 = vpop.permute.xlu0 %4941
        %4943 = vrot.lane.b32.xlu0 %v1108, 36
        %v4944 = vpop.permute.xlu0 %4943
        %4945 = vrot.lane.b32.xlu0 %v1109, 36
        %v4946 = vpop.permute.xlu0 %4945
        %4947 = vrot.lane.b32.xlu0 %v1110, 36
        %v4948 = vpop.permute.xlu0 %4947
        %4949 = vrot.lane.b32.xlu0 %v1111, 36
        %v4950 = vpop.permute.xlu0 %4949
        %4951 = vrot.lane.b32.xlu0 %v1112, 36
        %v4952 = vpop.permute.xlu0 %4951
        %4953 = vrot.lane.b32.xlu0 %v1113, 36
        %v4954 = vpop.permute.xlu0 %4953
        %v5003 = vrot.slane %v1111, 1
        %v5004 = vrot.slane %v1112, 1
        %v5005 = vsel %vm1162, %v5003, %v5004
        %v5006 = vrot.slane %v1113, 1
        %v5007 = vsel %vm1162, %v5004, %v5006
        %5008 = vrot.lane.b32.xlu0 %v4054, 40
        %v5009 = vpop.permute.xlu0 %5008
        %5010 = vrot.lane.b32.xlu0 %v4056, 40
        %v5011 = vpop.permute.xlu0 %5010
        %5012 = vrot.lane.b32.xlu0 %v4055, 40
        %v5013 = vpop.permute.xlu0 %5012
        %5014 = vrot.lane.b32.xlu0 %v4059, 40
        %v5015 = vpop.permute.xlu0 %5014
        %5016 = vrot.lane.b32.xlu0 %v4061, 40
        %v5017 = vpop.permute.xlu0 %5016
        %5018 = vrot.lane.b32.xlu0 %v4060, 40
        %v5019 = vpop.permute.xlu0 %5018
        %5020 = vrot.lane.b32.xlu0 %v4064, 40
        %v5021 = vpop.permute.xlu0 %5020
        %5022 = vrot.lane.b32.xlu0 %v4066, 40
        %v5023 = vpop.permute.xlu0 %5022
        %5024 = vrot.lane.b32.xlu0 %v4065, 40
        %v5025 = vpop.permute.xlu0 %5024
        %5026 = vrot.lane.b32.xlu0 %v4069, 40
        %v5027 = vpop.permute.xlu0 %5026
        %5028 = vrot.lane.b32.xlu0 %v4071, 40
        %v5029 = vpop.permute.xlu0 %5028
        %5030 = vrot.lane.b32.xlu0 %v4070, 40
        %v5031 = vpop.permute.xlu0 %5030
        %5032 = vrot.lane.b32.xlu0 %v4074, 40
        %v5033 = vpop.permute.xlu0 %5032
        %5034 = vrot.lane.b32.xlu0 %v4076, 40
        %v5035 = vpop.permute.xlu0 %5034
        %5036 = vrot.lane.b32.xlu0 %v4075, 40
        %v5037 = vpop.permute.xlu0 %5036
        %5038 = vrot.lane.b32.xlu0 %v4079, 40
        %v5039 = vpop.permute.xlu0 %5038
        %5040 = vrot.lane.b32.xlu0 %v4081, 40
        %v5041 = vpop.permute.xlu0 %5040
        %5042 = vrot.lane.b32.xlu0 %v4080, 40
        %v5043 = vpop.permute.xlu0 %5042
        %5044 = vrot.lane.b32.xlu0 %v4084, 40
        %v5045 = vpop.permute.xlu0 %5044
        %5046 = vrot.lane.b32.xlu0 %v4086, 40
        %v5047 = vpop.permute.xlu0 %5046
        %5048 = vrot.lane.b32.xlu0 %v4085, 40
        %v5049 = vpop.permute.xlu0 %5048
        %5050 = vrot.lane.b32.xlu0 %v4089, 40
        %v5051 = vpop.permute.xlu0 %5050
        %5052 = vrot.lane.b32.xlu0 %v4091, 40
        %v5053 = vpop.permute.xlu0 %5052
        %5054 = vrot.lane.b32.xlu0 %v4090, 40
        %v5055 = vpop.permute.xlu0 %5054
        %5056 = vrot.lane.b32.xlu0 %v4094, 40
        %v5057 = vpop.permute.xlu0 %5056
        %5058 = vrot.lane.b32.xlu0 %v4096, 40
        %v5059 = vpop.permute.xlu0 %5058
        %5060 = vrot.lane.b32.xlu0 %v4095, 40
        %v5061 = vpop.permute.xlu0 %5060
        %5062 = vrot.lane.b32.xlu0 %v4099, 40
        %v5063 = vpop.permute.xlu0 %5062
        %5064 = vrot.lane.b32.xlu0 %v4101, 40
        %v5065 = vpop.permute.xlu0 %5064
        %5066 = vrot.lane.b32.xlu0 %v4100, 40
        %v5067 = vpop.permute.xlu0 %5066
        %5068 = vrot.lane.b32.xlu0 %v4104, 40
        %v5069 = vpop.permute.xlu0 %5068
        %5070 = vrot.lane.b32.xlu0 %v4106, 40
        %v5071 = vpop.permute.xlu0 %5070
        %5072 = vrot.lane.b32.xlu0 %v4105, 40
        %v5073 = vpop.permute.xlu0 %5072
        %5074 = vrot.lane.b32.xlu0 %v4109, 40
        %v5075 = vpop.permute.xlu0 %5074
        %5076 = vrot.lane.b32.xlu0 %v4111, 40
        %v5077 = vpop.permute.xlu0 %5076
        %5078 = vrot.lane.b32.xlu0 %v4110, 40
        %v5079 = vpop.permute.xlu0 %5078
        %5080 = vrot.lane.b32.xlu0 %v4114, 40
        %v5081 = vpop.permute.xlu0 %5080
        %5082 = vrot.lane.b32.xlu0 %v4116, 40
        %v5083 = vpop.permute.xlu0 %5082
        %5084 = vrot.lane.b32.xlu0 %v4115, 40
        %v5085 = vpop.permute.xlu0 %5084
        %5086 = vrot.lane.b32.xlu0 %v4119, 40
        %v5087 = vpop.permute.xlu0 %5086
        %5088 = vrot.lane.b32.xlu0 %v4121, 40
        %v5089 = vpop.permute.xlu0 %5088
        %5090 = vrot.lane.b32.xlu0 %v4120, 40
        %v5091 = vpop.permute.xlu0 %5090
        %5092 = vrot.lane.b32.xlu0 %v4562, 40
        %v5093 = vpop.permute.xlu0 %5092
        %5094 = vrot.lane.b32.xlu0 %v4564, 40
        %v5095 = vpop.permute.xlu0 %5094
        %5096 = vrot.lane.b32.xlu0 %v4563, 40
        %v5097 = vpop.permute.xlu0 %5096
        %5098 = vrot.lane.b32.xlu0 %v5005, 40
        %v5099 = vpop.permute.xlu0 %5098
        %5100 = vrot.lane.b32.xlu0 %v5007, 40
        %v5101 = vpop.permute.xlu0 %5100
        %5102 = vrot.lane.b32.xlu0 %v5006, 40
        %v5103 = vpop.permute.xlu0 %5102
        %v5152 = vsel %vm687, %v1011, %v3514
        %v5153 = vsel %vm687, %v1012, %v3516
        %v5154 = vsel %vm687, %v1013, %v3518
        %v5155 = vsel %vm687, %v1014, %v3520
        %v5156 = vsel %vm687, %v1015, %v3522
        %v5157 = vsel %vm687, %v1016, %v3524
        %v5158 = vsel %vm687, %v1017, %v3526
        %v5159 = vsel %vm687, %v1018, %v3528
        %v5160 = vsel %vm687, %v1019, %v3530
        %v5161 = vsel %vm687, %v1020, %v3532
        %v5162 = vsel %vm687, %v1021, %v3534
        %v5163 = vsel %vm687, %v1022, %v3536
        %v5164 = vsel %vm687, %v1023, %v3538
        %v5165 = vsel %vm687, %v1024, %v3540
        %v5166 = vsel %vm687, %v1025, %v3542
        %v5167 = vsel %vm687, %v1026, %v3544
        %v5168 = vsel %vm687, %v1027, %v3546
        %v5169 = vsel %vm687, %v1028, %v3548
        %v5170 = vsel %vm687, %v1029, %v3550
        %v5171 = vsel %vm687, %v1030, %v3552
        %v5172 = vsel %vm687, %v1031, %v3554
        %v5173 = vsel %vm687, %v1032, %v3556
        %v5174 = vsel %vm687, %v1033, %v3558
        %v5175 = vsel %vm687, %v1034, %v3560
        %v5176 = vsel %vm687, %v1035, %v3562
        %v5177 = vsel %vm687, %v1036, %v3564
        %v5178 = vsel %vm687, %v1037, %v3566
        %v5179 = vsel %vm687, %v1038, %v3568
        %v5180 = vsel %vm687, %v1039, %v3570
        %v5181 = vsel %vm687, %v1040, %v3572
        %v5182 = vsel %vm687, %v1041, %v3574
        %v5183 = vsel %vm687, %v1042, %v3576
        %v5184 = vsel %vm687, %v1043, %v3578
        %v5185 = vsel %vm687, %v1044, %v3580
        %v5186 = vsel %vm687, %v1045, %v3582
        %v5187 = vsel %vm687, %v1046, %v3584
        %v5188 = vsel %vm687, %v1047, %v3586
        %v5189 = vsel %vm687, %v1048, %v3588
        %v5190 = vsel %vm687, %v1049, %v3590
        %v5191 = vsel %vm687, %v1050, %v3592
        %v5192 = vsel %vm687, %v1051, %v3594
        %v5193 = vsel %vm687, %v1052, %v3596
        %v5194 = vsel %vm687, %v1053, %v3598
        %v5195 = vsel %vm687, %v1054, %v3600
        %v5196 = vsel %vm687, %v1055, %v3602
        %v5197 = vsel %vm687, %v1056, %v3604
        %v5198 = vsel %vm687, %v1057, %v3606
        %v5199 = vsel %vm687, %v1058, %v3608
        %v5200 = vsel %vm3045, %v5152, %v3739
        %v5201 = vsel %vm3045, %v5153, %v3741
        %v5202 = vsel %vm3045, %v5154, %v3743
        %v5203 = vsel %vm3045, %v5155, %v3745
        %v5204 = vsel %vm3045, %v5156, %v3747
        %v5205 = vsel %vm3045, %v5157, %v3749
        %v5206 = vsel %vm3045, %v5158, %v3751
        %v5207 = vsel %vm3045, %v5159, %v3753
        %v5208 = vsel %vm3045, %v5160, %v3755
        %v5209 = vsel %vm3045, %v5161, %v3757
        %v5210 = vsel %vm3045, %v5162, %v3759
        %v5211 = vsel %vm3045, %v5163, %v3761
        %v5212 = vsel %vm3045, %v5164, %v3763
        %v5213 = vsel %vm3045, %v5165, %v3765
        %v5214 = vsel %vm3045, %v5166, %v3767
        %v5215 = vsel %vm3045, %v5167, %v3769
        %v5216 = vsel %vm3045, %v5168, %v3771
        %v5217 = vsel %vm3045, %v5169, %v3773
        %v5218 = vsel %vm3045, %v5170, %v3775
        %v5219 = vsel %vm3045, %v5171, %v3777
        %v5220 = vsel %vm3045, %v5172, %v3779
        %v5221 = vsel %vm3045, %v5173, %v3781
        %v5222 = vsel %vm3045, %v5174, %v3783
        %v5223 = vsel %vm3045, %v5175, %v3785
        %v5224 = vsel %vm3045, %v5176, %v3787
        %v5225 = vsel %vm3045, %v5177, %v3789
        %v5226 = vsel %vm3045, %v5178, %v3791
        %v5227 = vsel %vm3045, %v5179, %v3793
        %v5228 = vsel %vm3045, %v5180, %v3795
        %v5229 = vsel %vm3045, %v5181, %v3797
        %v5230 = vsel %vm3045, %v5182, %v3799
        %v5231 = vsel %vm3045, %v5183, %v3801
        %v5232 = vsel %vm3045, %v5184, %v3803
        %v5233 = vsel %vm3045, %v5185, %v3805
        %v5234 = vsel %vm3045, %v5186, %v3807
        %v5235 = vsel %vm3045, %v5187, %v3809
        %v5236 = vsel %vm3045, %v5188, %v3811
        %v5237 = vsel %vm3045, %v5189, %v3813
        %v5238 = vsel %vm3045, %v5190, %v3815
        %v5239 = vsel %vm3045, %v5191, %v3817
        %v5240 = vsel %vm3045, %v5192, %v3819
        %v5241 = vsel %vm3045, %v5193, %v3821
        %v5242 = vsel %vm3045, %v5194, %v3823
        %v5243 = vsel %vm3045, %v5195, %v3825
        %v5244 = vsel %vm3045, %v5196, %v3827
        %v5245 = vsel %vm3045, %v5197, %v3829
        %v5246 = vsel %vm3045, %v5198, %v3831
        %v5247 = vsel %vm3045, %v5199, %v3833
        %v5248 = vsel %vm3078, %v5200, %v3899
        %v5249 = vsel %vm3078, %v5201, %v3901
        %v5250 = vsel %vm3078, %v5202, %v3903
        %v5251 = vsel %vm3078, %v5203, %v3905
        %v5252 = vsel %vm3078, %v5204, %v3907
        %v5253 = vsel %vm3078, %v5205, %v3909
        %v5254 = vsel %vm3078, %v5206, %v3911
        %v5255 = vsel %vm3078, %v5207, %v3913
        %v5256 = vsel %vm3078, %v5208, %v3915
        %v5257 = vsel %vm3078, %v5209, %v3917
        %v5258 = vsel %vm3078, %v5210, %v3919
        %v5259 = vsel %vm3078, %v5211, %v3921
        %v5260 = vsel %vm3078, %v5212, %v3923
        %v5261 = vsel %vm3078, %v5213, %v3925
        %v5262 = vsel %vm3078, %v5214, %v3927
        %v5263 = vsel %vm3078, %v5215, %v3929
        %v5264 = vsel %vm3078, %v5216, %v3931
        %v5265 = vsel %vm3078, %v5217, %v3933
        %v5266 = vsel %vm3078, %v5218, %v3935
        %v5267 = vsel %vm3078, %v5219, %v3937
        %v5268 = vsel %vm3078, %v5220, %v3939
        %v5269 = vsel %vm3078, %v5221, %v3941
        %v5270 = vsel %vm3078, %v5222, %v3943
        %v5271 = vsel %vm3078, %v5223, %v3945
        %v5272 = vsel %vm3078, %v5224, %v3947
        %v5273 = vsel %vm3078, %v5225, %v3949
        %v5274 = vsel %vm3078, %v5226, %v3951
        %v5275 = vsel %vm3078, %v5227, %v3953
        %v5276 = vsel %vm3078, %v5228, %v3955
        %v5277 = vsel %vm3078, %v5229, %v3957
        %v5278 = vsel %vm3078, %v5230, %v3959
        %v5279 = vsel %vm3078, %v5231, %v3961
        %v5280 = vsel %vm3078, %v5232, %v3963
        %v5281 = vsel %vm3078, %v5233, %v3965
        %v5282 = vsel %vm3078, %v5234, %v3967
        %v5283 = vsel %vm3078, %v5235, %v3969
        %v5284 = vsel %vm3078, %v5236, %v3971
        %v5285 = vsel %vm3078, %v5237, %v3973
        %v5286 = vsel %vm3078, %v5238, %v3975
        %v5287 = vsel %vm3078, %v5239, %v3977
        %v5288 = vsel %vm3078, %v5240, %v3979
        %v5289 = vsel %vm3078, %v5241, %v3981
        %v5290 = vsel %vm3078, %v5242, %v3983
        %v5291 = vsel %vm3078, %v5243, %v3985
        %v5292 = vsel %vm3078, %v5244, %v3987
        %v5293 = vsel %vm3078, %v5245, %v3989
        %v5294 = vsel %vm3078, %v5246, %v3991
        %v5295 = vsel %vm3078, %v5247, %v3993
        %v5296 = vsel %vm3111, %v5248, %v4123
        %v5297 = vsel %vm3111, %v5249, %v4125
        %v5298 = vsel %vm3111, %v5250, %v4127
        %v5299 = vsel %vm3111, %v5251, %v4129
        %v5300 = vsel %vm3111, %v5252, %v4131
        %v5301 = vsel %vm3111, %v5253, %v4133
        %v5302 = vsel %vm3111, %v5254, %v4135
        %v5303 = vsel %vm3111, %v5255, %v4137
        %v5304 = vsel %vm3111, %v5256, %v4139
        %v5305 = vsel %vm3111, %v5257, %v4141
        %v5306 = vsel %vm3111, %v5258, %v4143
        %v5307 = vsel %vm3111, %v5259, %v4145
        %v5308 = vsel %vm3111, %v5260, %v4147
        %v5309 = vsel %vm3111, %v5261, %v4149
        %v5310 = vsel %vm3111, %v5262, %v4151
        %v5311 = vsel %vm3111, %v5263, %v4153
        %v5312 = vsel %vm3111, %v5264, %v4155
        %v5313 = vsel %vm3111, %v5265, %v4157
        %v5314 = vsel %vm3111, %v5266, %v4159
        %v5315 = vsel %vm3111, %v5267, %v4161
        %v5316 = vsel %vm3111, %v5268, %v4163
        %v5317 = vsel %vm3111, %v5269, %v4165
        %v5318 = vsel %vm3111, %v5270, %v4167
        %v5319 = vsel %vm3111, %v5271, %v4169
        %v5320 = vsel %vm3111, %v5272, %v4171
        %v5321 = vsel %vm3111, %v5273, %v4173
        %v5322 = vsel %vm3111, %v5274, %v4175
        %v5323 = vsel %vm3111, %v5275, %v4177
        %v5324 = vsel %vm3111, %v5276, %v4179
        %v5325 = vsel %vm3111, %v5277, %v4181
        %v5326 = vsel %vm3111, %v5278, %v4183
        %v5327 = vsel %vm3111, %v5279, %v4185
        %v5328 = vsel %vm3111, %v5280, %v4187
        %v5329 = vsel %vm3111, %v5281, %v4189
        %v5330 = vsel %vm3111, %v5282, %v4191
        %v5331 = vsel %vm3111, %v5283, %v4193
        %v5332 = vsel %vm3111, %v5284, %v4195
        %v5333 = vsel %vm3111, %v5285, %v4197
        %v5334 = vsel %vm3111, %v5286, %v4199
        %v5335 = vsel %vm3111, %v5287, %v4201
        %v5336 = vsel %vm3111, %v5288, %v4203
        %v5337 = vsel %vm3111, %v5289, %v4205
        %v5338 = vsel %vm3111, %v5290, %v4207
        %v5339 = vsel %vm3111, %v5291, %v4209
        %v5340 = vsel %vm3111, %v5292, %v4211
        %v5341 = vsel %vm3111, %v5293, %v4213
        %v5342 = vsel %vm3111, %v5294, %v4215
        %v5343 = vsel %vm3111, %v5295, %v4217
        %v5344 = vsel %vm3144, %v5296, %v4272
        %v5345 = vsel %vm3144, %v5297, %v4274
        %v5346 = vsel %vm3144, %v5298, %v4276
        %v5347 = vsel %vm3144, %v5299, %v4278
        %v5348 = vsel %vm3144, %v5300, %v4280
        %v5349 = vsel %vm3144, %v5301, %v4282
        %v5350 = vsel %vm3144, %v5302, %v4284
        %v5351 = vsel %vm3144, %v5303, %v4286
        %v5352 = vsel %vm3144, %v5304, %v4288
        %v5353 = vsel %vm3144, %v5305, %v4290
        %v5354 = vsel %vm3144, %v5306, %v4292
        %v5355 = vsel %vm3144, %v5307, %v4294
        %v5356 = vsel %vm3144, %v5308, %v4296
        %v5357 = vsel %vm3144, %v5309, %v4298
        %v5358 = vsel %vm3144, %v5310, %v4300
        %v5359 = vsel %vm3144, %v5311, %v4302
        %v5360 = vsel %vm3144, %v5312, %v4304
        %v5361 = vsel %vm3144, %v5313, %v4306
        %v5362 = vsel %vm3144, %v5314, %v4308
        %v5363 = vsel %vm3144, %v5315, %v4310
        %v5364 = vsel %vm3144, %v5316, %v4312
        %v5365 = vsel %vm3144, %v5317, %v4314
        %v5366 = vsel %vm3144, %v5318, %v4316
        %v5367 = vsel %vm3144, %v5319, %v4318
        %v5368 = vsel %vm3144, %v5320, %v4320
        %v5369 = vsel %vm3144, %v5321, %v4322
        %v5370 = vsel %vm3144, %v5322, %v4324
        %v5371 = vsel %vm3144, %v5323, %v4326
        %v5372 = vsel %vm3144, %v5324, %v4328
        %v5373 = vsel %vm3144, %v5325, %v4330
        %v5374 = vsel %vm3144, %v5326, %v4332
        %v5375 = vsel %vm3144, %v5327, %v4334
        %v5376 = vsel %vm3144, %v5328, %v4336
        %v5377 = vsel %vm3144, %v5329, %v4338
        %v5378 = vsel %vm3144, %v5330, %v4340
        %v5379 = vsel %vm3144, %v5331, %v4342
        %v5380 = vsel %vm3144, %v5332, %v4344
        %v5381 = vsel %vm3144, %v5333, %v4346
        %v5382 = vsel %vm3144, %v5334, %v4348
        %v5383 = vsel %vm3144, %v5335, %v4350
        %v5384 = vsel %vm3144, %v5336, %v4352
        %v5385 = vsel %vm3144, %v5337, %v4354
        %v5386 = vsel %vm3144, %v5338, %v4356
        %v5387 = vsel %vm3144, %v5339, %v4358
        %v5388 = vsel %vm3144, %v5340, %v4360
        %v5389 = vsel %vm3144, %v5341, %v4362
        %v5390 = vsel %vm3144, %v5342, %v4364
        %v5391 = vsel %vm3144, %v5343, %v4366
        %v5392 = vsel %vm3177, %v5344, %v4417
        %v5393 = vsel %vm3177, %v5345, %v4419
        %v5394 = vsel %vm3177, %v5346, %v4421
        %v5395 = vsel %vm3177, %v5347, %v4423
        %v5396 = vsel %vm3177, %v5348, %v4425
        %v5397 = vsel %vm3177, %v5349, %v4427
        %v5398 = vsel %vm3177, %v5350, %v4429
        %v5399 = vsel %vm3177, %v5351, %v4431
        %v5400 = vsel %vm3177, %v5352, %v4433
        %v5401 = vsel %vm3177, %v5353, %v4435
        %v5402 = vsel %vm3177, %v5354, %v4437
        %v5403 = vsel %vm3177, %v5355, %v4439
        %v5404 = vsel %vm3177, %v5356, %v4441
        %v5405 = vsel %vm3177, %v5357, %v4443
        %v5406 = vsel %vm3177, %v5358, %v4445
        %v5407 = vsel %vm3177, %v5359, %v4447
        %v5408 = vsel %vm3177, %v5360, %v4449
        %v5409 = vsel %vm3177, %v5361, %v4451
        %v5410 = vsel %vm3177, %v5362, %v4453
        %v5411 = vsel %vm3177, %v5363, %v4455
        %v5412 = vsel %vm3177, %v5364, %v4457
        %v5413 = vsel %vm3177, %v5365, %v4459
        %v5414 = vsel %vm3177, %v5366, %v4461
        %v5415 = vsel %vm3177, %v5367, %v4463
        %v5416 = vsel %vm3177, %v5368, %v4465
        %v5417 = vsel %vm3177, %v5369, %v4467
        %v5418 = vsel %vm3177, %v5370, %v4469
        %v5419 = vsel %vm3177, %v5371, %v4471
        %v5420 = vsel %vm3177, %v5372, %v4473
        %v5421 = vsel %vm3177, %v5373, %v4475
        %v5422 = vsel %vm3177, %v5374, %v4477
        %v5423 = vsel %vm3177, %v5375, %v4479
        %v5424 = vsel %vm3177, %v5376, %v4481
        %v5425 = vsel %vm3177, %v5377, %v4483
        %v5426 = vsel %vm3177, %v5378, %v4485
        %v5427 = vsel %vm3177, %v5379, %v4487
        %v5428 = vsel %vm3177, %v5380, %v4489
        %v5429 = vsel %vm3177, %v5381, %v4491
        %v5430 = vsel %vm3177, %v5382, %v4493
        %v5431 = vsel %vm3177, %v5383, %v4495
        %v5432 = vsel %vm3177, %v5384, %v4497
        %v5433 = vsel %vm3177, %v5385, %v4499
        %v5434 = vsel %vm3177, %v5386, %v4501
        %v5435 = vsel %vm3177, %v5387, %v4503
        %v5436 = vsel %vm3177, %v5388, %v4505
        %v5437 = vsel %vm3177, %v5389, %v4507
        %v5438 = vsel %vm3177, %v5390, %v4509
        %v5439 = vsel %vm3177, %v5391, %v4511
        %v5440 = vsel %vm3210, %v5392, %v4566
        %v5441 = vsel %vm3210, %v5393, %v4568
        %v5442 = vsel %vm3210, %v5394, %v4570
        %v5443 = vsel %vm3210, %v5395, %v4572
        %v5444 = vsel %vm3210, %v5396, %v4574
        %v5445 = vsel %vm3210, %v5397, %v4576
        %v5446 = vsel %vm3210, %v5398, %v4578
        %v5447 = vsel %vm3210, %v5399, %v4580
        %v5448 = vsel %vm3210, %v5400, %v4582
        %v5449 = vsel %vm3210, %v5401, %v4584
        %v5450 = vsel %vm3210, %v5402, %v4586
        %v5451 = vsel %vm3210, %v5403, %v4588
        %v5452 = vsel %vm3210, %v5404, %v4590
        %v5453 = vsel %vm3210, %v5405, %v4592
        %v5454 = vsel %vm3210, %v5406, %v4594
        %v5455 = vsel %vm3210, %v5407, %v4596
        %v5456 = vsel %vm3210, %v5408, %v4598
        %v5457 = vsel %vm3210, %v5409, %v4600
        %v5458 = vsel %vm3210, %v5410, %v4602
        %v5459 = vsel %vm3210, %v5411, %v4604
        %v5460 = vsel %vm3210, %v5412, %v4606
        %v5461 = vsel %vm3210, %v5413, %v4608
        %v5462 = vsel %vm3210, %v5414, %v4610
        %v5463 = vsel %vm3210, %v5415, %v4612
        %v5464 = vsel %vm3210, %v5416, %v4614
        %v5465 = vsel %vm3210, %v5417, %v4616
        %v5466 = vsel %vm3210, %v5418, %v4618
        %v5467 = vsel %vm3210, %v5419, %v4620
        %v5468 = vsel %vm3210, %v5420, %v4622
        %v5469 = vsel %vm3210, %v5421, %v4624
        %v5470 = vsel %vm3210, %v5422, %v4626
        %v5471 = vsel %vm3210, %v5423, %v4628
        %v5472 = vsel %vm3210, %v5424, %v4630
        %v5473 = vsel %vm3210, %v5425, %v4632
        %v5474 = vsel %vm3210, %v5426, %v4634
        %v5475 = vsel %vm3210, %v5427, %v4636
        %v5476 = vsel %vm3210, %v5428, %v4638
        %v5477 = vsel %vm3210, %v5429, %v4640
        %v5478 = vsel %vm3210, %v5430, %v4642
        %v5479 = vsel %vm3210, %v5431, %v4644
        %v5480 = vsel %vm3210, %v5432, %v4646
        %v5481 = vsel %vm3210, %v5433, %v4648
        %v5482 = vsel %vm3210, %v5434, %v4650
        %v5483 = vsel %vm3210, %v5435, %v4652
        %v5484 = vsel %vm3210, %v5436, %v4654
        %v5485 = vsel %vm3210, %v5437, %v4656
        %v5486 = vsel %vm3210, %v5438, %v4658
        %v5487 = vsel %vm3210, %v5439, %v4660
        %v5488 = vsel %vm3243, %v5440, %v4715
        %v5489 = vsel %vm3243, %v5441, %v4717
        %v5490 = vsel %vm3243, %v5442, %v4719
        %v5491 = vsel %vm3243, %v5443, %v4721
        %v5492 = vsel %vm3243, %v5444, %v4723
        %v5493 = vsel %vm3243, %v5445, %v4725
        %v5494 = vsel %vm3243, %v5446, %v4727
        %v5495 = vsel %vm3243, %v5447, %v4729
        %v5496 = vsel %vm3243, %v5448, %v4731
        %v5497 = vsel %vm3243, %v5449, %v4733
        %v5498 = vsel %vm3243, %v5450, %v4735
        %v5499 = vsel %vm3243, %v5451, %v4737
        %v5500 = vsel %vm3243, %v5452, %v4739
        %v5501 = vsel %vm3243, %v5453, %v4741
        %v5502 = vsel %vm3243, %v5454, %v4743
        %v5503 = vsel %vm3243, %v5455, %v4745
        %v5504 = vsel %vm3243, %v5456, %v4747
        %v5505 = vsel %vm3243, %v5457, %v4749
        %v5506 = vsel %vm3243, %v5458, %v4751
        %v5507 = vsel %vm3243, %v5459, %v4753
        %v5508 = vsel %vm3243, %v5460, %v4755
        %v5509 = vsel %vm3243, %v5461, %v4757
        %v5510 = vsel %vm3243, %v5462, %v4759
        %v5511 = vsel %vm3243, %v5463, %v4761
        %v5512 = vsel %vm3243, %v5464, %v4763
        %v5513 = vsel %vm3243, %v5465, %v4765
        %v5514 = vsel %vm3243, %v5466, %v4767
        %v5515 = vsel %vm3243, %v5467, %v4769
        %v5516 = vsel %vm3243, %v5468, %v4771
        %v5517 = vsel %vm3243, %v5469, %v4773
        %v5518 = vsel %vm3243, %v5470, %v4775
        %v5519 = vsel %vm3243, %v5471, %v4777
        %v5520 = vsel %vm3243, %v5472, %v4779
        %v5521 = vsel %vm3243, %v5473, %v4781
        %v5522 = vsel %vm3243, %v5474, %v4783
        %v5523 = vsel %vm3243, %v5475, %v4785
        %v5524 = vsel %vm3243, %v5476, %v4787
        %v5525 = vsel %vm3243, %v5477, %v4789
        %v5526 = vsel %vm3243, %v5478, %v4791
        %v5527 = vsel %vm3243, %v5479, %v4793
        %v5528 = vsel %vm3243, %v5480, %v4795
        %v5529 = vsel %vm3243, %v5481, %v4797
        %v5530 = vsel %vm3243, %v5482, %v4799
        %v5531 = vsel %vm3243, %v5483, %v4801
        %v5532 = vsel %vm3243, %v5484, %v4803
        %v5533 = vsel %vm3243, %v5485, %v4805
        %v5534 = vsel %vm3243, %v5486, %v4807
        %v5535 = vsel %vm3243, %v5487, %v4809
        %v5536 = vsel %vm3276, %v5488, %v4860
        %v5537 = vsel %vm3276, %v5489, %v4862
        %v5538 = vsel %vm3276, %v5490, %v4864
        %v5539 = vsel %vm3276, %v5491, %v4866
        %v5540 = vsel %vm3276, %v5492, %v4868
        %v5541 = vsel %vm3276, %v5493, %v4870
        %v5542 = vsel %vm3276, %v5494, %v4872
        %v5543 = vsel %vm3276, %v5495, %v4874
        %v5544 = vsel %vm3276, %v5496, %v4876
        %v5545 = vsel %vm3276, %v5497, %v4878
        %v5546 = vsel %vm3276, %v5498, %v4880
        %v5547 = vsel %vm3276, %v5499, %v4882
        %v5548 = vsel %vm3276, %v5500, %v4884
        %v5549 = vsel %vm3276, %v5501, %v4886
        %v5550 = vsel %vm3276, %v5502, %v4888
        %v5551 = vsel %vm3276, %v5503, %v4890
        %v5552 = vsel %vm3276, %v5504, %v4892
        %v5553 = vsel %vm3276, %v5505, %v4894
        %v5554 = vsel %vm3276, %v5506, %v4896
        %v5555 = vsel %vm3276, %v5507, %v4898
        %v5556 = vsel %vm3276, %v5508, %v4900
        %v5557 = vsel %vm3276, %v5509, %v4902
        %v5558 = vsel %vm3276, %v5510, %v4904
        %v5559 = vsel %vm3276, %v5511, %v4906
        %v5560 = vsel %vm3276, %v5512, %v4908
        %v5561 = vsel %vm3276, %v5513, %v4910
        %v5562 = vsel %vm3276, %v5514, %v4912
        %v5563 = vsel %vm3276, %v5515, %v4914
        %v5564 = vsel %vm3276, %v5516, %v4916
        %v5565 = vsel %vm3276, %v5517, %v4918
        %v5566 = vsel %vm3276, %v5518, %v4920
        %v5567 = vsel %vm3276, %v5519, %v4922
        %v5568 = vsel %vm3276, %v5520, %v4924
        %v5569 = vsel %vm3276, %v5521, %v4926
        %v5570 = vsel %vm3276, %v5522, %v4928
        %v5571 = vsel %vm3276, %v5523, %v4930
        %v5572 = vsel %vm3276, %v5524, %v4932
        %v5573 = vsel %vm3276, %v5525, %v4934
        %v5574 = vsel %vm3276, %v5526, %v4936
        %v5575 = vsel %vm3276, %v5527, %v4938
        %v5576 = vsel %vm3276, %v5528, %v4940
        %v5577 = vsel %vm3276, %v5529, %v4942
        %v5578 = vsel %vm3276, %v5530, %v4944
        %v5579 = vsel %vm3276, %v5531, %v4946
        %v5580 = vsel %vm3276, %v5532, %v4948
        %v5581 = vsel %vm3276, %v5533, %v4950
        %v5582 = vsel %vm3276, %v5534, %v4952
        %v5583 = vsel %vm3276, %v5535, %v4954
        %v5584 = vsel %vm3309, %v5536, %v5009
        %v5585 = vsel %vm3309, %v5537, %v5011
        %v5586 = vsel %vm3309, %v5538, %v5013
        %v5587 = vsel %vm3309, %v5539, %v5015
        %v5588 = vsel %vm3309, %v5540, %v5017
        %v5589 = vsel %vm3309, %v5541, %v5019
        %v5590 = vsel %vm3309, %v5542, %v5021
        %v5591 = vsel %vm3309, %v5543, %v5023
        %v5592 = vsel %vm3309, %v5544, %v5025
        %v5593 = vsel %vm3309, %v5545, %v5027
        %v5594 = vsel %vm3309, %v5546, %v5029
        %v5595 = vsel %vm3309, %v5547, %v5031
        %v5596 = vsel %vm3309, %v5548, %v5033
        %v5597 = vsel %vm3309, %v5549, %v5035
        %v5598 = vsel %vm3309, %v5550, %v5037
        %v5599 = vsel %vm3309, %v5551, %v5039
        %v5600 = vsel %vm3309, %v5552, %v5041
        %v5601 = vsel %vm3309, %v5553, %v5043
        %v5602 = vsel %vm3309, %v5554, %v5045
        %v5603 = vsel %vm3309, %v5555, %v5047
        %v5604 = vsel %vm3309, %v5556, %v5049
        %v5605 = vsel %vm3309, %v5557, %v5051
        %v5606 = vsel %vm3309, %v5558, %v5053
        %v5607 = vsel %vm3309, %v5559, %v5055
        %v5608 = vsel %vm3309, %v5560, %v5057
        %v5609 = vsel %vm3309, %v5561, %v5059
        %v5610 = vsel %vm3309, %v5562, %v5061
        %v5611 = vsel %vm3309, %v5563, %v5063
        %v5612 = vsel %vm3309, %v5564, %v5065
        %v5613 = vsel %vm3309, %v5565, %v5067
        %v5614 = vsel %vm3309, %v5566, %v5069
        %v5615 = vsel %vm3309, %v5567, %v5071
        %v5616 = vsel %vm3309, %v5568, %v5073
        %v5617 = vsel %vm3309, %v5569, %v5075
        %v5618 = vsel %vm3309, %v5570, %v5077
        %v5619 = vsel %vm3309, %v5571, %v5079
        %v5620 = vsel %vm3309, %v5572, %v5081
        %v5621 = vsel %vm3309, %v5573, %v5083
        %v5622 = vsel %vm3309, %v5574, %v5085
        %v5623 = vsel %vm3309, %v5575, %v5087
        %v5624 = vsel %vm3309, %v5576, %v5089
        %v5625 = vsel %vm3309, %v5577, %v5091
        %v5626 = vsel %vm3309, %v5578, %v5093
        %v5627 = vsel %vm3309, %v5579, %v5095
        %v5628 = vsel %vm3309, %v5580, %v5097
        %v5629 = vsel %vm3309, %v5581, %v5099
        %v5630 = vsel %vm3309, %v5582, %v5101
        %v5631 = vsel %vm3309, %v5583, %v5103
        %v5680 = vrot.slane %v5584, 1
        %v5681 = vrot.slane %v5585, 1
        %v5682 = vsel %vm1162, %v5680, %v5681
        %v5683 = vrot.slane %v5586, 1
        %v5684 = vsel %vm1162, %v5681, %v5683
        %v5685 = vrot.slane %v5587, 1
        %v5686 = vrot.slane %v5588, 1
        %v5687 = vsel %vm1162, %v5685, %v5686
        %v5688 = vrot.slane %v5589, 1
        %v5689 = vsel %vm1162, %v5686, %v5688
        %v5690 = vrot.slane %v5590, 1
        %v5691 = vrot.slane %v5591, 1
        %v5692 = vsel %vm1162, %v5690, %v5691
        %v5693 = vrot.slane %v5592, 1
        %v5694 = vsel %vm1162, %v5691, %v5693
        %v5695 = vrot.slane %v5593, 1
        %v5696 = vrot.slane %v5594, 1
        %v5697 = vsel %vm1162, %v5695, %v5696
        %v5698 = vrot.slane %v5595, 1
        %v5699 = vsel %vm1162, %v5696, %v5698
        %v5700 = vrot.slane %v5596, 1
        %v5701 = vrot.slane %v5597, 1
        %v5702 = vsel %vm1162, %v5700, %v5701
        %v5703 = vrot.slane %v5598, 1
        %v5704 = vsel %vm1162, %v5701, %v5703
        %v5705 = vrot.slane %v5599, 1
        %v5706 = vrot.slane %v5600, 1
        %v5707 = vsel %vm1162, %v5705, %v5706
        %v5708 = vrot.slane %v5601, 1
        %v5709 = vsel %vm1162, %v5706, %v5708
        %v5710 = vrot.slane %v5602, 1
        %v5711 = vrot.slane %v5603, 1
        %v5712 = vsel %vm1162, %v5710, %v5711
        %v5713 = vrot.slane %v5604, 1
        %v5714 = vsel %vm1162, %v5711, %v5713
        %v5715 = vrot.slane %v5605, 1
        %v5716 = vrot.slane %v5606, 1
        %v5717 = vsel %vm1162, %v5715, %v5716
        %v5718 = vrot.slane %v5607, 1
        %v5719 = vsel %vm1162, %v5716, %v5718
        %v5720 = vrot.slane %v5608, 1
        %v5721 = vrot.slane %v5609, 1
        %v5722 = vsel %vm1162, %v5720, %v5721
        %v5723 = vrot.slane %v5610, 1
        %v5724 = vsel %vm1162, %v5721, %v5723
        %v5725 = vrot.slane %v5611, 1
        %v5726 = vrot.slane %v5612, 1
        %v5727 = vsel %vm1162, %v5725, %v5726
        %v5728 = vrot.slane %v5613, 1
        %v5729 = vsel %vm1162, %v5726, %v5728
        %v5730 = vrot.slane %v5614, 1
        %v5731 = vrot.slane %v5615, 1
        %v5732 = vsel %vm1162, %v5730, %v5731
        %v5733 = vrot.slane %v5616, 1
        %v5734 = vsel %vm1162, %v5731, %v5733
        %v5735 = vrot.slane %v5617, 1
        %v5736 = vrot.slane %v5618, 1
        %v5737 = vsel %vm1162, %v5735, %v5736
        %v5738 = vrot.slane %v5619, 1
        %v5739 = vsel %vm1162, %v5736, %v5738
        %v5740 = vrot.slane %v5620, 1
        %v5741 = vrot.slane %v5621, 1
        %v5742 = vsel %vm1162, %v5740, %v5741
        %v5743 = vrot.slane %v5622, 1
        %v5744 = vsel %vm1162, %v5741, %v5743
        %v5745 = vrot.slane %v5623, 1
        %v5746 = vrot.slane %v5624, 1
        %v5747 = vsel %vm1162, %v5745, %v5746
        %v5748 = vrot.slane %v5625, 1
        %v5749 = vsel %vm1162, %v5746, %v5748
        %v5750 = vrot.slane %v5626, 1
        %v5751 = vrot.slane %v5627, 1
        %v5752 = vsel %vm1162, %v5750, %v5751
        %v5753 = vrot.slane %v5628, 1
        %v5754 = vsel %vm1162, %v5751, %v5753
        %v5755 = vrot.slane %v5629, 1
        %v5756 = vrot.slane %v5630, 1
        %v5757 = vsel %vm1162, %v5755, %v5756
        %v5758 = vrot.slane %v5631, 1
        %v5759 = vsel %vm1162, %v5756, %v5758
        %5760 = vrot.lane.b32.xlu0 %v5682, 64
        %v5761 = vpop.permute.xlu0 %5760
        %5762 = vrot.lane.b32.xlu0 %v5684, 64
        %v5763 = vpop.permute.xlu0 %5762
        %5764 = vrot.lane.b32.xlu0 %v5687, 64
        %v5765 = vpop.permute.xlu0 %5764
        %5766 = vrot.lane.b32.xlu0 %v5689, 64
        %v5767 = vpop.permute.xlu0 %5766
        %5768 = vrot.lane.b32.xlu0 %v5692, 64
        %v5769 = vpop.permute.xlu0 %5768
        %5770 = vrot.lane.b32.xlu0 %v5694, 64
        %v5771 = vpop.permute.xlu0 %5770
        %5772 = vrot.lane.b32.xlu0 %v5697, 64
        %v5773 = vpop.permute.xlu0 %5772
        %5774 = vrot.lane.b32.xlu0 %v5699, 64
        %v5775 = vpop.permute.xlu0 %5774
        %5776 = vrot.lane.b32.xlu0 %v5702, 64
        %v5777 = vpop.permute.xlu0 %5776
        %5778 = vrot.lane.b32.xlu0 %v5704, 64
        %v5779 = vpop.permute.xlu0 %5778
        %5780 = vrot.lane.b32.xlu0 %v5707, 64
        %v5781 = vpop.permute.xlu0 %5780
        %5782 = vrot.lane.b32.xlu0 %v5709, 64
        %v5783 = vpop.permute.xlu0 %5782
        %5784 = vrot.lane.b32.xlu0 %v5712, 64
        %v5785 = vpop.permute.xlu0 %5784
        %5786 = vrot.lane.b32.xlu0 %v5714, 64
        %v5787 = vpop.permute.xlu0 %5786
        %5788 = vrot.lane.b32.xlu0 %v5717, 64
        %v5789 = vpop.permute.xlu0 %5788
        %5790 = vrot.lane.b32.xlu0 %v5719, 64
        %v5791 = vpop.permute.xlu0 %5790
        %5792 = vrot.lane.b32.xlu0 %v5722, 64
        %v5793 = vpop.permute.xlu0 %5792
        %5794 = vrot.lane.b32.xlu0 %v5724, 64
        %v5795 = vpop.permute.xlu0 %5794
        %5796 = vrot.lane.b32.xlu0 %v5727, 64
        %v5797 = vpop.permute.xlu0 %5796
        %5798 = vrot.lane.b32.xlu0 %v5729, 64
        %v5799 = vpop.permute.xlu0 %5798
        %5800 = vrot.lane.b32.xlu0 %v5732, 64
        %v5801 = vpop.permute.xlu0 %5800
        %5802 = vrot.lane.b32.xlu0 %v5734, 64
        %v5803 = vpop.permute.xlu0 %5802
        %5804 = vrot.lane.b32.xlu0 %v5737, 64
        %v5805 = vpop.permute.xlu0 %5804
        %5806 = vrot.lane.b32.xlu0 %v5739, 64
        %v5807 = vpop.permute.xlu0 %5806
        %5808 = vrot.lane.b32.xlu0 %v5742, 64
        %v5809 = vpop.permute.xlu0 %5808
        %5810 = vrot.lane.b32.xlu0 %v5744, 64
        %v5811 = vpop.permute.xlu0 %5810
        %5812 = vrot.lane.b32.xlu0 %v5747, 64
        %v5813 = vpop.permute.xlu0 %5812
        %5814 = vrot.lane.b32.xlu0 %v5749, 64
        %v5815 = vpop.permute.xlu0 %5814
        %5816 = vrot.lane.b32.xlu0 %v5752, 64
        %v5817 = vpop.permute.xlu0 %5816
        %5818 = vrot.lane.b32.xlu0 %v5754, 64
        %v5819 = vpop.permute.xlu0 %5818
        %5820 = vrot.lane.b32.xlu0 %v5757, 64
        %v5821 = vpop.permute.xlu0 %5820
        %5822 = vrot.lane.b32.xlu0 %v5759, 64
        %v5823 = vpop.permute.xlu0 %5822
        %vm5856 = vcmask 523264
        %v5857 = vsel %vm5856, %v3475, %v5761
        %v5858 = vsel %vm5856, %v3476, %v5763
        %v5859 = vsel %vm5856, %v3477, %v5765
        %v5860 = vsel %vm5856, %v3478, %v5767
        %v5861 = vsel %vm5856, %v3479, %v5769
        %v5862 = vsel %vm5856, %v3480, %v5771
        %v5863 = vsel %vm5856, %v3481, %v5773
        %v5864 = vsel %vm5856, %v3482, %v5775
        %v5865 = vsel %vm5856, %v3483, %v5777
        %v5866 = vsel %vm5856, %v3484, %v5779
        %v5867 = vsel %vm5856, %v3485, %v5781
        %v5868 = vsel %vm5856, %v3486, %v5783
        %v5869 = vsel %vm5856, %v3487, %v5785
        %v5870 = vsel %vm5856, %v3488, %v5787
        %v5871 = vsel %vm5856, %v3489, %v5789
        %v5872 = vsel %vm5856, %v3490, %v5791
        %v5873 = vsel %vm5856, %v3491, %v5793
        %v5874 = vsel %vm5856, %v3492, %v5795
        %v5875 = vsel %vm5856, %v3493, %v5797
        %v5876 = vsel %vm5856, %v3494, %v5799
        %v5877 = vsel %vm5856, %v3495, %v5801
        %v5878 = vsel %vm5856, %v3496, %v5803
        %v5879 = vsel %vm5856, %v3497, %v5805
        %v5880 = vsel %vm5856, %v3498, %v5807
        %v5881 = vsel %vm5856, %v3499, %v5809
        %v5882 = vsel %vm5856, %v3500, %v5811
        %v5883 = vsel %vm5856, %v3501, %v5813
        %v5884 = vsel %vm5856, %v3502, %v5815
        %v5885 = vsel %vm5856, %v3503, %v5817
        %v5886 = vsel %vm5856, %v3504, %v5819
        %v5887 = vsel %vm5856, %v3505, %v5821
        %v5888 = vsel %vm5856, %v3506, %v5823
        %v5889 = vld [vmem:[%s4] sm:$0xff]
        %v5890 = vld [vmem:[%s4 + $0x8] sm:$0xff]
        %v5891 = vld [vmem:[%s4 + $0x10] sm:$0xff]
        %v5892 = vld [vmem:[%s4 + $0x18] sm:$0xff]
        %v5893 = vld [vmem:[%s4 + $0x20] sm:$0xff]
        %v5894 = vld [vmem:[%s4 + $0x28] sm:$0xff]
        %v5895 = vld [vmem:[%s4 + $0x30] sm:$0xff]
        %v5896 = vld [vmem:[%s4 + $0x38] sm:$0xff]
        %v5897 = vld [vmem:[%s4 + $0x40] sm:$0xff]
        %v5898 = vld [vmem:[%s4 + $0x48] sm:$0xff]
        %v5899 = vld [vmem:[%s4 + $0x50] sm:$0xff]
        %v5900 = vld [vmem:[%s4 + $0x58] sm:$0xff]
        %v5901 = vld [vmem:[%s4 + $0x60] sm:$0xff]
        %v5902 = vld [vmem:[%s4 + $0x68] sm:$0xf]
        %v5903 = vld [vmem:[%s5] sm:$0x1]
        %v5905 = vperm.slane %v5903, 0
        %vm5907 = vcmask 883712
        %v5909 = vsel %vm5907, %v5857, 0
        %v5912 = vsel %vm5907, %v5858, 0
        %v5915 = vsel %vm5907, %v5859, 0
        %v5918 = vsel %vm5907, %v5860, 0
        %v5921 = vsel %vm5907, %v5861, 0
        %v5924 = vsel %vm5907, %v5862, 0
        %v5927 = vsel %vm5907, %v5863, 0
        %v5930 = vsel %vm5907, %v5864, 0
        %v5933 = vsel %vm5907, %v5865, 0
        %v5936 = vsel %vm5907, %v5866, 0
        %v5939 = vsel %vm5907, %v5867, 0
        %v5942 = vsel %vm5907, %v5868, 0
        %v5945 = vsel %vm5907, %v5869, 0
        %v5948 = vsel %vm5907, %v5870, 0
        %v5951 = vsel %vm5907, %v5871, 0
        %v5954 = vsel %vm5907, %v5872, 0
        %v5957 = vsel %vm5907, %v5873, 0
        %v5960 = vsel %vm5907, %v5874, 0
        %v5963 = vsel %vm5907, %v5875, 0
        %v5966 = vsel %vm5907, %v5876, 0
        %v5969 = vsel %vm5907, %v5877, 0
        %v5972 = vsel %vm5907, %v5878, 0
        %v5975 = vsel %vm5907, %v5879, 0
        %v5978 = vsel %vm5907, %v5880, 0
        %v5981 = vsel %vm5907, %v5881, 0
        %v5984 = vsel %vm5907, %v5882, 0
        %v5987 = vsel %vm5907, %v5883, 0
        %v5990 = vsel %vm5907, %v5884, 0
        %v5993 = vsel %vm5907, %v5885, 0
        %v5996 = vsel %vm5907, %v5886, 0
        %v5999 = vsel %vm5907, %v5887, 0
        %v6002 = vsel %vm5907, %v5888, 0
        %vm6004 = vcmask 1043456
        %v6006 = vsel %vm6004, %v5902, 0
        %6008 = vmatpush.msra.mxu0 0.0
        %6009 = vmatpush.msra.mxu0 0.0
        %6010 = vmatpush.msra.mxu0 %v6006
        %6011 = vmatpush.msra.mxu0 %v5901
        %6012 = vmatpush.msra.mxu0 %v5900
        %6013 = vmatpush.msra.mxu0 %v5899
        %6014 = vmatpush.msra.mxu0 %v5898
        %6015 = vmatpush.msra.mxu0 %v5897
        %6016 = vmatpush.msra.mxu0 %v5896
        %6017 = vmatpush.msra.mxu0 %v5895
        %6018 = vmatpush.msra.mxu0 %v5894
        %6019 = vmatpush.msra.mxu0 %v5893
        %6020 = vmatpush.msra.mxu0 %v5892
        %6021 = vmatpush.msra.mxu0 %v5891
        %6022 = vmatpush.msra.mxu0 %v5890
        %6023 = vmatpush.msra.mxu0 %v5889
        %6024 = vmatmul.f32.gmra.mxu0 %v5909
        %v6025 = vpop.f32.mrf.mxu0
        %v6026 = vadd.f32 %v5905, %v6025
        %6027 = vmatmul.f32.gmra.mxu0 %v5912
        %v6028 = vpop.f32.mrf.mxu0
        %v6029 = vadd.f32 %v5905, %v6028
        %6030 = vmatmul.f32.gmra.mxu0 %v5915
        %v6031 = vpop.f32.mrf.mxu0
        %v6032 = vadd.f32 %v5905, %v6031
        %6033 = vmatmul.f32.gmra.mxu0 %v5918
        %v6034 = vpop.f32.mrf.mxu0
        %v6035 = vadd.f32 %v5905, %v6034
        %6036 = vmatmul.f32.gmra.mxu0 %v5921
        %v6037 = vpop.f32.mrf.mxu0
        %v6038 = vadd.f32 %v5905, %v6037
        %6039 = vmatmul.f32.gmra.mxu0 %v5924
        %v6040 = vpop.f32.mrf.mxu0
        %v6041 = vadd.f32 %v5905, %v6040
        %6042 = vmatmul.f32.gmra.mxu0 %v5927
        %v6043 = vpop.f32.mrf.mxu0
        %v6044 = vadd.f32 %v5905, %v6043
        %6045 = vmatmul.f32.gmra.mxu0 %v5930
        %v6046 = vpop.f32.mrf.mxu0
        %v6047 = vadd.f32 %v5905, %v6046
        %6048 = vmatmul.f32.gmra.mxu0 %v5933
        %v6049 = vpop.f32.mrf.mxu0
        %v6050 = vadd.f32 %v5905, %v6049
        %6051 = vmatmul.f32.gmra.mxu0 %v5936
        %v6052 = vpop.f32.mrf.mxu0
        %v6053 = vadd.f32 %v5905, %v6052
        %6054 = vmatmul.f32.gmra.mxu0 %v5939
        %v6055 = vpop.f32.mrf.mxu0
        %v6056 = vadd.f32 %v5905, %v6055
        %6057 = vmatmul.f32.gmra.mxu0 %v5942
        %v6058 = vpop.f32.mrf.mxu0
        %v6059 = vadd.f32 %v5905, %v6058
        %6060 = vmatmul.f32.gmra.mxu0 %v5945
        %v6061 = vpop.f32.mrf.mxu0
        %v6062 = vadd.f32 %v5905, %v6061
        %6063 = vmatmul.f32.gmra.mxu0 %v5948
        %v6064 = vpop.f32.mrf.mxu0
        %v6065 = vadd.f32 %v5905, %v6064
        %6066 = vmatmul.f32.gmra.mxu0 %v5951
        %v6067 = vpop.f32.mrf.mxu0
        %v6068 = vadd.f32 %v5905, %v6067
        %6069 = vmatmul.f32.gmra.mxu0 %v5954
        %v6070 = vpop.f32.mrf.mxu0
        %v6071 = vadd.f32 %v5905, %v6070
        %6072 = vmatmul.f32.gmra.mxu0 %v5957
        %v6073 = vpop.f32.mrf.mxu0
        %v6074 = vadd.f32 %v5905, %v6073
        %6075 = vmatmul.f32.gmra.mxu0 %v5960
        %v6076 = vpop.f32.mrf.mxu0
        %v6077 = vadd.f32 %v5905, %v6076
        %6078 = vmatmul.f32.gmra.mxu0 %v5963
        %v6079 = vpop.f32.mrf.mxu0
        %v6080 = vadd.f32 %v5905, %v6079
        %6081 = vmatmul.f32.gmra.mxu0 %v5966
        %v6082 = vpop.f32.mrf.mxu0
        %v6083 = vadd.f32 %v5905, %v6082
        %6084 = vmatmul.f32.gmra.mxu0 %v5969
        %v6085 = vpop.f32.mrf.mxu0
        %v6086 = vadd.f32 %v5905, %v6085
        %6087 = vmatmul.f32.gmra.mxu0 %v5972
        %v6088 = vpop.f32.mrf.mxu0
        %v6089 = vadd.f32 %v5905, %v6088
        %6090 = vmatmul.f32.gmra.mxu0 %v5975
        %v6091 = vpop.f32.mrf.mxu0
        %v6092 = vadd.f32 %v5905, %v6091
        %6093 = vmatmul.f32.gmra.mxu0 %v5978
        %v6094 = vpop.f32.mrf.mxu0
        %v6095 = vadd.f32 %v5905, %v6094
        %6096 = vmatmul.f32.gmra.mxu0 %v5981
        %v6097 = vpop.f32.mrf.mxu0
        %v6098 = vadd.f32 %v5905, %v6097
        %6099 = vmatmul.f32.gmra.mxu0 %v5984
        %v6100 = vpop.f32.mrf.mxu0
        %v6101 = vadd.f32 %v5905, %v6100
        %6102 = vmatmul.f32.gmra.mxu0 %v5987
        %v6103 = vpop.f32.mrf.mxu0
        %v6104 = vadd.f32 %v5905, %v6103
        %6105 = vmatmul.f32.gmra.mxu0 %v5990
        %v6106 = vpop.f32.mrf.mxu0
        %v6107 = vadd.f32 %v5905, %v6106
        %6108 = vmatmul.f32.gmra.mxu0 %v5993
        %v6109 = vpop.f32.mrf.mxu0
        %v6110 = vadd.f32 %v5905, %v6109
        %6111 = vmatmul.f32.gmra.mxu0 %v5996
        %v6112 = vpop.f32.mrf.mxu0
        %v6113 = vadd.f32 %v5905, %v6112
        %6114 = vmatmul.f32.gmra.mxu0 %v5999
        %v6115 = vpop.f32.mrf.mxu0
        %v6116 = vadd.f32 %v5905, %v6115
        %6117 = vmatmul.f32.gmra.mxu0 %v6002
        %v6118 = vpop.f32.mrf.mxu0
        %v6119 = vadd.f32 %v5905, %v6118
        %6120 = vdwg.mxu0
        %6121 = vst.msk [vmem:[%s363] sm:$0xff] %vm3111, %v6026
        %6122 = vst.msk [vmem:[%s363 + $0x8] sm:$0xff] %vm3111, %v6029
        %6123 = vst.msk [vmem:[%s363 + $0x10] sm:$0xff] %vm3111, %v6032
        %6124 = vst.msk [vmem:[%s363 + $0x18] sm:$0xff] %vm3111, %v6035
        %6125 = vst.msk [vmem:[%s363 + $0x20] sm:$0xff] %vm3111, %v6038
        %6126 = vst.msk [vmem:[%s363 + $0x28] sm:$0xff] %vm3111, %v6041
        %6127 = vst.msk [vmem:[%s363 + $0x30] sm:$0xff] %vm3111, %v6044
        %6128 = vst.msk [vmem:[%s363 + $0x38] sm:$0xff] %vm3111, %v6047
        %6129 = vst.msk [vmem:[%s363 + $0x40] sm:$0xff] %vm3111, %v6050
        %6130 = vst.msk [vmem:[%s363 + $0x48] sm:$0xff] %vm3111, %v6053
        %6131 = vst.msk [vmem:[%s363 + $0x50] sm:$0xff] %vm3111, %v6056
        %6132 = vst.msk [vmem:[%s363 + $0x58] sm:$0xff] %vm3111, %v6059
        %6133 = vst.msk [vmem:[%s363 + $0x60] sm:$0xff] %vm3111, %v6062
        %6134 = vst.msk [vmem:[%s363 + $0x68] sm:$0xff] %vm3111, %v6065
        %6135 = vst.msk [vmem:[%s363 + $0x70] sm:$0xff] %vm3111, %v6068
        %6136 = vst.msk [vmem:[%s363 + $0x78] sm:$0xff] %vm3111, %v6071
        %6137 = vst.msk [vmem:[%s363 + $0x80] sm:$0xff] %vm3111, %v6074
        %6138 = vst.msk [vmem:[%s363 + $0x88] sm:$0xff] %vm3111, %v6077
        %6139 = vst.msk [vmem:[%s363 + $0x90] sm:$0xff] %vm3111, %v6080
        %6140 = vst.msk [vmem:[%s363 + $0x98] sm:$0xff] %vm3111, %v6083
        %6141 = vst.msk [vmem:[%s363 + $0xa0] sm:$0xff] %vm3111, %v6086
        %6142 = vst.msk [vmem:[%s363 + $0xa8] sm:$0xff] %vm3111, %v6089
        %6143 = vst.msk [vmem:[%s363 + $0xb0] sm:$0xff] %vm3111, %v6092
        %6144 = vst.msk [vmem:[%s363 + $0xb8] sm:$0xff] %vm3111, %v6095
        %6145 = vst.msk [vmem:[%s363 + $0xc0] sm:$0xff] %vm3111, %v6098
        %6146 = vst.msk [vmem:[%s363 + $0xc8] sm:$0xff] %vm3111, %v6101
        %6147 = vst.msk [vmem:[%s363 + $0xd0] sm:$0xff] %vm3111, %v6104
        %6148 = vst.msk [vmem:[%s363 + $0xd8] sm:$0xff] %vm3111, %v6107
        %6149 = vst.msk [vmem:[%s363 + $0xe0] sm:$0xff] %vm3111, %v6110
        %6150 = vst.msk [vmem:[%s363 + $0xe8] sm:$0xff] %vm3111, %v6113
        %6151 = vst.msk [vmem:[%s363 + $0xf0] sm:$0xff] %vm3111, %v6116
        %6152 = vst.msk [vmem:[%s363 + $0xf8] sm:$0xff] %vm3111, %v6119
        %s6153 = sand.u32 %s206, 1
        %s6154 = scalar_lea.sflag [#allocation4], %s6153
        %s6155 = sand.u32 %s206, 1
        %s6156 = smul.addr %s6155, 256
        %s6157 = scalar_lea.vmem [#allocation3], %s6156
        // Predicated region
        $region45: #{tpu_custom_call.1} parent=43 // pred_check
          %p6158 = pneg %p216
        $region46: #{tpu_custom_call.1} parent=43 // pred_check_branch
          %6160 = sbr.rel (%p6158) target = $region48
        $region47: #{tpu_custom_call.1} parent=43 // pred_region
          %6162 = vsyncadd %s6154, 0
          %s6163 = smul.addr %s25, 32
          %s6164 = smul.addr %s24, 256
          %s6165 = sadd.s32 %s6163, %s6164
          %s6166 = smul.addr %s6165, 8
          %s6167 = scalar_lea.hbm %s6, %s6166
          %s6168 = sshll.u32 %s6157, 4
          %s6169 = int_to_ptr.vmem [resolvable:$true] %s6168
          %s6170 = sshll.u32 %s6167, 4
          %s6171 = int_to_ptr.hbm [resolvable:$true] %s6170
          %6176 = dma.vmem_to_hbm [thread:$0]  %s6169, 4096, %s6171, %s6154, 128, 128, 8
        $region48: #{tpu_custom_call.1} parent=43 // pred_fallthru
          _
      $region44: #{tpu_custom_call.1} parent=5 // pred_fallthru
        _
      %p6177 = scmp.le.s32.totalorder 2, %s15
      // Predicated region
      $region49: #{tpu_custom_call.1} parent=5 // pred_check
        %p6178 = pneg %p6177
      $region50: #{tpu_custom_call.1} parent=5 // pred_check_branch
        %6180 = sbr.rel (%p6178) target = $region52
      $region51: #{tpu_custom_call.1} parent=5 // pred_region
        %s6181 = ssub.s32 %s15, 2
        // Predicated region
        $region53: #{tpu_custom_call.1} parent=51 // pred_check
          %p6182 = pneg %p222
        $region54: #{tpu_custom_call.1} parent=51 // pred_check_branch
          %6184 = sbr.rel (%p6182) target = $region56
        $region55: #{tpu_custom_call.1} parent=51 // pred_region
          %s6185 = sand.u32 %s207, 1
          %s6186 = scalar_lea.sflag [#allocation4], %s6185
          %s6187 = sand.u32 %s207, 1
          %s6188 = smul.addr %s6187, 256
          %s6189 = scalar_lea.vmem [#allocation3], %s6188
          %6191 = dma.done %s6186, 4096
        $region56: #{tpu_custom_call.1} parent=51 // pred_fallthru
          _
      $region52: #{tpu_custom_call.1} parent=5 // pred_fallthru
        _
    $region6: #{tpu_custom_call.1} parent=1 // loop_footer
      %s19 = sadd.s32 1, %s15
    $region7: #{tpu_custom_call.1} parent=1 // loop_footer_branch
      %14 = sbr.rel target = $region3
    $region8: #{tpu_custom_call.1} parent=1 // loop_exit
      _
    %6192 = vsyncpa [#allocation4], 1
    %s6193 = scalar_lea.sflag [#allocation4], 1
    %6194 = vsyncpa %s6193, 1

</llo_original>
